<compile_context>
chip_gen: v6e
topology: v6e:2x2x1
jax: 0.10.0
libtpu: 0.0.40
codegen_flags: <defaults>
</compile_context>

<pallas_src>
import functools

import jax
import jax.numpy as jnp
from jax import lax
from jax.experimental import pallas as pl
from jax.experimental.pallas import tpu as pltpu

EXPANSION = 4


# ============================ fused Pallas kernel ===========================

def _bottleneck_kernel(x_ref, w1_ref, s1_ref, b1_ref,
                       w2_ref, s2_ref, b2_ref,
                       w3_ref, s3_ref, b3_ref,
                       o_ref, *, height, width, c_mid):
    bb = x_ref.shape[0]                 # images in this grid step (static)
    hw = height * width
    w = width

    # ---- NCHW block -> flattened channels-last rows (XLU transposes) -------
    x_imgs = [x_ref[i].T for i in range(bb)]                   # (HW, Cin) each
    x_rows = x_imgs[0] if bb == 1 else jnp.concatenate(x_imgs, axis=0)
    x_f32 = x_rows.astype(jnp.float32)                         # residual path

    # ---- conv1 (1x1) + bn1 + relu -------------------------------------------
    h1 = jnp.dot(x_rows.astype(jnp.bfloat16), w1_ref[...],
                 preferred_element_type=jnp.float32)            # (bb*HW, Cmid)
    h1 = jnp.maximum(h1 * s1_ref[...] + b1_ref[...], 0.0)

    # ---- conv2 (3x3, pad=1, stride=1) + bn2 + relu ---------------------------
    # Zero-separated flattened-spatial buffer:
    #   hp = [W zeros][img0 (HW rows)][W zeros][img1]...[W zeros]
    # Every image start is a multiple of W, so the column index of any real
    # row r is simply r % W.  Tap (dy, dx) is hp shifted by dy*W + dx rows:
    # a single XLU roll (wraparound only ever lands in a zero separator or in
    # a row that is masked).  Horizontal validity is enforced by zeroing the
    # first / last column of the *source* rows (exact, commutes with the dot).
    sep = w
    zsep = jnp.zeros((sep, c_mid), jnp.float32)
    parts = []
    for i in range(bb):
        parts.append(zsep)
        parts.append(h1[i * hw:(i + 1) * hw])
    parts.append(zsep)
    hp = jnp.concatenate(parts, axis=0)                         # (R, Cmid) f32
    rows = hp.shape[0]                                          # (bb+1)*W + bb*HW

    col = lax.broadcasted_iota(jnp.int32, (rows, 1), 0) % w
    hp_l = jnp.where(col != (w - 1), hp, 0.0)    # sources feeding dx = -1 taps
    hp_r = jnp.where(col != 0, hp, 0.0)          # sources feeding dx = +1 taps

    taps = []
    for dy in (-1, 0, 1):
        for dx in (-1, 0, 1):
            src = hp_l if dx == -1 else (hp_r if dx == 1 else hp)
            shift = (-(dy * w + dx)) % rows      # out[r] = src[r + dy*W + dx]
            taps.append(src if shift == 0 else pltpu.roll(src, shift, 0))
    t_mat = jnp.concatenate(taps, axis=1).astype(jnp.bfloat16)  # (R, 9*Cmid)

    h2p = jnp.dot(t_mat, w2_ref[...],
                  preferred_element_type=jnp.float32)           # (R, Cmid)

    # Drop the separator rows (aligned slices) and apply bn2 + relu.
    h2_parts = [h2p[sep + i * (hw + sep): sep + i * (hw + sep) + hw]
                for i in range(bb)]
    h2 = h2_parts[0] if bb == 1 else jnp.concatenate(h2_parts, axis=0)
    h2 = jnp.maximum(h2 * s2_ref[...] + b2_ref[...], 0.0)       # (bb*HW, Cmid)

    # ---- conv3 (1x1) + bn3 + residual + relu ---------------------------------
    out = jnp.dot(h2.astype(jnp.bfloat16), w3_ref[...],
                  preferred_element_type=jnp.float32)           # (bb*HW, Cout)
    out = jnp.maximum(out * s3_ref[...] + b3_ref[...] + x_f32, 0.0)

    # back to (Cout, HW) per image -> lane-dense NCHW store
    for i in range(bb):
        o_ref[i] = out[i * hw:(i + 1) * hw].T.astype(o_ref.dtype)


# ============================ wrapper =======================================

def bottleneck_forward(params, x_nchw, *, images_per_step=None):
    b, c_in, height, width = x_nchw.shape
    c_mid = params['w1'].shape[1]
    c_out = params['w3'].shape[1]
    hw = height * width
    assert c_out == c_in, "identity shortcut needs in_channels == out_channels*expansion"
    # TODO(synk): stride>1 / i_downsample projection shortcut not implemented.

    if images_per_step is None:
        # Two grid steps when possible (keeps both v7x TensorCores busy via
        # "parallel"); single-TC v5e/v6e only pay one extra tiny grid step.
        images_per_step = b // 2 if (b % 2 == 0 and b >= 2) else b
    assert b % images_per_step == 0
    bb = images_per_step
    steps = b // bb

    # Free reshape (merges trailing dims, no transpose / no extra XLA kernel).
    x = x_nchw.reshape(b, c_in, hw)

    flops = 2 * b * hw * (c_in * c_mid + 9 * c_mid * c_mid + c_mid * c_out)
    bytes_accessed = (int(x.size) * x.dtype.itemsize
                      + b * hw * c_out * 4
                      + sum(int(v.size) * v.dtype.itemsize for v in params.values()))

    const2 = lambda i: (0, 0)
    kernel = functools.partial(_bottleneck_kernel,
                               height=height, width=width, c_mid=c_mid)
    out = pl.pallas_call(
        kernel,
        out_shape=jax.ShapeDtypeStruct((b, c_out, hw), jnp.float32),
        grid=(steps,),
        in_specs=[
            pl.BlockSpec((bb, c_in, hw), lambda i: (i, 0, 0)),
            pl.BlockSpec(params['w1'].shape, const2),
            pl.BlockSpec(params['s1'].shape, const2),
            pl.BlockSpec(params['b1'].shape, const2),
            pl.BlockSpec(params['w2'].shape, const2),
            pl.BlockSpec(params['s2'].shape, const2),
            pl.BlockSpec(params['b2'].shape, const2),
            pl.BlockSpec(params['w3'].shape, const2),
            pl.BlockSpec(params['s3'].shape, const2),
            pl.BlockSpec(params['b3'].shape, const2),
        ],
        out_specs=pl.BlockSpec((bb, c_out, hw), lambda i: (i, 0, 0)),
        compiler_params=pltpu.CompilerParams(
            dimension_semantics=("parallel",)),
        cost_estimate=pl.CostEstimate(
            flops=flops, transcendentals=0, bytes_accessed=bytes_accessed),
    )(x, params['w1'], params['s1'], params['b1'],
      params['w2'], params['s2'], params['b2'],
      params['w3'], params['s3'], params['b3'])

    # Free reshape back to NCHW.
    return out.reshape(b, c_out, height, width)


# ============================ parameter init ================================

def init_params(key, in_channels, out_channels):
    """Torch-layout Conv2d/BatchNorm2d params, folded for inference."""
    c_mid = out_channels
    c_out = out_channels * EXPANSION
    assert c_out == in_channels, "identity shortcut needs in == out*expansion"
    ks = iter(jax.random.split(key, 32))

    def rnd(shape, s=0.05):
        return s * jax.random.normal(next(ks), shape, dtype=jnp.float32)

    def bn_stats(c):
        gamma = 1.0 + rnd((c,))
        beta = rnd((c,))
        mean = rnd((c,))
        var = 1.0 + jnp.abs(rnd((c,)))
        return gamma, beta, mean, var

    def fold_bn(conv_bias, gamma, beta, mean, var, eps=1e-5):
        # BN(Wx + b) = scale*(Wx) + (beta + scale*(b - mean))
        scale = gamma * jax.lax.rsqrt(var + eps)
        shift = beta + scale * (conv_bias - mean)
        return scale.reshape(1, -1), shift.reshape(1, -1)

    # torch Conv2d weights: (O, I, kh, kw) + bias (O,)
    w1_t, b1_t = rnd((c_mid, in_channels, 1, 1)), rnd((c_mid,))
    w2_t, b2_t = rnd((c_mid, c_mid, 3, 3)), rnd((c_mid,))
    w3_t, b3_t = rnd((c_out, c_mid, 1, 1)), rnd((c_out,))

    p = {}
    p['w1'] = w1_t[:, :, 0, 0].T.astype(jnp.bfloat16)            # (Cin, Cmid)
    p['s1'], p['b1'] = fold_bn(b1_t, *bn_stats(c_mid))
    # (O, I, 3, 3) -> (kh, kw, I, O) -> (9*I, O); row block k = (dy+1)*3+(dx+1)
    p['w2'] = jnp.transpose(w2_t, (2, 3, 1, 0)).reshape(
        9 * c_mid, c_mid).astype(jnp.bfloat16)                   # (9*Cmid, Cmid)
    p['s2'], p['b2'] = fold_bn(b2_t, *bn_stats(c_mid))
    p['w3'] = w3_t[:, :, 0, 0].T.astype(jnp.bfloat16)            # (Cmid, Cout)
    p['s3'], p['b3'] = fold_bn(b3_t, *bn_stats(c_out))
    return p


# ============================ pure-JAX reference ============================

def reference_forward(params, x_nchw):
    c_mid = params['w1'].shape[1]
    w1 = params['w1'].astype(jnp.float32)
    w3 = params['w3'].astype(jnp.float32)
    w2 = params['w2'].astype(jnp.float32).reshape(3, 3, c_mid, c_mid)  # HWIO

    def bn(t, s, b):
        return t * s.reshape(1, -1, 1, 1) + b.reshape(1, -1, 1, 1)

    h = jnp.einsum('bchw,cd->bdhw', x_nchw, w1)
    h = jax.nn.relu(bn(h, params['s1'], params['b1']))
    h = lax.conv_general_dilated(h, w2, window_strides=(1, 1),
                                 padding=((1, 1), (1, 1)),
                                 dimension_numbers=('NCHW', 'HWIO', 'NCHW'))
    h = jax.nn.relu(bn(h, params['s2'], params['b2']))
    h = jnp.einsum('bchw,cd->bdhw', h, w3)
    h = bn(h, params['s3'], params['b3']) + x_nchw
    return jax.nn.relu(h)


# ============================ driver ========================================

if __name__ == "__main__":
    key = jax.random.PRNGKey(0)
    k_param, k_x = jax.random.split(key)

    B, IN_C, OUT_C, H, W = 2, 128, 32, 16, 16   # in == out*expansion, stride=1
    params = init_params(k_param, IN_C, OUT_C)
    x = jax.random.normal(k_x, (B, IN_C, H, W), dtype=jnp.float32)

    fwd = jax.jit(bottleneck_forward)
    y = fwd(params, x)
    jax.block_until_ready(y)
    assert y.shape == (B, OUT_C * EXPANSION, H, W)

    y_ref = reference_forward(params, x)
    err = float(jnp.max(jnp.abs(y - y_ref)))
    assert err < 2e-2, f"max abs error too large: {err}"
    print("KERNEL_OK")
</pallas_src>

<mosaic_0001>
module attributes {stable_mosaic.version = 11 : i64} {
  func.func @_bottleneck_kernel(%arg0: i32, %arg1: memref<1x128x256xf32, #tpu.memory_space<vmem>>, %arg2: memref<128x32xbf16, #tpu.memory_space<vmem>>, %arg3: memref<1x32xf32, #tpu.memory_space<vmem>>, %arg4: memref<1x32xf32, #tpu.memory_space<vmem>>, %arg5: memref<288x32xbf16, #tpu.memory_space<vmem>>, %arg6: memref<1x32xf32, #tpu.memory_space<vmem>>, %arg7: memref<1x32xf32, #tpu.memory_space<vmem>>, %arg8: memref<32x128xbf16, #tpu.memory_space<vmem>>, %arg9: memref<1x128xf32, #tpu.memory_space<vmem>>, %arg10: memref<1x128xf32, #tpu.memory_space<vmem>>, %arg11: memref<1x128x256xf32, #tpu.memory_space<vmem>>) attributes {dimension_semantics = [#tpu.dimension_semantics<parallel>], iteration_bounds = array<i64: 2>, scalar_prefetch = 0 : i64, scratch_operands = 0 : i64, tpu.core_type = #tpu.core_type<tc>, window_params = [{transform_indices = @transform_0, window_bounds = array<i64: 1, 128, 256>}, {pipeline_mode = #tpu.pipeline_mode<synchronous>, transform_indices = @transform_1, window_bounds = array<i64: 128, 32>}, {pipeline_mode = #tpu.pipeline_mode<synchronous>, transform_indices = @transform_2, window_bounds = array<i64: 1, 32>}, {pipeline_mode = #tpu.pipeline_mode<synchronous>, transform_indices = @transform_3, window_bounds = array<i64: 1, 32>}, {pipeline_mode = #tpu.pipeline_mode<synchronous>, transform_indices = @transform_4, window_bounds = array<i64: 288, 32>}, {pipeline_mode = #tpu.pipeline_mode<synchronous>, transform_indices = @transform_5, window_bounds = array<i64: 1, 32>}, {pipeline_mode = #tpu.pipeline_mode<synchronous>, transform_indices = @transform_6, window_bounds = array<i64: 1, 32>}, {pipeline_mode = #tpu.pipeline_mode<synchronous>, transform_indices = @transform_7, window_bounds = array<i64: 32, 128>}, {pipeline_mode = #tpu.pipeline_mode<synchronous>, transform_indices = @transform_8, window_bounds = array<i64: 1, 128>}, {pipeline_mode = #tpu.pipeline_mode<synchronous>, transform_indices = @transform_9, window_bounds = array<i64: 1, 128>}, {transform_indices = @transform_10, window_bounds = array<i64: 1, 128, 256>}]} {
    %c0 = arith.constant 0 : index
    %c0_0 = arith.constant 0 : index
    %c0_1 = arith.constant 0 : index
    %0 = vector.load %arg1[%c0, %c0_0, %c0_1] : memref<1x128x256xf32, #tpu.memory_space<vmem>>, vector<1x128x256xf32>
    %1 = vector.shape_cast %0 : vector<1x128x256xf32> to vector<128x256xf32>
    %2 = tpu.transpose %1, [1, 0] : vector<128x256xf32> -> vector<256x128xf32>
    %3 = arith.truncf %2 : vector<256x128xf32> to vector<256x128xbf16>
    %c0_2 = arith.constant 0 : index
    %c0_3 = arith.constant 0 : index
    %4 = vector.load %arg2[%c0_2, %c0_3] : memref<128x32xbf16, #tpu.memory_space<vmem>>, vector<128x32xbf16>
    %cst = arith.constant dense<0.000000e+00> : vector<256x32xf32>
    %5 = tpu.matmul %3, %4, %cst {dimension_numbers = #tpu.dot_dimension_numbers<[1], [0], [0], [1], [0, 0, 1, 1], [], []>} : vector<256x128xbf16>, vector<128x32xbf16>, vector<256x32xf32> -> vector<256x32xf32>
    %c0_4 = arith.constant 0 : index
    %c0_5 = arith.constant 0 : index
    %6 = vector.load %arg3[%c0_4, %c0_5] : memref<1x32xf32, #tpu.memory_space<vmem>>, vector<1x32xf32>
    %7 = vector.broadcast %6 : vector<1x32xf32> to vector<256x32xf32>
    %8 = arith.mulf %5, %7 : vector<256x32xf32>
    %c0_6 = arith.constant 0 : index
    %c0_7 = arith.constant 0 : index
    %9 = vector.load %arg4[%c0_6, %c0_7] : memref<1x32xf32, #tpu.memory_space<vmem>>, vector<1x32xf32>
    %10 = vector.broadcast %9 : vector<1x32xf32> to vector<256x32xf32>
    %11 = arith.addf %8, %10 : vector<256x32xf32>
    %cst_8 = arith.constant 0.000000e+00 : f32
    %12 = vector.broadcast %cst_8 : f32 to vector<256x32xf32>
    %13 = arith.maximumf %11, %12 : vector<256x32xf32>
    %cst_9 = arith.constant 0.000000e+00 : f32
    %14 = vector.broadcast %cst_9 : f32 to vector<16x32xf32>
    %15 = tpu.concatenate %14, %13, %14 in 0 : vector<16x32xf32>, vector<256x32xf32>, vector<16x32xf32> -> vector<288x32xf32>
    %16 = tpu.iota {dimensions = array<i32: 0>} : vector<288x1xi32>
    %c16_i32 = arith.constant 16 : i32
    %c0_i32 = arith.constant 0 : i32
    %17 = arith.cmpi eq, %c16_i32, %c0_i32 : i32
    %c1_i32 = arith.constant 1 : i32
    %18 = arith.select %17, %c1_i32, %c16_i32 : i32
    %19 = vector.broadcast %18 : i32 to vector<288x1xi32>
    %20 = arith.remsi %16, %19 : vector<288x1xi32>
    %c0_i32_10 = arith.constant 0 : i32
    %21 = vector.broadcast %c0_i32_10 : i32 to vector<288x1xi32>
    %22 = arith.cmpi ne, %20, %21 : vector<288x1xi32>
    %c0_i32_11 = arith.constant 0 : i32
    %23 = vector.broadcast %c0_i32_11 : i32 to vector<288x1xi32>
    %24 = arith.cmpi slt, %20, %23 : vector<288x1xi32>
    %c0_i32_12 = arith.constant 0 : i32
    %25 = arith.cmpi slt, %18, %c0_i32_12 : i32
    %26 = vector.broadcast %25 : i1 to vector<288x1xi1>
    %27 = vector.broadcast %26 : vector<288x1xi1> to vector<288x1xi1>
    %28 = arith.xori %24, %27 : vector<288x1xi1>
    %29 = arith.andi %28, %22 : vector<288x1xi1>
    %30 = vector.broadcast %18 : i32 to vector<288x1xi32>
    %31 = arith.addi %20, %30 : vector<288x1xi32>
    %32 = arith.select %29, %31, %20 : vector<288x1xi1>, vector<288x1xi32>
    %c15_i32 = arith.constant 15 : i32
    %33 = vector.broadcast %c15_i32 : i32 to vector<288x1xi32>
    %34 = arith.cmpi ne, %32, %33 : vector<288x1xi32>
    %cst_13 = arith.constant 0.000000e+00 : f32
    %35 = vector.shape_cast %34 : vector<288x1xi1> to vector<288x1xi1>
    %36 = vector.broadcast %35 : vector<288x1xi1> to vector<288x32xi1>
    %37 = vector.broadcast %cst_13 : f32 to vector<288x32xf32>
    %38 = arith.select %36, %15, %37 : vector<288x32xi1>, vector<288x32xf32>
    %c0_i32_14 = arith.constant 0 : i32
    %39 = vector.broadcast %c0_i32_14 : i32 to vector<288x1xi32>
    %40 = arith.cmpi ne, %32, %39 : vector<288x1xi32>
    %cst_15 = arith.constant 0.000000e+00 : f32
    %41 = vector.shape_cast %40 : vector<288x1xi1> to vector<288x1xi1>
    %42 = vector.broadcast %41 : vector<288x1xi1> to vector<288x32xi1>
    %43 = vector.broadcast %cst_15 : f32 to vector<288x32xf32>
    %44 = arith.select %42, %15, %43 : vector<288x32xi1>, vector<288x32xf32>
    %c17_i32 = arith.constant 17 : i32
    %45 = tpu.dynamic_rotate %38 by %c17_i32 dim 0 : vector<288x32xf32>, i32 -> vector<288x32xf32>
    %c16_i32_16 = arith.constant 16 : i32
    %46 = tpu.dynamic_rotate %15 by %c16_i32_16 dim 0 : vector<288x32xf32>, i32 -> vector<288x32xf32>
    %c15_i32_17 = arith.constant 15 : i32
    %47 = tpu.dynamic_rotate %44 by %c15_i32_17 dim 0 : vector<288x32xf32>, i32 -> vector<288x32xf32>
    %c1_i32_18 = arith.constant 1 : i32
    %48 = tpu.dynamic_rotate %38 by %c1_i32_18 dim 0 : vector<288x32xf32>, i32 -> vector<288x32xf32>
    %c287_i32 = arith.constant 287 : i32
    %49 = tpu.dynamic_rotate %44 by %c287_i32 dim 0 : vector<288x32xf32>, i32 -> vector<288x32xf32>
    %c273_i32 = arith.constant 273 : i32
    %50 = tpu.dynamic_rotate %38 by %c273_i32 dim 0 : vector<288x32xf32>, i32 -> vector<288x32xf32>
    %c272_i32 = arith.constant 272 : i32
    %51 = tpu.dynamic_rotate %15 by %c272_i32 dim 0 : vector<288x32xf32>, i32 -> vector<288x32xf32>
    %c271_i32 = arith.constant 271 : i32
    %52 = tpu.dynamic_rotate %44 by %c271_i32 dim 0 : vector<288x32xf32>, i32 -> vector<288x32xf32>
    %53 = tpu.concatenate %45, %46, %47, %48, %15, %49, %50, %51, %52 in 1 : vector<288x32xf32>, vector<288x32xf32>, vector<288x32xf32>, vector<288x32xf32>, vector<288x32xf32>, vector<288x32xf32>, vector<288x32xf32>, vector<288x32xf32>, vector<288x32xf32> -> vector<288x288xf32>
    %54 = arith.truncf %53 : vector<288x288xf32> to vector<288x288xbf16>
    %c0_19 = arith.constant 0 : index
    %c0_20 = arith.constant 0 : index
    %55 = vector.load %arg5[%c0_19, %c0_20] : memref<288x32xbf16, #tpu.memory_space<vmem>>, vector<288x32xbf16>
    %cst_21 = arith.constant dense<0.000000e+00> : vector<288x32xf32>
    %56 = tpu.matmul %54, %55, %cst_21 {dimension_numbers = #tpu.dot_dimension_numbers<[1], [0], [0], [1], [0, 0, 1, 1], [], []>} : vector<288x288xbf16>, vector<288x32xbf16>, vector<288x32xf32> -> vector<288x32xf32>
    %57 = vector.extract_strided_slice %56 {offsets = [16, 0], sizes = [256, 32], strides = [1, 1]} : vector<288x32xf32> to vector<256x32xf32>
    %c0_22 = arith.constant 0 : index
    %c0_23 = arith.constant 0 : index
    %58 = vector.load %arg6[%c0_22, %c0_23] : memref<1x32xf32, #tpu.memory_space<vmem>>, vector<1x32xf32>
    %59 = vector.broadcast %58 : vector<1x32xf32> to vector<256x32xf32>
    %60 = arith.mulf %57, %59 : vector<256x32xf32>
    %c0_24 = arith.constant 0 : index
    %c0_25 = arith.constant 0 : index
    %61 = vector.load %arg7[%c0_24, %c0_25] : memref<1x32xf32, #tpu.memory_space<vmem>>, vector<1x32xf32>
    %62 = vector.broadcast %61 : vector<1x32xf32> to vector<256x32xf32>
    %63 = arith.addf %60, %62 : vector<256x32xf32>
    %cst_26 = arith.constant 0.000000e+00 : f32
    %64 = vector.broadcast %cst_26 : f32 to vector<256x32xf32>
    %65 = arith.maximumf %63, %64 : vector<256x32xf32>
    %66 = arith.truncf %65 : vector<256x32xf32> to vector<256x32xbf16>
    %c0_27 = arith.constant 0 : index
    %c0_28 = arith.constant 0 : index
    %67 = vector.load %arg8[%c0_27, %c0_28] : memref<32x128xbf16, #tpu.memory_space<vmem>>, vector<32x128xbf16>
    %cst_29 = arith.constant dense<0.000000e+00> : vector<256x128xf32>
    %68 = tpu.matmul %66, %67, %cst_29 {dimension_numbers = #tpu.dot_dimension_numbers<[1], [0], [0], [1], [0, 0, 1, 1], [], []>} : vector<256x32xbf16>, vector<32x128xbf16>, vector<256x128xf32> -> vector<256x128xf32>
    %c0_30 = arith.constant 0 : index
    %c0_31 = arith.constant 0 : index
    %69 = vector.load %arg9[%c0_30, %c0_31] : memref<1x128xf32, #tpu.memory_space<vmem>>, vector<1x128xf32>
    %70 = vector.broadcast %69 : vector<1x128xf32> to vector<256x128xf32>
    %71 = arith.mulf %68, %70 : vector<256x128xf32>
    %c0_32 = arith.constant 0 : index
    %c0_33 = arith.constant 0 : index
    %72 = vector.load %arg10[%c0_32, %c0_33] : memref<1x128xf32, #tpu.memory_space<vmem>>, vector<1x128xf32>
    %73 = vector.broadcast %72 : vector<1x128xf32> to vector<256x128xf32>
    %74 = arith.addf %71, %73 : vector<256x128xf32>
    %75 = arith.addf %74, %2 : vector<256x128xf32>
    %cst_34 = arith.constant 0.000000e+00 : f32
    %76 = vector.broadcast %cst_34 : f32 to vector<256x128xf32>
    %77 = arith.maximumf %75, %76 : vector<256x128xf32>
    %78 = tpu.transpose %77, [1, 0] : vector<256x128xf32> -> vector<128x256xf32>
    %c0_35 = arith.constant 0 : index
    %c0_36 = arith.constant 0 : index
    %c0_37 = arith.constant 0 : index
    %79 = vector.load %arg11[%c0_35, %c0_36, %c0_37] : memref<1x128x256xf32, #tpu.memory_space<vmem>>, vector<1x128x256xf32>
    %80 = vector.shape_cast %79 : vector<1x128x256xf32> to vector<128x256xf32>
    %81 = vector.shape_cast %78 : vector<128x256xf32> to vector<1x128x256xf32>
    tpu.vector_store %arg11[%c0_35, %c0_36, %c0_37], %81 {strides = array<i32>} : memref<1x128x256xf32, #tpu.memory_space<vmem>>, vector<1x128x256xf32>,
    return
  }
  func.func @transform_0(%arg0: i32) -> (i32, i32, i32) {
    %c0_i32 = arith.constant 0 : i32
    %c0_i32_0 = arith.constant 0 : i32
    %c0_i32_1 = arith.constant 0 : i32
    return %arg0, %c0_i32, %c0_i32_0 : i32, i32, i32
  }
  func.func @transform_1(%arg0: i32) -> (i32, i32) {
    %c0_i32 = arith.constant 0 : i32
    %c0_i32_0 = arith.constant 0 : i32
    %c0_i32_1 = arith.constant 0 : i32
    return %c0_i32, %c0_i32_0 : i32, i32
  }
  func.func @transform_2(%arg0: i32) -> (i32, i32) {
    %c0_i32 = arith.constant 0 : i32
    %c0_i32_0 = arith.constant 0 : i32
    %c0_i32_1 = arith.constant 0 : i32
    return %c0_i32, %c0_i32_0 : i32, i32
  }
  func.func @transform_3(%arg0: i32) -> (i32, i32) {
    %c0_i32 = arith.constant 0 : i32
    %c0_i32_0 = arith.constant 0 : i32
    %c0_i32_1 = arith.constant 0 : i32
    return %c0_i32, %c0_i32_0 : i32, i32
  }
  func.func @transform_4(%arg0: i32) -> (i32, i32) {
    %c0_i32 = arith.constant 0 : i32
    %c0_i32_0 = arith.constant 0 : i32
    %c0_i32_1 = arith.constant 0 : i32
    return %c0_i32, %c0_i32_0 : i32, i32
  }
  func.func @transform_5(%arg0: i32) -> (i32, i32) {
    %c0_i32 = arith.constant 0 : i32
    %c0_i32_0 = arith.constant 0 : i32
    %c0_i32_1 = arith.constant 0 : i32
    return %c0_i32, %c0_i32_0 : i32, i32
  }
  func.func @transform_6(%arg0: i32) -> (i32, i32) {
    %c0_i32 = arith.constant 0 : i32
    %c0_i32_0 = arith.constant 0 : i32
    %c0_i32_1 = arith.constant 0 : i32
    return %c0_i32, %c0_i32_0 : i32, i32
  }
  func.func @transform_7(%arg0: i32) -> (i32, i32) {
    %c0_i32 = arith.constant 0 : i32
    %c0_i32_0 = arith.constant 0 : i32
    %c0_i32_1 = arith.constant 0 : i32
    return %c0_i32, %c0_i32_0 : i32, i32
  }
  func.func @transform_8(%arg0: i32) -> (i32, i32) {
    %c0_i32 = arith.constant 0 : i32
    %c0_i32_0 = arith.constant 0 : i32
    %c0_i32_1 = arith.constant 0 : i32
    return %c0_i32, %c0_i32_0 : i32, i32
  }
  func.func @transform_9(%arg0: i32) -> (i32, i32) {
    %c0_i32 = arith.constant 0 : i32
    %c0_i32_0 = arith.constant 0 : i32
    %c0_i32_1 = arith.constant 0 : i32
    return %c0_i32, %c0_i32_0 : i32, i32
  }
  func.func @transform_10(%arg0: i32) -> (i32, i32, i32) {
    %c0_i32 = arith.constant 0 : i32
    %c0_i32_0 = arith.constant 0 : i32
    %c0_i32_1 = arith.constant 0 : i32
    return %arg0, %c0_i32, %c0_i32_0 : i32, i32, i32
  }
}

</mosaic_0001>

<llo_original>
// kernel: bottleneck_forward.1
$region0: #{bottleneck_forward.1}
  #allocation0 [shape = 'u32[]', space=smem, size = 0x4, offset = 0x4, fixed_abs, tag = 'smem constant byte address 0x4 - core index']
  #allocation1 [shape = 'u32[144,128]{1,0:T(1,128)}', space=vmem, size = 0x12000, scoped, tag = 'internal scratch']
  %s0 = inlined_call_operand.vmem [shape: f32[2,128,256], index: 0, kind: input, shape index: {}]
  %s1 = inlined_call_operand.vmem [shape: bf16[128,32], index: 1, kind: input, shape index: {}]
  %s2 = inlined_call_operand.vmem [shape: f32[1,32], index: 2, kind: input, shape index: {}]
  %s3 = inlined_call_operand.vmem [shape: f32[1,32], index: 3, kind: input, shape index: {}]
  %s4 = inlined_call_operand.vmem [shape: bf16[288,32], index: 4, kind: input, shape index: {}]
  %s5 = inlined_call_operand.vmem [shape: f32[1,32], index: 5, kind: input, shape index: {}]
  %s6 = inlined_call_operand.vmem [shape: f32[1,32], index: 6, kind: input, shape index: {}]
  %s7 = inlined_call_operand.vmem [shape: bf16[32,128], index: 7, kind: input, shape index: {}]
  %s8 = inlined_call_operand.vmem [shape: f32[1,128], index: 8, kind: input, shape index: {}]
  %s9 = inlined_call_operand.vmem [shape: f32[1,128], index: 9, kind: input, shape index: {}]
  %s10 = inlined_call_operand.vmem [shape: f32[2,128,256], index: 10, kind: output, shape index: {}]
  %s11 = sld [smem:[#allocation0]]
  $region73: #{bottleneck_forward.1} parent=0
    _
  %s13 = ssub.s32 1, %s11
  %s14 = scalar_select 0, %s13, %s11
  loop: start=0, step=1, limit=4
  $region2: #{bottleneck_forward.1} parent=0 // loop_pre_header
    _
  $region3: #{bottleneck_forward.1} parent=0 // loop_header
    %s16 = sphi 0, %s20
    %p17 = scmp.ge.s32.totalorder %s16, 4
    %s26 = sphi 0, %s28
    %s29 = sphi 0, %s26
    %s30 = sphi 0, %s29
    %s46 = sphi 0, %s30
    %s50 = sphi 0, %s50
    %s52 = sphi 0, %s50
    %s53 = sphi 0, %s52
    %s67 = sphi 0, %s53
    %s71 = sphi 0, %s71
    %s73 = sphi 0, %s71
    %s74 = sphi 0, %s73
    %s88 = sphi 0, %s74
    %s92 = sphi 0, %s92
    %s94 = sphi 0, %s92
    %s95 = sphi 0, %s94
    %s109 = sphi 0, %s95
    %s113 = sphi 0, %s113
    %s115 = sphi 0, %s113
    %s116 = sphi 0, %s115
    %s130 = sphi 0, %s116
    %s134 = sphi 0, %s134
    %s136 = sphi 0, %s134
    %s137 = sphi 0, %s136
    %s151 = sphi 0, %s137
    %s155 = sphi 0, %s155
    %s157 = sphi 0, %s155
    %s158 = sphi 0, %s157
    %s172 = sphi 0, %s158
    %s176 = sphi 0, %s176
    %s178 = sphi 0, %s176
    %s179 = sphi 0, %s178
    %s193 = sphi 0, %s179
    %s197 = sphi 0, %s197
    %s199 = sphi 0, %s197
    %s200 = sphi 0, %s199
    %s214 = sphi 0, %s200
    %s218 = sphi 0, %s218
    %s220 = sphi 0, %s218
    %s221 = sphi 0, %s220
    %s235 = sphi 0, %s221
    %s241 = sphi 0, %s243
    %s244 = sphi 0, %s241
    %s245 = sphi 0, %s244
    %s261 = sphi 0, %s245
  $region4: #{bottleneck_forward.1} parent=0 // loop_header_branch
    %19 = sbr.rel (%p17) target = $region8
  $region5: #{bottleneck_forward.1} parent=0 // loop_body
    %s21 = ssub.s32 %s16, 1
    %s22 = ssub.s32 %s16, 2
    %s23 = sadd.s32 %s16, 1
    %s24 = ssub.s32 %s16, %s23
    %p25 = scmp.eq.s32.totalorder %s24, 0
    %s27 = sadd.s32 %s26, 1
    %s28 = scalar_select %p25, %s26, %s27
    %p31 = pneg %p25
    %p32 = scmp.eq.s32.totalorder %s16, 1
    %p33 = por %p31, %p32
    %p34 = scmp.ne.s32.totalorder %s26, %s29
    %p35 = scmp.eq.s32.totalorder %s16, 0
    %p36 = por %p34, %p35
    %p37 = scmp.ne.s32.totalorder %s26, %s29
    %p38 = scmp.eq.s32.totalorder %s21, 1
    %p39 = por %p37, %p38
    %p40 = scmp.ne.s32.totalorder %s29, %s30
    %p41 = scmp.eq.s32.totalorder %s21, 0
    %p42 = por %p40, %p41
    %p43 = scmp.ne.s32.totalorder %s29, %s30
    %p44 = scmp.eq.s32.totalorder %s22, 1
    %p45 = por %p43, %p44
    %p47 = scmp.ne.s32.totalorder %s30, %s46
    %p48 = scmp.eq.s32.totalorder %s22, 0
    %p49 = por %p47, %p48
    %s51 = sadd.s32 %s50, 1
    %p54 = scmp.eq.s32.totalorder %s16, 1
    %p55 = scmp.ne.s32.totalorder %s50, %s52
    %p56 = scmp.eq.s32.totalorder %s16, 0
    %p57 = por %p55, %p56
    %p58 = scmp.ne.s32.totalorder %s50, %s52
    %p59 = scmp.eq.s32.totalorder %s21, 1
    %p60 = por %p58, %p59
    %p61 = scmp.ne.s32.totalorder %s52, %s53
    %p62 = scmp.eq.s32.totalorder %s21, 0
    %p63 = por %p61, %p62
    %p64 = scmp.ne.s32.totalorder %s52, %s53
    %p65 = scmp.eq.s32.totalorder %s22, 1
    %p66 = por %p64, %p65
    %p68 = scmp.ne.s32.totalorder %s53, %s67
    %p69 = scmp.eq.s32.totalorder %s22, 0
    %p70 = por %p68, %p69
    %s72 = sadd.s32 %s71, 1
    %p75 = scmp.eq.s32.totalorder %s16, 1
    %p76 = scmp.ne.s32.totalorder %s71, %s73
    %p77 = scmp.eq.s32.totalorder %s16, 0
    %p78 = por %p76, %p77
    %p79 = scmp.ne.s32.totalorder %s71, %s73
    %p80 = scmp.eq.s32.totalorder %s21, 1
    %p81 = por %p79, %p80
    %p82 = scmp.ne.s32.totalorder %s73, %s74
    %p83 = scmp.eq.s32.totalorder %s21, 0
    %p84 = por %p82, %p83
    %p85 = scmp.ne.s32.totalorder %s73, %s74
    %p86 = scmp.eq.s32.totalorder %s22, 1
    %p87 = por %p85, %p86
    %p89 = scmp.ne.s32.totalorder %s74, %s88
    %p90 = scmp.eq.s32.totalorder %s22, 0
    %p91 = por %p89, %p90
    %s93 = sadd.s32 %s92, 1
    %p96 = scmp.eq.s32.totalorder %s16, 1
    %p97 = scmp.ne.s32.totalorder %s92, %s94
    %p98 = scmp.eq.s32.totalorder %s16, 0
    %p99 = por %p97, %p98
    %p100 = scmp.ne.s32.totalorder %s92, %s94
    %p101 = scmp.eq.s32.totalorder %s21, 1
    %p102 = por %p100, %p101
    %p103 = scmp.ne.s32.totalorder %s94, %s95
    %p104 = scmp.eq.s32.totalorder %s21, 0
    %p105 = por %p103, %p104
    %p106 = scmp.ne.s32.totalorder %s94, %s95
    %p107 = scmp.eq.s32.totalorder %s22, 1
    %p108 = por %p106, %p107
    %p110 = scmp.ne.s32.totalorder %s95, %s109
    %p111 = scmp.eq.s32.totalorder %s22, 0
    %p112 = por %p110, %p111
    %s114 = sadd.s32 %s113, 1
    %p117 = scmp.eq.s32.totalorder %s16, 1
    %p118 = scmp.ne.s32.totalorder %s113, %s115
    %p119 = scmp.eq.s32.totalorder %s16, 0
    %p120 = por %p118, %p119
    %p121 = scmp.ne.s32.totalorder %s113, %s115
    %p122 = scmp.eq.s32.totalorder %s21, 1
    %p123 = por %p121, %p122
    %p124 = scmp.ne.s32.totalorder %s115, %s116
    %p125 = scmp.eq.s32.totalorder %s21, 0
    %p126 = por %p124, %p125
    %p127 = scmp.ne.s32.totalorder %s115, %s116
    %p128 = scmp.eq.s32.totalorder %s22, 1
    %p129 = por %p127, %p128
    %p131 = scmp.ne.s32.totalorder %s116, %s130
    %p132 = scmp.eq.s32.totalorder %s22, 0
    %p133 = por %p131, %p132
    %s135 = sadd.s32 %s134, 1
    %p138 = scmp.eq.s32.totalorder %s16, 1
    %p139 = scmp.ne.s32.totalorder %s134, %s136
    %p140 = scmp.eq.s32.totalorder %s16, 0
    %p141 = por %p139, %p140
    %p142 = scmp.ne.s32.totalorder %s134, %s136
    %p143 = scmp.eq.s32.totalorder %s21, 1
    %p144 = por %p142, %p143
    %p145 = scmp.ne.s32.totalorder %s136, %s137
    %p146 = scmp.eq.s32.totalorder %s21, 0
    %p147 = por %p145, %p146
    %p148 = scmp.ne.s32.totalorder %s136, %s137
    %p149 = scmp.eq.s32.totalorder %s22, 1
    %p150 = por %p148, %p149
    %p152 = scmp.ne.s32.totalorder %s137, %s151
    %p153 = scmp.eq.s32.totalorder %s22, 0
    %p154 = por %p152, %p153
    %s156 = sadd.s32 %s155, 1
    %p159 = scmp.eq.s32.totalorder %s16, 1
    %p160 = scmp.ne.s32.totalorder %s155, %s157
    %p161 = scmp.eq.s32.totalorder %s16, 0
    %p162 = por %p160, %p161
    %p163 = scmp.ne.s32.totalorder %s155, %s157
    %p164 = scmp.eq.s32.totalorder %s21, 1
    %p165 = por %p163, %p164
    %p166 = scmp.ne.s32.totalorder %s157, %s158
    %p167 = scmp.eq.s32.totalorder %s21, 0
    %p168 = por %p166, %p167
    %p169 = scmp.ne.s32.totalorder %s157, %s158
    %p170 = scmp.eq.s32.totalorder %s22, 1
    %p171 = por %p169, %p170
    %p173 = scmp.ne.s32.totalorder %s158, %s172
    %p174 = scmp.eq.s32.totalorder %s22, 0
    %p175 = por %p173, %p174
    %s177 = sadd.s32 %s176, 1
    %p180 = scmp.eq.s32.totalorder %s16, 1
    %p181 = scmp.ne.s32.totalorder %s176, %s178
    %p182 = scmp.eq.s32.totalorder %s16, 0
    %p183 = por %p181, %p182
    %p184 = scmp.ne.s32.totalorder %s176, %s178
    %p185 = scmp.eq.s32.totalorder %s21, 1
    %p186 = por %p184, %p185
    %p187 = scmp.ne.s32.totalorder %s178, %s179
    %p188 = scmp.eq.s32.totalorder %s21, 0
    %p189 = por %p187, %p188
    %p190 = scmp.ne.s32.totalorder %s178, %s179
    %p191 = scmp.eq.s32.totalorder %s22, 1
    %p192 = por %p190, %p191
    %p194 = scmp.ne.s32.totalorder %s179, %s193
    %p195 = scmp.eq.s32.totalorder %s22, 0
    %p196 = por %p194, %p195
    %s198 = sadd.s32 %s197, 1
    %p201 = scmp.eq.s32.totalorder %s16, 1
    %p202 = scmp.ne.s32.totalorder %s197, %s199
    %p203 = scmp.eq.s32.totalorder %s16, 0
    %p204 = por %p202, %p203
    %p205 = scmp.ne.s32.totalorder %s197, %s199
    %p206 = scmp.eq.s32.totalorder %s21, 1
    %p207 = por %p205, %p206
    %p208 = scmp.ne.s32.totalorder %s199, %s200
    %p209 = scmp.eq.s32.totalorder %s21, 0
    %p210 = por %p208, %p209
    %p211 = scmp.ne.s32.totalorder %s199, %s200
    %p212 = scmp.eq.s32.totalorder %s22, 1
    %p213 = por %p211, %p212
    %p215 = scmp.ne.s32.totalorder %s200, %s214
    %p216 = scmp.eq.s32.totalorder %s22, 0
    %p217 = por %p215, %p216
    %s219 = sadd.s32 %s218, 1
    %p222 = scmp.eq.s32.totalorder %s16, 1
    %p223 = scmp.ne.s32.totalorder %s218, %s220
    %p224 = scmp.eq.s32.totalorder %s16, 0
    %p225 = por %p223, %p224
    %p226 = scmp.ne.s32.totalorder %s218, %s220
    %p227 = scmp.eq.s32.totalorder %s21, 1
    %p228 = por %p226, %p227
    %p229 = scmp.ne.s32.totalorder %s220, %s221
    %p230 = scmp.eq.s32.totalorder %s21, 0
    %p231 = por %p229, %p230
    %p232 = scmp.ne.s32.totalorder %s220, %s221
    %p233 = scmp.eq.s32.totalorder %s22, 1
    %p234 = por %p232, %p233
    %p236 = scmp.ne.s32.totalorder %s221, %s235
    %p237 = scmp.eq.s32.totalorder %s22, 0
    %p238 = por %p236, %p237
    %s239 = ssub.s32 %s16, %s23
    %p240 = scmp.eq.s32.totalorder %s239, 0
    %s242 = sadd.s32 %s241, 1
    %s243 = scalar_select %p240, %s241, %s242
    %p246 = pneg %p240
    %p247 = scmp.eq.s32.totalorder %s16, 1
    %p248 = por %p246, %p247
    %p249 = scmp.ne.s32.totalorder %s241, %s244
    %p250 = scmp.eq.s32.totalorder %s16, 0
    %p251 = por %p249, %p250
    %p252 = scmp.ne.s32.totalorder %s241, %s244
    %p253 = scmp.eq.s32.totalorder %s21, 1
    %p254 = por %p252, %p253
    %p255 = scmp.ne.s32.totalorder %s244, %s245
    %p256 = scmp.eq.s32.totalorder %s21, 0
    %p257 = por %p255, %p256
    %p258 = scmp.ne.s32.totalorder %s244, %s245
    %p259 = scmp.eq.s32.totalorder %s22, 1
    %p260 = por %p258, %p259
    %p262 = scmp.ne.s32.totalorder %s245, %s261
    %p263 = scmp.eq.s32.totalorder %s22, 0
    %p264 = por %p262, %p263
    %p265 = scmp.le.s32.totalorder 1, %s16
    %p266 = scmp.lt.s32.totalorder %s16, 3
    %p267 = pnand %p265, %p266
    %p268 = pneg %p267
    // Predicated region
    $region9: #{bottleneck_forward.1} parent=5 // pred_check
      _
    $region10: #{bottleneck_forward.1} parent=5 // pred_check_branch
      %270 = sbr.rel (%p267) target = $region12
    $region11: #{bottleneck_forward.1} parent=5 // pred_region
      %s271 = ssub.s32 %s16, 1
      // Predicated region
      $region13: #{bottleneck_forward.1} parent=11 // pred_check
        %p272 = pneg %p63
      $region14: #{bottleneck_forward.1} parent=11 // pred_check_branch
        %274 = sbr.rel (%p272) target = $region16
      $region15: #{bottleneck_forward.1} parent=11 // pred_region
        _
      $region16: #{bottleneck_forward.1} parent=11 // pred_fallthru
        _
      // Predicated region
      $region17: #{bottleneck_forward.1} parent=11 // pred_check
        %p275 = pneg %p84
      $region18: #{bottleneck_forward.1} parent=11 // pred_check_branch
        %277 = sbr.rel (%p275) target = $region20
      $region19: #{bottleneck_forward.1} parent=11 // pred_region
        _
      $region20: #{bottleneck_forward.1} parent=11 // pred_fallthru
        _
      // Predicated region
      $region21: #{bottleneck_forward.1} parent=11 // pred_check
        %p278 = pneg %p105
      $region22: #{bottleneck_forward.1} parent=11 // pred_check_branch
        %280 = sbr.rel (%p278) target = $region24
      $region23: #{bottleneck_forward.1} parent=11 // pred_region
        _
      $region24: #{bottleneck_forward.1} parent=11 // pred_fallthru
        _
      // Predicated region
      $region25: #{bottleneck_forward.1} parent=11 // pred_check
        %p281 = pneg %p126
      $region26: #{bottleneck_forward.1} parent=11 // pred_check_branch
        %283 = sbr.rel (%p281) target = $region28
      $region27: #{bottleneck_forward.1} parent=11 // pred_region
        _
      $region28: #{bottleneck_forward.1} parent=11 // pred_fallthru
        _
      // Predicated region
      $region29: #{bottleneck_forward.1} parent=11 // pred_check
        %p284 = pneg %p147
      $region30: #{bottleneck_forward.1} parent=11 // pred_check_branch
        %286 = sbr.rel (%p284) target = $region32
      $region31: #{bottleneck_forward.1} parent=11 // pred_region
        _
      $region32: #{bottleneck_forward.1} parent=11 // pred_fallthru
        _
      // Predicated region
      $region33: #{bottleneck_forward.1} parent=11 // pred_check
        %p287 = pneg %p168
      $region34: #{bottleneck_forward.1} parent=11 // pred_check_branch
        %289 = sbr.rel (%p287) target = $region36
      $region35: #{bottleneck_forward.1} parent=11 // pred_region
        _
      $region36: #{bottleneck_forward.1} parent=11 // pred_fallthru
        _
      // Predicated region
      $region37: #{bottleneck_forward.1} parent=11 // pred_check
        %p290 = pneg %p189
      $region38: #{bottleneck_forward.1} parent=11 // pred_check_branch
        %292 = sbr.rel (%p290) target = $region40
      $region39: #{bottleneck_forward.1} parent=11 // pred_region
        _
      $region40: #{bottleneck_forward.1} parent=11 // pred_fallthru
        _
      // Predicated region
      $region41: #{bottleneck_forward.1} parent=11 // pred_check
        %p293 = pneg %p210
      $region42: #{bottleneck_forward.1} parent=11 // pred_check_branch
        %295 = sbr.rel (%p293) target = $region44
      $region43: #{bottleneck_forward.1} parent=11 // pred_region
        _
      $region44: #{bottleneck_forward.1} parent=11 // pred_fallthru
        _
      // Predicated region
      $region45: #{bottleneck_forward.1} parent=11 // pred_check
        %p296 = pneg %p231
      $region46: #{bottleneck_forward.1} parent=11 // pred_check_branch
        %298 = sbr.rel (%p296) target = $region48
      $region47: #{bottleneck_forward.1} parent=11 // pred_region
        _
      $region48: #{bottleneck_forward.1} parent=11 // pred_fallthru
        _
    $region12: #{bottleneck_forward.1} parent=5 // pred_fallthru
      _
    %p299 = scmp.lt.s32.totalorder %s16, 2
    // Predicated region
    $region49: #{bottleneck_forward.1} parent=5 // pred_check
      %p300 = pneg %p299
    $region50: #{bottleneck_forward.1} parent=5 // pred_check_branch
      %302 = sbr.rel (%p300) target = $region52
    $region51: #{bottleneck_forward.1} parent=5 // pred_region
      // Predicated region
      $region53: #{bottleneck_forward.1} parent=51 // pred_check
        %p303 = pneg %p36
      $region54: #{bottleneck_forward.1} parent=51 // pred_check_branch
        %305 = sbr.rel (%p303) target = $region56
      $region55: #{bottleneck_forward.1} parent=51 // pred_region
        %p306 = scmp.lt.s32.totalorder %s16, 1
        %s307 = scalar_select %p306, %s16, 1
        %s308 = smul.addr %s307, 32
        %s309 = smul.addr %s308, 8
        %s310 = scalar_lea.vmem %s0, %s309
      $region56: #{bottleneck_forward.1} parent=51 // pred_fallthru
        _
    $region52: #{bottleneck_forward.1} parent=5 // pred_fallthru
      _
    %p311 = scmp.le.s32.totalorder 1, %s16
    %p312 = scmp.lt.s32.totalorder %s16, 3
    %p313 = pnand %p311, %p312
    %p314 = pneg %p313
    // Predicated region
    $region57: #{bottleneck_forward.1} parent=5 // pred_check
      _
    $region58: #{bottleneck_forward.1} parent=5 // pred_check_branch
      %316 = sbr.rel (%p313) target = $region60
    $region59: #{bottleneck_forward.1} parent=5 // pred_region
      %s317 = ssub.s32 %s16, 1
      %p318 = scmp.lt.s32.totalorder %s21, 1
      %s319 = scalar_select %p318, %s21, 1
      %s320 = smul.addr %s319, 32
      %s321 = smul.addr %s320, 8
      %s322 = scalar_lea.vmem %s0, %s321
      %p323 = pneg %p42
      %p324 = pneg %p39
      %p325 = pneg %p63
      %p326 = pneg %p60
      %p327 = pneg %p84
      %p328 = pneg %p81
      %p329 = pneg %p105
      %p330 = pneg %p102
      %p331 = pneg %p126
      %p332 = pneg %p123
      %p333 = pneg %p147
      %p334 = pneg %p144
      %p335 = pneg %p168
      %p336 = pneg %p165
      %p337 = pneg %p189
      %p338 = pneg %p186
      %p339 = pneg %p210
      %p340 = pneg %p207
      %p341 = pneg %p231
      %p342 = pneg %p228
      %p343 = pneg %p257
      %p344 = pneg %p254
      %p345 = scmp.lt.s32.totalorder %s21, 1
      %s346 = scalar_select %p345, %s21, 1
      %s347 = smul.addr %s346, 32
      %s348 = smul.addr %s347, 8
      %s349 = scalar_lea.vmem %s10, %s348
      %p350 = scmp.lt.s32.totalorder %s21, 1
      %s351 = scalar_select %p350, %s21, 1
      %s352 = smul.addr %s351, 32
      %s353 = smul.addr %s352, 8
      %s354 = scalar_lea.vmem %s0, %s353
      %p355 = scmp.lt.s32.totalorder %s21, 1
      %s356 = scalar_select %p355, %s21, 1
      %s357 = smul.addr %s356, 32
      %s358 = smul.addr %s357, 8
      %s359 = scalar_lea.vmem %s10, %s358
      %v361 = vld [vmem:[%s354] sm:$0xff]
      %v362 = vld [vmem:[%s354 + $0x8] sm:$0xff]
      %v363 = vld [vmem:[%s354 + $0x10] sm:$0xff]
      %v364 = vld [vmem:[%s354 + $0x18] sm:$0xff]
      %v365 = vld [vmem:[%s354 + $0x20] sm:$0xff]
      %v366 = vld [vmem:[%s354 + $0x28] sm:$0xff]
      %v367 = vld [vmem:[%s354 + $0x30] sm:$0xff]
      %v368 = vld [vmem:[%s354 + $0x38] sm:$0xff]
      %v369 = vld [vmem:[%s354 + $0x40] sm:$0xff]
      %v370 = vld [vmem:[%s354 + $0x48] sm:$0xff]
      %v371 = vld [vmem:[%s354 + $0x50] sm:$0xff]
      %v372 = vld [vmem:[%s354 + $0x58] sm:$0xff]
      %v373 = vld [vmem:[%s354 + $0x60] sm:$0xff]
      %v374 = vld [vmem:[%s354 + $0x68] sm:$0xff]
      %v375 = vld [vmem:[%s354 + $0x70] sm:$0xff]
      %v376 = vld [vmem:[%s354 + $0x78] sm:$0xff]
      %v377 = vld [vmem:[%s354 + $0x80] sm:$0xff]
      %v378 = vld [vmem:[%s354 + $0x88] sm:$0xff]
      %v379 = vld [vmem:[%s354 + $0x90] sm:$0xff]
      %v380 = vld [vmem:[%s354 + $0x98] sm:$0xff]
      %v381 = vld [vmem:[%s354 + $0xa0] sm:$0xff]
      %v382 = vld [vmem:[%s354 + $0xa8] sm:$0xff]
      %v383 = vld [vmem:[%s354 + $0xb0] sm:$0xff]
      %v384 = vld [vmem:[%s354 + $0xb8] sm:$0xff]
      %v385 = vld [vmem:[%s354 + $0xc0] sm:$0xff]
      %v386 = vld [vmem:[%s354 + $0xc8] sm:$0xff]
      %v387 = vld [vmem:[%s354 + $0xd0] sm:$0xff]
      %v388 = vld [vmem:[%s354 + $0xd8] sm:$0xff]
      %v389 = vld [vmem:[%s354 + $0xe0] sm:$0xff]
      %v390 = vld [vmem:[%s354 + $0xe8] sm:$0xff]
      %v391 = vld [vmem:[%s354 + $0xf0] sm:$0xff]
      %v392 = vld [vmem:[%s354 + $0xf8] sm:$0xff]
      %393 = vxpose.xlu0.b32.start [1/16] %v361, 128
      %394 = vxpose.xlu0.b32.cont [2/16] %v363, 128
      %395 = vxpose.xlu0.b32.cont [3/16] %v365, 128
      %396 = vxpose.xlu0.b32.cont [4/16] %v367, 128
      %397 = vxpose.xlu0.b32.cont [5/16] %v369, 128
      %398 = vxpose.xlu0.b32.cont [6/16] %v371, 128
      %399 = vxpose.xlu0.b32.cont [7/16] %v373, 128
      %400 = vxpose.xlu0.b32.cont [8/16] %v375, 128
      %401 = vxpose.xlu0.b32.cont [9/16] %v377, 128
      %402 = vxpose.xlu0.b32.cont [10/16] %v379, 128
      %403 = vxpose.xlu0.b32.cont [11/16] %v381, 128
      %404 = vxpose.xlu0.b32.cont [12/16] %v383, 128
      %405 = vxpose.xlu0.b32.cont [13/16] %v385, 128
      %406 = vxpose.xlu0.b32.cont [14/16] %v387, 128
      %407 = vxpose.xlu0.b32.cont [15/16] %v389, 128
      %408 = vxpose.xlu0.b32.end [16/16] %v391, 128
      %v409 = vpop.trf.xlu0
      %v410 = vpop.trf.xlu0
      %v411 = vpop.trf.xlu0
      %v412 = vpop.trf.xlu0
      %v413 = vpop.trf.xlu0
      %v414 = vpop.trf.xlu0
      %v415 = vpop.trf.xlu0
      %v416 = vpop.trf.xlu0
      %v417 = vpop.trf.xlu0
      %v418 = vpop.trf.xlu0
      %v419 = vpop.trf.xlu0
      %v420 = vpop.trf.xlu0
      %v421 = vpop.trf.xlu0
      %v422 = vpop.trf.xlu0
      %v423 = vpop.trf.xlu0
      %v424 = vpop.trf.xlu0
      %425 = vxpose.xlu0.b32.start [1/16] %v362, 128
      %426 = vxpose.xlu0.b32.cont [2/16] %v364, 128
      %427 = vxpose.xlu0.b32.cont [3/16] %v366, 128
      %428 = vxpose.xlu0.b32.cont [4/16] %v368, 128
      %429 = vxpose.xlu0.b32.cont [5/16] %v370, 128
      %430 = vxpose.xlu0.b32.cont [6/16] %v372, 128
      %431 = vxpose.xlu0.b32.cont [7/16] %v374, 128
      %432 = vxpose.xlu0.b32.cont [8/16] %v376, 128
      %433 = vxpose.xlu0.b32.cont [9/16] %v378, 128
      %434 = vxpose.xlu0.b32.cont [10/16] %v380, 128
      %435 = vxpose.xlu0.b32.cont [11/16] %v382, 128
      %436 = vxpose.xlu0.b32.cont [12/16] %v384, 128
      %437 = vxpose.xlu0.b32.cont [13/16] %v386, 128
      %438 = vxpose.xlu0.b32.cont [14/16] %v388, 128
      %439 = vxpose.xlu0.b32.cont [15/16] %v390, 128
      %440 = vxpose.xlu0.b32.end [16/16] %v392, 128
      %v441 = vpop.trf.xlu0
      %v442 = vpop.trf.xlu0
      %v443 = vpop.trf.xlu0
      %v444 = vpop.trf.xlu0
      %v445 = vpop.trf.xlu0
      %v446 = vpop.trf.xlu0
      %v447 = vpop.trf.xlu0
      %v448 = vpop.trf.xlu0
      %v449 = vpop.trf.xlu0
      %v450 = vpop.trf.xlu0
      %v451 = vpop.trf.xlu0
      %v452 = vpop.trf.xlu0
      %v453 = vpop.trf.xlu0
      %v454 = vpop.trf.xlu0
      %v455 = vpop.trf.xlu0
      %v456 = vpop.trf.xlu0
      %v457 = vpack.c.bf16 %v410, %v409
      %v458 = vpack.c.bf16 %v412, %v411
      %v459 = vpack.c.bf16 %v414, %v413
      %v460 = vpack.c.bf16 %v416, %v415
      %v461 = vpack.c.bf16 %v418, %v417
      %v462 = vpack.c.bf16 %v420, %v419
      %v463 = vpack.c.bf16 %v422, %v421
      %v464 = vpack.c.bf16 %v424, %v423
      %v465 = vpack.c.bf16 %v442, %v441
      %v466 = vpack.c.bf16 %v444, %v443
      %v467 = vpack.c.bf16 %v446, %v445
      %v468 = vpack.c.bf16 %v448, %v447
      %v469 = vpack.c.bf16 %v450, %v449
      %v470 = vpack.c.bf16 %v452, %v451
      %v471 = vpack.c.bf16 %v454, %v453
      %v472 = vpack.c.bf16 %v456, %v455
      %v473 = vld [vmem:[%s1] sm:$0xf]
      %v474 = vld [vmem:[%s1 + $0x4] sm:$0xf]
      %v475 = vld [vmem:[%s1 + $0x8] sm:$0xf]
      %v476 = vld [vmem:[%s1 + $0xc] sm:$0xf]
      %v477 = vld [vmem:[%s1 + $0x10] sm:$0xf]
      %v478 = vld [vmem:[%s1 + $0x14] sm:$0xf]
      %v479 = vld [vmem:[%s1 + $0x18] sm:$0xf]
      %v480 = vld [vmem:[%s1 + $0x1c] sm:$0xf]
      %v481 = vld [vmem:[%s1 + $0x20] sm:$0xf]
      %v482 = vld [vmem:[%s1 + $0x24] sm:$0xf]
      %v483 = vld [vmem:[%s1 + $0x28] sm:$0xf]
      %v484 = vld [vmem:[%s1 + $0x2c] sm:$0xf]
      %v485 = vld [vmem:[%s1 + $0x30] sm:$0xf]
      %v486 = vld [vmem:[%s1 + $0x34] sm:$0xf]
      %v487 = vld [vmem:[%s1 + $0x38] sm:$0xf]
      %v488 = vld [vmem:[%s1 + $0x3c] sm:$0xf]
      %v505 = vunpack.c.l.b16 %v473
      %v506 = vunpack.c.l.b16 %v474
      %v507 = vunpack.c.l.b16 %v475
      %v508 = vunpack.c.l.b16 %v476
      %v509 = vunpack.c.l.b16 %v477
      %v510 = vunpack.c.l.b16 %v478
      %v511 = vunpack.c.l.b16 %v479
      %v512 = vunpack.c.l.b16 %v480
      %v513 = vunpack.c.l.b16 %v481
      %v514 = vunpack.c.l.b16 %v482
      %v515 = vunpack.c.l.b16 %v483
      %v516 = vunpack.c.l.b16 %v484
      %v517 = vunpack.c.l.b16 %v485
      %v518 = vunpack.c.l.b16 %v486
      %v519 = vunpack.c.l.b16 %v487
      %v520 = vunpack.c.l.b16 %v488
      %v521 = vpack.c.b16 %v506, %v505
      %v522 = vpack.c.b16 %v508, %v507
      %v523 = vpack.c.b16 %v510, %v509
      %v524 = vpack.c.b16 %v512, %v511
      %v525 = vpack.c.b16 %v514, %v513
      %v526 = vpack.c.b16 %v516, %v515
      %v527 = vpack.c.b16 %v518, %v517
      %v528 = vpack.c.b16 %v520, %v519
      %537 = vmatprep.subr.bf16.mxu0 0
      %538 = vmatpush1.bf16.msra.mxu0 %v528
      %539 = vmatprep.subr.bf16.mxu0 0
      %540 = vmatpush1.bf16.msra.mxu0 %v527
      %541 = vmatprep.subr.bf16.mxu0 0
      %542 = vmatpush1.bf16.msra.mxu0 %v526
      %543 = vmatprep.subr.bf16.mxu0 0
      %544 = vmatpush1.bf16.msra.mxu0 %v525
      %545 = vmatprep.subr.bf16.mxu0 0
      %546 = vmatpush1.bf16.msra.mxu0 %v524
      %547 = vmatprep.subr.bf16.mxu0 0
      %548 = vmatpush1.bf16.msra.mxu0 %v523
      %549 = vmatprep.subr.bf16.mxu0 0
      %550 = vmatpush1.bf16.msra.mxu0 %v522
      %551 = vmatprep.subr.bf16.mxu0 0
      %552 = vmatpush1.bf16.msra.mxu0 %v521
      %553 = vmatprep.subr.bf16.mxu0 0
      %554 = vmatpush2.bf16.msra.mxu0 0
      %555 = vmatprep.subr.bf16.mxu0 0
      %556 = vmatpush2.bf16.msra.mxu0 0
      %557 = vmatprep.subr.bf16.mxu0 0
      %558 = vmatpush2.bf16.msra.mxu0 0
      %559 = vmatprep.subr.bf16.mxu0 0
      %560 = vmatpush2.bf16.msra.mxu0 0
      %561 = vmatprep.subr.bf16.mxu0 0
      %562 = vmatpush2.bf16.msra.mxu0 0
      %563 = vmatprep.subr.bf16.mxu0 0
      %564 = vmatpush2.bf16.msra.mxu0 0
      %565 = vmatprep.subr.bf16.mxu0 0
      %566 = vmatpush2.bf16.msra.mxu0 0
      %567 = vmatprep.subr.bf16.mxu0 0
      %568 = vmatpush2.bf16.msra.mxu0 0
      %569 = vmatprep.mubr.bf16.mxu0 0
      %570 = vmatmul.mubr.bf16.gmra.mxu0 %v457
      %v571 = vpop.f32.mrf.mxu0
      %v572 = vadd.f32 0.0, %v571
      %v573 = vpop.f32.mrf.mxu0
      %v574 = vpop.f32.mrf.mxu0
      %v575 = vadd.f32 0.0, %v574
      %v576 = vpop.f32.mrf.mxu0
      %577 = vmatprep.mubr.bf16.mxu0 0
      %578 = vmatmul.mubr.bf16.gmra.mxu0 %v458
      %v579 = vpop.f32.mrf.mxu0
      %v580 = vadd.f32 0.0, %v579
      %v581 = vpop.f32.mrf.mxu0
      %v582 = vpop.f32.mrf.mxu0
      %v583 = vadd.f32 0.0, %v582
      %v584 = vpop.f32.mrf.mxu0
      %585 = vmatprep.mubr.bf16.mxu0 0
      %586 = vmatmul.mubr.bf16.gmra.mxu0 %v459
      %v587 = vpop.f32.mrf.mxu0
      %v588 = vadd.f32 0.0, %v587
      %v589 = vpop.f32.mrf.mxu0
      %v590 = vpop.f32.mrf.mxu0
      %v591 = vadd.f32 0.0, %v590
      %v592 = vpop.f32.mrf.mxu0
      %593 = vmatprep.mubr.bf16.mxu0 0
      %594 = vmatmul.mubr.bf16.gmra.mxu0 %v460
      %v595 = vpop.f32.mrf.mxu0
      %v596 = vadd.f32 0.0, %v595
      %v597 = vpop.f32.mrf.mxu0
      %v598 = vpop.f32.mrf.mxu0
      %v599 = vadd.f32 0.0, %v598
      %v600 = vpop.f32.mrf.mxu0
      %601 = vmatprep.mubr.bf16.mxu0 0
      %602 = vmatmul.mubr.bf16.gmra.mxu0 %v461
      %v603 = vpop.f32.mrf.mxu0
      %v604 = vadd.f32 0.0, %v603
      %v605 = vpop.f32.mrf.mxu0
      %v606 = vpop.f32.mrf.mxu0
      %v607 = vadd.f32 0.0, %v606
      %v608 = vpop.f32.mrf.mxu0
      %609 = vmatprep.mubr.bf16.mxu0 0
      %610 = vmatmul.mubr.bf16.gmra.mxu0 %v462
      %v611 = vpop.f32.mrf.mxu0
      %v612 = vadd.f32 0.0, %v611
      %v613 = vpop.f32.mrf.mxu0
      %v614 = vpop.f32.mrf.mxu0
      %v615 = vadd.f32 0.0, %v614
      %v616 = vpop.f32.mrf.mxu0
      %617 = vmatprep.mubr.bf16.mxu0 0
      %618 = vmatmul.mubr.bf16.gmra.mxu0 %v463
      %v619 = vpop.f32.mrf.mxu0
      %v620 = vadd.f32 0.0, %v619
      %v621 = vpop.f32.mrf.mxu0
      %v622 = vpop.f32.mrf.mxu0
      %v623 = vadd.f32 0.0, %v622
      %v624 = vpop.f32.mrf.mxu0
      %625 = vmatprep.mubr.bf16.mxu0 0
      %626 = vmatmul.mubr.bf16.gmra.mxu0 %v464
      %v627 = vpop.f32.mrf.mxu0
      %v628 = vadd.f32 0.0, %v627
      %v629 = vpop.f32.mrf.mxu0
      %v630 = vpop.f32.mrf.mxu0
      %v631 = vadd.f32 0.0, %v630
      %v632 = vpop.f32.mrf.mxu0
      %633 = vmatprep.mubr.bf16.mxu0 0
      %634 = vmatmul.mubr.bf16.gmra.mxu0 %v465
      %v635 = vpop.f32.mrf.mxu0
      %v636 = vadd.f32 0.0, %v635
      %v637 = vpop.f32.mrf.mxu0
      %v638 = vpop.f32.mrf.mxu0
      %v639 = vadd.f32 0.0, %v638
      %v640 = vpop.f32.mrf.mxu0
      %641 = vmatprep.mubr.bf16.mxu0 0
      %642 = vmatmul.mubr.bf16.gmra.mxu0 %v466
      %v643 = vpop.f32.mrf.mxu0
      %v644 = vadd.f32 0.0, %v643
      %v645 = vpop.f32.mrf.mxu0
      %v646 = vpop.f32.mrf.mxu0
      %v647 = vadd.f32 0.0, %v646
      %v648 = vpop.f32.mrf.mxu0
      %649 = vmatprep.mubr.bf16.mxu0 0
      %650 = vmatmul.mubr.bf16.gmra.mxu0 %v467
      %v651 = vpop.f32.mrf.mxu0
      %v652 = vadd.f32 0.0, %v651
      %v653 = vpop.f32.mrf.mxu0
      %v654 = vpop.f32.mrf.mxu0
      %v655 = vadd.f32 0.0, %v654
      %v656 = vpop.f32.mrf.mxu0
      %657 = vmatprep.mubr.bf16.mxu0 0
      %658 = vmatmul.mubr.bf16.gmra.mxu0 %v468
      %v659 = vpop.f32.mrf.mxu0
      %v660 = vadd.f32 0.0, %v659
      %v661 = vpop.f32.mrf.mxu0
      %v662 = vpop.f32.mrf.mxu0
      %v663 = vadd.f32 0.0, %v662
      %v664 = vpop.f32.mrf.mxu0
      %665 = vmatprep.mubr.bf16.mxu0 0
      %666 = vmatmul.mubr.bf16.gmra.mxu0 %v469
      %v667 = vpop.f32.mrf.mxu0
      %v668 = vadd.f32 0.0, %v667
      %v669 = vpop.f32.mrf.mxu0
      %v670 = vpop.f32.mrf.mxu0
      %v671 = vadd.f32 0.0, %v670
      %v672 = vpop.f32.mrf.mxu0
      %673 = vmatprep.mubr.bf16.mxu0 0
      %674 = vmatmul.mubr.bf16.gmra.mxu0 %v470
      %v675 = vpop.f32.mrf.mxu0
      %v676 = vadd.f32 0.0, %v675
      %v677 = vpop.f32.mrf.mxu0
      %v678 = vpop.f32.mrf.mxu0
      %v679 = vadd.f32 0.0, %v678
      %v680 = vpop.f32.mrf.mxu0
      %681 = vmatprep.mubr.bf16.mxu0 0
      %682 = vmatmul.mubr.bf16.gmra.mxu0 %v471
      %v683 = vpop.f32.mrf.mxu0
      %v684 = vadd.f32 0.0, %v683
      %v685 = vpop.f32.mrf.mxu0
      %v686 = vpop.f32.mrf.mxu0
      %v687 = vadd.f32 0.0, %v686
      %v688 = vpop.f32.mrf.mxu0
      %689 = vmatprep.mubr.bf16.mxu0 0
      %690 = vmatmul.mubr.bf16.gmra.mxu0 %v472
      %v691 = vpop.f32.mrf.mxu0
      %v692 = vadd.f32 0.0, %v691
      %v693 = vpop.f32.mrf.mxu0
      %v694 = vpop.f32.mrf.mxu0
      %v695 = vadd.f32 0.0, %v694
      %v696 = vpop.f32.mrf.mxu0
      %697 = vdwg.mxu0
      %v698 = vld [vmem:[%s2] sm:$0x1]
      %v700 = vlaneseq
      %v701 = vshrl.u32 %v700, 7
      %v702 = vsub.s32 0, %v701
      %v703 = vrot.slane %v698, %v702
      %v705 = vmul.f32 %v572, %v703
      %v706 = vmul.f32 %v575, %v703
      %v707 = vmul.f32 %v580, %v703
      %v708 = vmul.f32 %v583, %v703
      %v709 = vmul.f32 %v588, %v703
      %v710 = vmul.f32 %v591, %v703
      %v711 = vmul.f32 %v596, %v703
      %v712 = vmul.f32 %v599, %v703
      %v713 = vmul.f32 %v604, %v703
      %v714 = vmul.f32 %v607, %v703
      %v715 = vmul.f32 %v612, %v703
      %v716 = vmul.f32 %v615, %v703
      %v717 = vmul.f32 %v620, %v703
      %v718 = vmul.f32 %v623, %v703
      %v719 = vmul.f32 %v628, %v703
      %v720 = vmul.f32 %v631, %v703
      %v721 = vmul.f32 %v636, %v703
      %v722 = vmul.f32 %v639, %v703
      %v723 = vmul.f32 %v644, %v703
      %v724 = vmul.f32 %v647, %v703
      %v725 = vmul.f32 %v652, %v703
      %v726 = vmul.f32 %v655, %v703
      %v727 = vmul.f32 %v660, %v703
      %v728 = vmul.f32 %v663, %v703
      %v729 = vmul.f32 %v668, %v703
      %v730 = vmul.f32 %v671, %v703
      %v731 = vmul.f32 %v676, %v703
      %v732 = vmul.f32 %v679, %v703
      %v733 = vmul.f32 %v684, %v703
      %v734 = vmul.f32 %v687, %v703
      %v735 = vmul.f32 %v692, %v703
      %v736 = vmul.f32 %v695, %v703
      %v737 = vld [vmem:[%s3] sm:$0x1]
      %v739 = vlaneseq
      %v740 = vshrl.u32 %v739, 7
      %v741 = vsub.s32 0, %v740
      %v742 = vrot.slane %v737, %v741
      %v744 = vadd.f32 %v705, %v742
      %v745 = vadd.f32 %v706, %v742
      %v746 = vadd.f32 %v707, %v742
      %v747 = vadd.f32 %v708, %v742
      %v748 = vadd.f32 %v709, %v742
      %v749 = vadd.f32 %v710, %v742
      %v750 = vadd.f32 %v711, %v742
      %v751 = vadd.f32 %v712, %v742
      %v752 = vadd.f32 %v713, %v742
      %v753 = vadd.f32 %v714, %v742
      %v754 = vadd.f32 %v715, %v742
      %v755 = vadd.f32 %v716, %v742
      %v756 = vadd.f32 %v717, %v742
      %v757 = vadd.f32 %v718, %v742
      %v758 = vadd.f32 %v719, %v742
      %v759 = vadd.f32 %v720, %v742
      %v760 = vadd.f32 %v721, %v742
      %v761 = vadd.f32 %v722, %v742
      %v762 = vadd.f32 %v723, %v742
      %v763 = vadd.f32 %v724, %v742
      %v764 = vadd.f32 %v725, %v742
      %v765 = vadd.f32 %v726, %v742
      %v766 = vadd.f32 %v727, %v742
      %v767 = vadd.f32 %v728, %v742
      %v768 = vadd.f32 %v729, %v742
      %v769 = vadd.f32 %v730, %v742
      %v770 = vadd.f32 %v731, %v742
      %v771 = vadd.f32 %v732, %v742
      %v772 = vadd.f32 %v733, %v742
      %v773 = vadd.f32 %v734, %v742
      %v774 = vadd.f32 %v735, %v742
      %v775 = vadd.f32 %v736, %v742
      %v776 = vmax.f32 %v744, 0.0
      %v777 = vmax.f32 %v745, 0.0
      %v778 = vmax.f32 %v746, 0.0
      %v779 = vmax.f32 %v747, 0.0
      %v780 = vmax.f32 %v748, 0.0
      %v781 = vmax.f32 %v749, 0.0
      %v782 = vmax.f32 %v750, 0.0
      %v783 = vmax.f32 %v751, 0.0
      %v784 = vmax.f32 %v752, 0.0
      %v785 = vmax.f32 %v753, 0.0
      %v786 = vmax.f32 %v754, 0.0
      %v787 = vmax.f32 %v755, 0.0
      %v788 = vmax.f32 %v756, 0.0
      %v789 = vmax.f32 %v757, 0.0
      %v790 = vmax.f32 %v758, 0.0
      %v791 = vmax.f32 %v759, 0.0
      %v792 = vmax.f32 %v760, 0.0
      %v793 = vmax.f32 %v761, 0.0
      %v794 = vmax.f32 %v762, 0.0
      %v795 = vmax.f32 %v763, 0.0
      %v796 = vmax.f32 %v764, 0.0
      %v797 = vmax.f32 %v765, 0.0
      %v798 = vmax.f32 %v766, 0.0
      %v799 = vmax.f32 %v767, 0.0
      %v800 = vmax.f32 %v768, 0.0
      %v801 = vmax.f32 %v769, 0.0
      %v802 = vmax.f32 %v770, 0.0
      %v803 = vmax.f32 %v771, 0.0
      %v804 = vmax.f32 %v772, 0.0
      %v805 = vmax.f32 %v773, 0.0
      %v806 = vmax.f32 %v774, 0.0
      %v807 = vmax.f32 %v775, 0.0
      %v808 = vlaneseq
      %v809 = vshrl.u32 %v808, 7
      %v810 = vadd.s32 %v809, 16
      %v811 = vadd.s32 %v809, 24
      %v812 = vadd.s32 %v809, 32
      %v813 = vadd.s32 %v809, 40
      %v814 = vadd.s32 %v809, 48
      %v815 = vadd.s32 %v809, 56
      %v816 = vadd.s32 %v809, 64
      %v817 = vadd.s32 %v809, 72
      %v818 = vadd.s32 %v809, 80
      %v819 = vadd.s32 %v809, 88
      %v820 = vadd.s32 %v809, 96
      %v821 = vadd.s32 %v809, 104
      %v822 = vadd.s32 %v809, 112
      %v823 = vadd.s32 %v809, 120
      %v824 = vadd.s32 %v809, 128
      %v825 = vadd.s32 %v809, 136
      %v826 = vadd.s32 %v809, 144
      %v827 = vadd.s32 %v809, 152
      %v828 = vadd.s32 %v809, 160
      %v829 = vadd.s32 %v809, 168
      %v830 = vadd.s32 %v809, 176
      %v831 = vadd.s32 %v809, 184
      %v832 = vadd.s32 %v809, 192
      %v833 = vadd.s32 %v809, 200
      %v834 = vadd.s32 %v809, 208
      %v835 = vadd.s32 %v809, 216
      %v836 = vadd.s32 %v809, 224
      %v837 = vadd.s32 %v809, 232
      %v838 = vadd.s32 %v809, 240
      %v839 = vadd.s32 %v809, 248
      %v840 = vadd.s32 %v809, 256
      %v841 = vadd.s32 %v809, 264
      %vm842 = vcmp.lt.s32.totalorder %v810, 0
      %v843 = vsub.s32 0, %v810
      %v844 = vsel %vm842, %v843, %v810
      %v845 = vshrl.u32 %v844, 4
      %v846 = vand.u32 %v844, 15
      %v847 = vsub.s32 0, %v846
      %v848 = vsel %vm842, %v847, %v846
      %vm849 = vcmp.lt.s32.totalorder %v811, 0
      %v850 = vsub.s32 0, %v811
      %v851 = vsel %vm849, %v850, %v811
      %v852 = vshrl.u32 %v851, 4
      %v853 = vand.u32 %v851, 15
      %v854 = vsub.s32 0, %v853
      %v855 = vsel %vm849, %v854, %v853
      %vm856 = vcmp.lt.s32.totalorder %v812, 0
      %v857 = vsub.s32 0, %v812
      %v858 = vsel %vm856, %v857, %v812
      %v859 = vshrl.u32 %v858, 4
      %v860 = vand.u32 %v858, 15
      %v861 = vsub.s32 0, %v860
      %v862 = vsel %vm856, %v861, %v860
      %vm863 = vcmp.lt.s32.totalorder %v813, 0
      %v864 = vsub.s32 0, %v813
      %v865 = vsel %vm863, %v864, %v813
      %v866 = vshrl.u32 %v865, 4
      %v867 = vand.u32 %v865, 15
      %v868 = vsub.s32 0, %v867
      %v869 = vsel %vm863, %v868, %v867
      %vm870 = vcmp.lt.s32.totalorder %v814, 0
      %v871 = vsub.s32 0, %v814
      %v872 = vsel %vm870, %v871, %v814
      %v873 = vshrl.u32 %v872, 4
      %v874 = vand.u32 %v872, 15
      %v875 = vsub.s32 0, %v874
      %v876 = vsel %vm870, %v875, %v874
      %vm877 = vcmp.lt.s32.totalorder %v815, 0
      %v878 = vsub.s32 0, %v815
      %v879 = vsel %vm877, %v878, %v815
      %v880 = vshrl.u32 %v879, 4
      %v881 = vand.u32 %v879, 15
      %v882 = vsub.s32 0, %v881
      %v883 = vsel %vm877, %v882, %v881
      %vm884 = vcmp.lt.s32.totalorder %v816, 0
      %v885 = vsub.s32 0, %v816
      %v886 = vsel %vm884, %v885, %v816
      %v887 = vshrl.u32 %v886, 4
      %v888 = vand.u32 %v886, 15
      %v889 = vsub.s32 0, %v888
      %v890 = vsel %vm884, %v889, %v888
      %vm891 = vcmp.lt.s32.totalorder %v817, 0
      %v892 = vsub.s32 0, %v817
      %v893 = vsel %vm891, %v892, %v817
      %v894 = vshrl.u32 %v893, 4
      %v895 = vand.u32 %v893, 15
      %v896 = vsub.s32 0, %v895
      %v897 = vsel %vm891, %v896, %v895
      %vm898 = vcmp.lt.s32.totalorder %v818, 0
      %v899 = vsub.s32 0, %v818
      %v900 = vsel %vm898, %v899, %v818
      %v901 = vshrl.u32 %v900, 4
      %v902 = vand.u32 %v900, 15
      %v903 = vsub.s32 0, %v902
      %v904 = vsel %vm898, %v903, %v902
      %vm905 = vcmp.lt.s32.totalorder %v819, 0
      %v906 = vsub.s32 0, %v819
      %v907 = vsel %vm905, %v906, %v819
      %v908 = vshrl.u32 %v907, 4
      %v909 = vand.u32 %v907, 15
      %v910 = vsub.s32 0, %v909
      %v911 = vsel %vm905, %v910, %v909
      %vm912 = vcmp.lt.s32.totalorder %v820, 0
      %v913 = vsub.s32 0, %v820
      %v914 = vsel %vm912, %v913, %v820
      %v915 = vshrl.u32 %v914, 4
      %v916 = vand.u32 %v914, 15
      %v917 = vsub.s32 0, %v916
      %v918 = vsel %vm912, %v917, %v916
      %vm919 = vcmp.lt.s32.totalorder %v821, 0
      %v920 = vsub.s32 0, %v821
      %v921 = vsel %vm919, %v920, %v821
      %v922 = vshrl.u32 %v921, 4
      %v923 = vand.u32 %v921, 15
      %v924 = vsub.s32 0, %v923
      %v925 = vsel %vm919, %v924, %v923
      %vm926 = vcmp.lt.s32.totalorder %v822, 0
      %v927 = vsub.s32 0, %v822
      %v928 = vsel %vm926, %v927, %v822
      %v929 = vshrl.u32 %v928, 4
      %v930 = vand.u32 %v928, 15
      %v931 = vsub.s32 0, %v930
      %v932 = vsel %vm926, %v931, %v930
      %vm933 = vcmp.lt.s32.totalorder %v823, 0
      %v934 = vsub.s32 0, %v823
      %v935 = vsel %vm933, %v934, %v823
      %v936 = vshrl.u32 %v935, 4
      %v937 = vand.u32 %v935, 15
      %v938 = vsub.s32 0, %v937
      %v939 = vsel %vm933, %v938, %v937
      %vm940 = vcmp.lt.s32.totalorder %v824, 0
      %v941 = vsub.s32 0, %v824
      %v942 = vsel %vm940, %v941, %v824
      %v943 = vshrl.u32 %v942, 4
      %v944 = vand.u32 %v942, 15
      %v945 = vsub.s32 0, %v944
      %v946 = vsel %vm940, %v945, %v944
      %vm947 = vcmp.lt.s32.totalorder %v825, 0
      %v948 = vsub.s32 0, %v825
      %v949 = vsel %vm947, %v948, %v825
      %v950 = vshrl.u32 %v949, 4
      %v951 = vand.u32 %v949, 15
      %v952 = vsub.s32 0, %v951
      %v953 = vsel %vm947, %v952, %v951
      %vm954 = vcmp.lt.s32.totalorder %v826, 0
      %v955 = vsub.s32 0, %v826
      %v956 = vsel %vm954, %v955, %v826
      %v957 = vshrl.u32 %v956, 4
      %v958 = vand.u32 %v956, 15
      %v959 = vsub.s32 0, %v958
      %v960 = vsel %vm954, %v959, %v958
      %vm961 = vcmp.lt.s32.totalorder %v827, 0
      %v962 = vsub.s32 0, %v827
      %v963 = vsel %vm961, %v962, %v827
      %v964 = vshrl.u32 %v963, 4
      %v965 = vand.u32 %v963, 15
      %v966 = vsub.s32 0, %v965
      %v967 = vsel %vm961, %v966, %v965
      %vm968 = vcmp.lt.s32.totalorder %v828, 0
      %v969 = vsub.s32 0, %v828
      %v970 = vsel %vm968, %v969, %v828
      %v971 = vshrl.u32 %v970, 4
      %v972 = vand.u32 %v970, 15
      %v973 = vsub.s32 0, %v972
      %v974 = vsel %vm968, %v973, %v972
      %vm975 = vcmp.lt.s32.totalorder %v829, 0
      %v976 = vsub.s32 0, %v829
      %v977 = vsel %vm975, %v976, %v829
      %v978 = vshrl.u32 %v977, 4
      %v979 = vand.u32 %v977, 15
      %v980 = vsub.s32 0, %v979
      %v981 = vsel %vm975, %v980, %v979
      %vm982 = vcmp.lt.s32.totalorder %v830, 0
      %v983 = vsub.s32 0, %v830
      %v984 = vsel %vm982, %v983, %v830
      %v985 = vshrl.u32 %v984, 4
      %v986 = vand.u32 %v984, 15
      %v987 = vsub.s32 0, %v986
      %v988 = vsel %vm982, %v987, %v986
      %vm989 = vcmp.lt.s32.totalorder %v831, 0
      %v990 = vsub.s32 0, %v831
      %v991 = vsel %vm989, %v990, %v831
      %v992 = vshrl.u32 %v991, 4
      %v993 = vand.u32 %v991, 15
      %v994 = vsub.s32 0, %v993
      %v995 = vsel %vm989, %v994, %v993
      %vm996 = vcmp.lt.s32.totalorder %v832, 0
      %v997 = vsub.s32 0, %v832
      %v998 = vsel %vm996, %v997, %v832
      %v999 = vshrl.u32 %v998, 4
      %v1000 = vand.u32 %v998, 15
      %v1001 = vsub.s32 0, %v1000
      %v1002 = vsel %vm996, %v1001, %v1000
      %vm1003 = vcmp.lt.s32.totalorder %v833, 0
      %v1004 = vsub.s32 0, %v833
      %v1005 = vsel %vm1003, %v1004, %v833
      %v1006 = vshrl.u32 %v1005, 4
      %v1007 = vand.u32 %v1005, 15
      %v1008 = vsub.s32 0, %v1007
      %v1009 = vsel %vm1003, %v1008, %v1007
      %vm1010 = vcmp.lt.s32.totalorder %v834, 0
      %v1011 = vsub.s32 0, %v834
      %v1012 = vsel %vm1010, %v1011, %v834
      %v1013 = vshrl.u32 %v1012, 4
      %v1014 = vand.u32 %v1012, 15
      %v1015 = vsub.s32 0, %v1014
      %v1016 = vsel %vm1010, %v1015, %v1014
      %vm1017 = vcmp.lt.s32.totalorder %v835, 0
      %v1018 = vsub.s32 0, %v835
      %v1019 = vsel %vm1017, %v1018, %v835
      %v1020 = vshrl.u32 %v1019, 4
      %v1021 = vand.u32 %v1019, 15
      %v1022 = vsub.s32 0, %v1021
      %v1023 = vsel %vm1017, %v1022, %v1021
      %vm1024 = vcmp.lt.s32.totalorder %v836, 0
      %v1025 = vsub.s32 0, %v836
      %v1026 = vsel %vm1024, %v1025, %v836
      %v1027 = vshrl.u32 %v1026, 4
      %v1028 = vand.u32 %v1026, 15
      %v1029 = vsub.s32 0, %v1028
      %v1030 = vsel %vm1024, %v1029, %v1028
      %vm1031 = vcmp.lt.s32.totalorder %v837, 0
      %v1032 = vsub.s32 0, %v837
      %v1033 = vsel %vm1031, %v1032, %v837
      %v1034 = vshrl.u32 %v1033, 4
      %v1035 = vand.u32 %v1033, 15
      %v1036 = vsub.s32 0, %v1035
      %v1037 = vsel %vm1031, %v1036, %v1035
      %vm1038 = vcmp.lt.s32.totalorder %v838, 0
      %v1039 = vsub.s32 0, %v838
      %v1040 = vsel %vm1038, %v1039, %v838
      %v1041 = vshrl.u32 %v1040, 4
      %v1042 = vand.u32 %v1040, 15
      %v1043 = vsub.s32 0, %v1042
      %v1044 = vsel %vm1038, %v1043, %v1042
      %vm1045 = vcmp.lt.s32.totalorder %v839, 0
      %v1046 = vsub.s32 0, %v839
      %v1047 = vsel %vm1045, %v1046, %v839
      %v1048 = vshrl.u32 %v1047, 4
      %v1049 = vand.u32 %v1047, 15
      %v1050 = vsub.s32 0, %v1049
      %v1051 = vsel %vm1045, %v1050, %v1049
      %vm1052 = vcmp.lt.s32.totalorder %v840, 0
      %v1053 = vsub.s32 0, %v840
      %v1054 = vsel %vm1052, %v1053, %v840
      %v1055 = vshrl.u32 %v1054, 4
      %v1056 = vand.u32 %v1054, 15
      %v1057 = vsub.s32 0, %v1056
      %v1058 = vsel %vm1052, %v1057, %v1056
      %vm1059 = vcmp.lt.s32.totalorder %v841, 0
      %v1060 = vsub.s32 0, %v841
      %v1061 = vsel %vm1059, %v1060, %v841
      %v1062 = vshrl.u32 %v1061, 4
      %v1063 = vand.u32 %v1061, 15
      %v1064 = vsub.s32 0, %v1063
      %v1065 = vsel %vm1059, %v1064, %v1063
      %vm1066 = vcmp.ne.s32.totalorder %v848, 0
      %vm1067 = vcmp.ne.s32.totalorder %v855, 0
      %vm1068 = vcmp.ne.s32.totalorder %v862, 0
      %vm1069 = vcmp.ne.s32.totalorder %v869, 0
      %vm1070 = vcmp.ne.s32.totalorder %v876, 0
      %vm1071 = vcmp.ne.s32.totalorder %v883, 0
      %vm1072 = vcmp.ne.s32.totalorder %v890, 0
      %vm1073 = vcmp.ne.s32.totalorder %v897, 0
      %vm1074 = vcmp.ne.s32.totalorder %v904, 0
      %vm1075 = vcmp.ne.s32.totalorder %v911, 0
      %vm1076 = vcmp.ne.s32.totalorder %v918, 0
      %vm1077 = vcmp.ne.s32.totalorder %v925, 0
      %vm1078 = vcmp.ne.s32.totalorder %v932, 0
      %vm1079 = vcmp.ne.s32.totalorder %v939, 0
      %vm1080 = vcmp.ne.s32.totalorder %v946, 0
      %vm1081 = vcmp.ne.s32.totalorder %v953, 0
      %vm1082 = vcmp.ne.s32.totalorder %v960, 0
      %vm1083 = vcmp.ne.s32.totalorder %v967, 0
      %vm1084 = vcmp.ne.s32.totalorder %v974, 0
      %vm1085 = vcmp.ne.s32.totalorder %v981, 0
      %vm1086 = vcmp.ne.s32.totalorder %v988, 0
      %vm1087 = vcmp.ne.s32.totalorder %v995, 0
      %vm1088 = vcmp.ne.s32.totalorder %v1002, 0
      %vm1089 = vcmp.ne.s32.totalorder %v1009, 0
      %vm1090 = vcmp.ne.s32.totalorder %v1016, 0
      %vm1091 = vcmp.ne.s32.totalorder %v1023, 0
      %vm1092 = vcmp.ne.s32.totalorder %v1030, 0
      %vm1093 = vcmp.ne.s32.totalorder %v1037, 0
      %vm1094 = vcmp.ne.s32.totalorder %v1044, 0
      %vm1095 = vcmp.ne.s32.totalorder %v1051, 0
      %vm1096 = vcmp.ne.s32.totalorder %v1058, 0
      %vm1097 = vcmp.ne.s32.totalorder %v1065, 0
      %vm1098 = vcmp.lt.s32.totalorder %v848, 0
      %vm1099 = vcmp.lt.s32.totalorder %v855, 0
      %vm1100 = vcmp.lt.s32.totalorder %v862, 0
      %vm1101 = vcmp.lt.s32.totalorder %v869, 0
      %vm1102 = vcmp.lt.s32.totalorder %v876, 0
      %vm1103 = vcmp.lt.s32.totalorder %v883, 0
      %vm1104 = vcmp.lt.s32.totalorder %v890, 0
      %vm1105 = vcmp.lt.s32.totalorder %v897, 0
      %vm1106 = vcmp.lt.s32.totalorder %v904, 0
      %vm1107 = vcmp.lt.s32.totalorder %v911, 0
      %vm1108 = vcmp.lt.s32.totalorder %v918, 0
      %vm1109 = vcmp.lt.s32.totalorder %v925, 0
      %vm1110 = vcmp.lt.s32.totalorder %v932, 0
      %vm1111 = vcmp.lt.s32.totalorder %v939, 0
      %vm1112 = vcmp.lt.s32.totalorder %v946, 0
      %vm1113 = vcmp.lt.s32.totalorder %v953, 0
      %vm1114 = vcmp.lt.s32.totalorder %v960, 0
      %vm1115 = vcmp.lt.s32.totalorder %v967, 0
      %vm1116 = vcmp.lt.s32.totalorder %v974, 0
      %vm1117 = vcmp.lt.s32.totalorder %v981, 0
      %vm1118 = vcmp.lt.s32.totalorder %v988, 0
      %vm1119 = vcmp.lt.s32.totalorder %v995, 0
      %vm1120 = vcmp.lt.s32.totalorder %v1002, 0
      %vm1121 = vcmp.lt.s32.totalorder %v1009, 0
      %vm1122 = vcmp.lt.s32.totalorder %v1016, 0
      %vm1123 = vcmp.lt.s32.totalorder %v1023, 0
      %vm1124 = vcmp.lt.s32.totalorder %v1030, 0
      %vm1125 = vcmp.lt.s32.totalorder %v1037, 0
      %vm1126 = vcmp.lt.s32.totalorder %v1044, 0
      %vm1127 = vcmp.lt.s32.totalorder %v1051, 0
      %vm1128 = vcmp.lt.s32.totalorder %v1058, 0
      %vm1129 = vcmp.lt.s32.totalorder %v1065, 0
      %vm1130 = vmand %vm1098, %vm1066
      %vm1131 = vmand %vm1099, %vm1067
      %vm1132 = vmand %vm1100, %vm1068
      %vm1133 = vmand %vm1101, %vm1069
      %vm1134 = vmand %vm1102, %vm1070
      %vm1135 = vmand %vm1103, %vm1071
      %vm1136 = vmand %vm1104, %vm1072
      %vm1137 = vmand %vm1105, %vm1073
      %vm1138 = vmand %vm1106, %vm1074
      %vm1139 = vmand %vm1107, %vm1075
      %vm1140 = vmand %vm1108, %vm1076
      %vm1141 = vmand %vm1109, %vm1077
      %vm1142 = vmand %vm1110, %vm1078
      %vm1143 = vmand %vm1111, %vm1079
      %vm1144 = vmand %vm1112, %vm1080
      %vm1145 = vmand %vm1113, %vm1081
      %vm1146 = vmand %vm1114, %vm1082
      %vm1147 = vmand %vm1115, %vm1083
      %vm1148 = vmand %vm1116, %vm1084
      %vm1149 = vmand %vm1117, %vm1085
      %vm1150 = vmand %vm1118, %vm1086
      %vm1151 = vmand %vm1119, %vm1087
      %vm1152 = vmand %vm1120, %vm1088
      %vm1153 = vmand %vm1121, %vm1089
      %vm1154 = vmand %vm1122, %vm1090
      %vm1155 = vmand %vm1123, %vm1091
      %vm1156 = vmand %vm1124, %vm1092
      %vm1157 = vmand %vm1125, %vm1093
      %vm1158 = vmand %vm1126, %vm1094
      %vm1159 = vmand %vm1127, %vm1095
      %vm1160 = vmand %vm1128, %vm1096
      %vm1161 = vmand %vm1129, %vm1097
      %v1162 = vadd.s32 %v848, 16
      %v1163 = vadd.s32 %v855, 16
      %v1164 = vadd.s32 %v862, 16
      %v1165 = vadd.s32 %v869, 16
      %v1166 = vadd.s32 %v876, 16
      %v1167 = vadd.s32 %v883, 16
      %v1168 = vadd.s32 %v890, 16
      %v1169 = vadd.s32 %v897, 16
      %v1170 = vadd.s32 %v904, 16
      %v1171 = vadd.s32 %v911, 16
      %v1172 = vadd.s32 %v918, 16
      %v1173 = vadd.s32 %v925, 16
      %v1174 = vadd.s32 %v932, 16
      %v1175 = vadd.s32 %v939, 16
      %v1176 = vadd.s32 %v946, 16
      %v1177 = vadd.s32 %v953, 16
      %v1178 = vadd.s32 %v960, 16
      %v1179 = vadd.s32 %v967, 16
      %v1180 = vadd.s32 %v974, 16
      %v1181 = vadd.s32 %v981, 16
      %v1182 = vadd.s32 %v988, 16
      %v1183 = vadd.s32 %v995, 16
      %v1184 = vadd.s32 %v1002, 16
      %v1185 = vadd.s32 %v1009, 16
      %v1186 = vadd.s32 %v1016, 16
      %v1187 = vadd.s32 %v1023, 16
      %v1188 = vadd.s32 %v1030, 16
      %v1189 = vadd.s32 %v1037, 16
      %v1190 = vadd.s32 %v1044, 16
      %v1191 = vadd.s32 %v1051, 16
      %v1192 = vadd.s32 %v1058, 16
      %v1193 = vadd.s32 %v1065, 16
      %v1194 = vsel %vm1130, %v1162, %v848
      %v1195 = vsel %vm1131, %v1163, %v855
      %v1196 = vsel %vm1132, %v1164, %v862
      %v1197 = vsel %vm1133, %v1165, %v869
      %v1198 = vsel %vm1134, %v1166, %v876
      %v1199 = vsel %vm1135, %v1167, %v883
      %v1200 = vsel %vm1136, %v1168, %v890
      %v1201 = vsel %vm1137, %v1169, %v897
      %v1202 = vsel %vm1138, %v1170, %v904
      %v1203 = vsel %vm1139, %v1171, %v911
      %v1204 = vsel %vm1140, %v1172, %v918
      %v1205 = vsel %vm1141, %v1173, %v925
      %v1206 = vsel %vm1142, %v1174, %v932
      %v1207 = vsel %vm1143, %v1175, %v939
      %v1208 = vsel %vm1144, %v1176, %v946
      %v1209 = vsel %vm1145, %v1177, %v953
      %v1210 = vsel %vm1146, %v1178, %v960
      %v1211 = vsel %vm1147, %v1179, %v967
      %v1212 = vsel %vm1148, %v1180, %v974
      %v1213 = vsel %vm1149, %v1181, %v981
      %v1214 = vsel %vm1150, %v1182, %v988
      %v1215 = vsel %vm1151, %v1183, %v995
      %v1216 = vsel %vm1152, %v1184, %v1002
      %v1217 = vsel %vm1153, %v1185, %v1009
      %v1218 = vsel %vm1154, %v1186, %v1016
      %v1219 = vsel %vm1155, %v1187, %v1023
      %v1220 = vsel %vm1156, %v1188, %v1030
      %v1221 = vsel %vm1157, %v1189, %v1037
      %v1222 = vsel %vm1158, %v1190, %v1044
      %v1223 = vsel %vm1159, %v1191, %v1051
      %v1224 = vsel %vm1160, %v1192, %v1058
      %v1225 = vsel %vm1161, %v1193, %v1065
      %vm1226 = vcmp.ne.s32.totalorder %v1194, 15
      %vm1227 = vcmp.ne.s32.totalorder %v1195, 15
      %vm1228 = vcmp.ne.s32.totalorder %v1196, 15
      %vm1229 = vcmp.ne.s32.totalorder %v1197, 15
      %vm1230 = vcmp.ne.s32.totalorder %v1198, 15
      %vm1231 = vcmp.ne.s32.totalorder %v1199, 15
      %vm1232 = vcmp.ne.s32.totalorder %v1200, 15
      %vm1233 = vcmp.ne.s32.totalorder %v1201, 15
      %vm1234 = vcmp.ne.s32.totalorder %v1202, 15
      %vm1235 = vcmp.ne.s32.totalorder %v1203, 15
      %vm1236 = vcmp.ne.s32.totalorder %v1204, 15
      %vm1237 = vcmp.ne.s32.totalorder %v1205, 15
      %vm1238 = vcmp.ne.s32.totalorder %v1206, 15
      %vm1239 = vcmp.ne.s32.totalorder %v1207, 15
      %vm1240 = vcmp.ne.s32.totalorder %v1208, 15
      %vm1241 = vcmp.ne.s32.totalorder %v1209, 15
      %vm1242 = vcmp.ne.s32.totalorder %v1210, 15
      %vm1243 = vcmp.ne.s32.totalorder %v1211, 15
      %vm1244 = vcmp.ne.s32.totalorder %v1212, 15
      %vm1245 = vcmp.ne.s32.totalorder %v1213, 15
      %vm1246 = vcmp.ne.s32.totalorder %v1214, 15
      %vm1247 = vcmp.ne.s32.totalorder %v1215, 15
      %vm1248 = vcmp.ne.s32.totalorder %v1216, 15
      %vm1249 = vcmp.ne.s32.totalorder %v1217, 15
      %vm1250 = vcmp.ne.s32.totalorder %v1218, 15
      %vm1251 = vcmp.ne.s32.totalorder %v1219, 15
      %vm1252 = vcmp.ne.s32.totalorder %v1220, 15
      %vm1253 = vcmp.ne.s32.totalorder %v1221, 15
      %vm1254 = vcmp.ne.s32.totalorder %v1222, 15
      %vm1255 = vcmp.ne.s32.totalorder %v1223, 15
      %vm1256 = vcmp.ne.s32.totalorder %v1224, 15
      %vm1257 = vcmp.ne.s32.totalorder %v1225, 15
      %v1258 = vsel %vm1226, 1, 0
      %v1259 = vsel %vm1227, 1, 0
      %v1260 = vsel %vm1228, 1, 0
      %v1261 = vsel %vm1229, 1, 0
      %v1262 = vsel %vm1230, 1, 0
      %v1263 = vsel %vm1231, 1, 0
      %v1264 = vsel %vm1232, 1, 0
      %v1265 = vsel %vm1233, 1, 0
      %v1266 = vsel %vm1234, 1, 0
      %v1267 = vsel %vm1235, 1, 0
      %v1268 = vsel %vm1236, 1, 0
      %v1269 = vsel %vm1237, 1, 0
      %v1270 = vsel %vm1238, 1, 0
      %v1271 = vsel %vm1239, 1, 0
      %v1272 = vsel %vm1240, 1, 0
      %v1273 = vsel %vm1241, 1, 0
      %v1274 = vsel %vm1242, 1, 0
      %v1275 = vsel %vm1243, 1, 0
      %v1276 = vsel %vm1244, 1, 0
      %v1277 = vsel %vm1245, 1, 0
      %v1278 = vsel %vm1246, 1, 0
      %v1279 = vsel %vm1247, 1, 0
      %v1280 = vsel %vm1248, 1, 0
      %v1281 = vsel %vm1249, 1, 0
      %v1282 = vsel %vm1250, 1, 0
      %v1283 = vsel %vm1251, 1, 0
      %v1284 = vsel %vm1252, 1, 0
      %v1285 = vsel %vm1253, 1, 0
      %v1286 = vsel %vm1254, 1, 0
      %v1287 = vsel %vm1255, 1, 0
      %v1288 = vsel %vm1256, 1, 0
      %v1289 = vsel %vm1257, 1, 0
      %vm1290 = vcmp.eq.s32.totalorder %v1258, 1
      %vm1291 = vcmp.eq.s32.totalorder %v1259, 1
      %vm1292 = vcmp.eq.s32.totalorder %v1260, 1
      %vm1293 = vcmp.eq.s32.totalorder %v1261, 1
      %vm1294 = vcmp.eq.s32.totalorder %v1262, 1
      %vm1295 = vcmp.eq.s32.totalorder %v1263, 1
      %vm1296 = vcmp.eq.s32.totalorder %v1264, 1
      %vm1297 = vcmp.eq.s32.totalorder %v1265, 1
      %vm1298 = vcmp.eq.s32.totalorder %v1266, 1
      %vm1299 = vcmp.eq.s32.totalorder %v1267, 1
      %vm1300 = vcmp.eq.s32.totalorder %v1268, 1
      %vm1301 = vcmp.eq.s32.totalorder %v1269, 1
      %vm1302 = vcmp.eq.s32.totalorder %v1270, 1
      %vm1303 = vcmp.eq.s32.totalorder %v1271, 1
      %vm1304 = vcmp.eq.s32.totalorder %v1272, 1
      %vm1305 = vcmp.eq.s32.totalorder %v1273, 1
      %vm1306 = vcmp.eq.s32.totalorder %v1274, 1
      %vm1307 = vcmp.eq.s32.totalorder %v1275, 1
      %vm1308 = vcmp.eq.s32.totalorder %v1276, 1
      %vm1309 = vcmp.eq.s32.totalorder %v1277, 1
      %vm1310 = vcmp.eq.s32.totalorder %v1278, 1
      %vm1311 = vcmp.eq.s32.totalorder %v1279, 1
      %vm1312 = vcmp.eq.s32.totalorder %v1280, 1
      %vm1313 = vcmp.eq.s32.totalorder %v1281, 1
      %vm1314 = vcmp.eq.s32.totalorder %v1282, 1
      %vm1315 = vcmp.eq.s32.totalorder %v1283, 1
      %vm1316 = vcmp.eq.s32.totalorder %v1284, 1
      %vm1317 = vcmp.eq.s32.totalorder %v1285, 1
      %vm1318 = vcmp.eq.s32.totalorder %v1286, 1
      %vm1319 = vcmp.eq.s32.totalorder %v1287, 1
      %vm1320 = vcmp.eq.s32.totalorder %v1288, 1
      %vm1321 = vcmp.eq.s32.totalorder %v1289, 1
      %v1322 = vsel %vm1290, %v776, 0.0
      %v1323 = vsel %vm1291, %v777, 0.0
      %v1324 = vsel %vm1292, %v778, 0.0
      %v1325 = vsel %vm1293, %v779, 0.0
      %v1326 = vsel %vm1294, %v780, 0.0
      %v1327 = vsel %vm1295, %v781, 0.0
      %v1328 = vsel %vm1296, %v782, 0.0
      %v1329 = vsel %vm1297, %v783, 0.0
      %v1330 = vsel %vm1298, %v784, 0.0
      %v1331 = vsel %vm1299, %v785, 0.0
      %v1332 = vsel %vm1300, %v786, 0.0
      %v1333 = vsel %vm1301, %v787, 0.0
      %v1334 = vsel %vm1302, %v788, 0.0
      %v1335 = vsel %vm1303, %v789, 0.0
      %v1336 = vsel %vm1304, %v790, 0.0
      %v1337 = vsel %vm1305, %v791, 0.0
      %v1338 = vsel %vm1306, %v792, 0.0
      %v1339 = vsel %vm1307, %v793, 0.0
      %v1340 = vsel %vm1308, %v794, 0.0
      %v1341 = vsel %vm1309, %v795, 0.0
      %v1342 = vsel %vm1310, %v796, 0.0
      %v1343 = vsel %vm1311, %v797, 0.0
      %v1344 = vsel %vm1312, %v798, 0.0
      %v1345 = vsel %vm1313, %v799, 0.0
      %v1346 = vsel %vm1314, %v800, 0.0
      %v1347 = vsel %vm1315, %v801, 0.0
      %v1348 = vsel %vm1316, %v802, 0.0
      %v1349 = vsel %vm1317, %v803, 0.0
      %v1350 = vsel %vm1318, %v804, 0.0
      %v1351 = vsel %vm1319, %v805, 0.0
      %v1352 = vsel %vm1320, %v806, 0.0
      %v1353 = vsel %vm1321, %v807, 0.0
      %vm1354 = vcmp.ne.s32.totalorder %v1194, 0
      %vm1355 = vcmp.ne.s32.totalorder %v1195, 0
      %vm1356 = vcmp.ne.s32.totalorder %v1196, 0
      %vm1357 = vcmp.ne.s32.totalorder %v1197, 0
      %vm1358 = vcmp.ne.s32.totalorder %v1198, 0
      %vm1359 = vcmp.ne.s32.totalorder %v1199, 0
      %vm1360 = vcmp.ne.s32.totalorder %v1200, 0
      %vm1361 = vcmp.ne.s32.totalorder %v1201, 0
      %vm1362 = vcmp.ne.s32.totalorder %v1202, 0
      %vm1363 = vcmp.ne.s32.totalorder %v1203, 0
      %vm1364 = vcmp.ne.s32.totalorder %v1204, 0
      %vm1365 = vcmp.ne.s32.totalorder %v1205, 0
      %vm1366 = vcmp.ne.s32.totalorder %v1206, 0
      %vm1367 = vcmp.ne.s32.totalorder %v1207, 0
      %vm1368 = vcmp.ne.s32.totalorder %v1208, 0
      %vm1369 = vcmp.ne.s32.totalorder %v1209, 0
      %vm1370 = vcmp.ne.s32.totalorder %v1210, 0
      %vm1371 = vcmp.ne.s32.totalorder %v1211, 0
      %vm1372 = vcmp.ne.s32.totalorder %v1212, 0
      %vm1373 = vcmp.ne.s32.totalorder %v1213, 0
      %vm1374 = vcmp.ne.s32.totalorder %v1214, 0
      %vm1375 = vcmp.ne.s32.totalorder %v1215, 0
      %vm1376 = vcmp.ne.s32.totalorder %v1216, 0
      %vm1377 = vcmp.ne.s32.totalorder %v1217, 0
      %vm1378 = vcmp.ne.s32.totalorder %v1218, 0
      %vm1379 = vcmp.ne.s32.totalorder %v1219, 0
      %vm1380 = vcmp.ne.s32.totalorder %v1220, 0
      %vm1381 = vcmp.ne.s32.totalorder %v1221, 0
      %vm1382 = vcmp.ne.s32.totalorder %v1222, 0
      %vm1383 = vcmp.ne.s32.totalorder %v1223, 0
      %vm1384 = vcmp.ne.s32.totalorder %v1224, 0
      %vm1385 = vcmp.ne.s32.totalorder %v1225, 0
      %v1386 = vsel %vm1354, 1, 0
      %v1387 = vsel %vm1355, 1, 0
      %v1388 = vsel %vm1356, 1, 0
      %v1389 = vsel %vm1357, 1, 0
      %v1390 = vsel %vm1358, 1, 0
      %v1391 = vsel %vm1359, 1, 0
      %v1392 = vsel %vm1360, 1, 0
      %v1393 = vsel %vm1361, 1, 0
      %v1394 = vsel %vm1362, 1, 0
      %v1395 = vsel %vm1363, 1, 0
      %v1396 = vsel %vm1364, 1, 0
      %v1397 = vsel %vm1365, 1, 0
      %v1398 = vsel %vm1366, 1, 0
      %v1399 = vsel %vm1367, 1, 0
      %v1400 = vsel %vm1368, 1, 0
      %v1401 = vsel %vm1369, 1, 0
      %v1402 = vsel %vm1370, 1, 0
      %v1403 = vsel %vm1371, 1, 0
      %v1404 = vsel %vm1372, 1, 0
      %v1405 = vsel %vm1373, 1, 0
      %v1406 = vsel %vm1374, 1, 0
      %v1407 = vsel %vm1375, 1, 0
      %v1408 = vsel %vm1376, 1, 0
      %v1409 = vsel %vm1377, 1, 0
      %v1410 = vsel %vm1378, 1, 0
      %v1411 = vsel %vm1379, 1, 0
      %v1412 = vsel %vm1380, 1, 0
      %v1413 = vsel %vm1381, 1, 0
      %v1414 = vsel %vm1382, 1, 0
      %v1415 = vsel %vm1383, 1, 0
      %v1416 = vsel %vm1384, 1, 0
      %v1417 = vsel %vm1385, 1, 0
      %vm1418 = vcmp.eq.s32.totalorder %v1386, 1
      %vm1419 = vcmp.eq.s32.totalorder %v1387, 1
      %vm1420 = vcmp.eq.s32.totalorder %v1388, 1
      %vm1421 = vcmp.eq.s32.totalorder %v1389, 1
      %vm1422 = vcmp.eq.s32.totalorder %v1390, 1
      %vm1423 = vcmp.eq.s32.totalorder %v1391, 1
      %vm1424 = vcmp.eq.s32.totalorder %v1392, 1
      %vm1425 = vcmp.eq.s32.totalorder %v1393, 1
      %vm1426 = vcmp.eq.s32.totalorder %v1394, 1
      %vm1427 = vcmp.eq.s32.totalorder %v1395, 1
      %vm1428 = vcmp.eq.s32.totalorder %v1396, 1
      %vm1429 = vcmp.eq.s32.totalorder %v1397, 1
      %vm1430 = vcmp.eq.s32.totalorder %v1398, 1
      %vm1431 = vcmp.eq.s32.totalorder %v1399, 1
      %vm1432 = vcmp.eq.s32.totalorder %v1400, 1
      %vm1433 = vcmp.eq.s32.totalorder %v1401, 1
      %vm1434 = vcmp.eq.s32.totalorder %v1402, 1
      %vm1435 = vcmp.eq.s32.totalorder %v1403, 1
      %vm1436 = vcmp.eq.s32.totalorder %v1404, 1
      %vm1437 = vcmp.eq.s32.totalorder %v1405, 1
      %vm1438 = vcmp.eq.s32.totalorder %v1406, 1
      %vm1439 = vcmp.eq.s32.totalorder %v1407, 1
      %vm1440 = vcmp.eq.s32.totalorder %v1408, 1
      %vm1441 = vcmp.eq.s32.totalorder %v1409, 1
      %vm1442 = vcmp.eq.s32.totalorder %v1410, 1
      %vm1443 = vcmp.eq.s32.totalorder %v1411, 1
      %vm1444 = vcmp.eq.s32.totalorder %v1412, 1
      %vm1445 = vcmp.eq.s32.totalorder %v1413, 1
      %vm1446 = vcmp.eq.s32.totalorder %v1414, 1
      %vm1447 = vcmp.eq.s32.totalorder %v1415, 1
      %vm1448 = vcmp.eq.s32.totalorder %v1416, 1
      %vm1449 = vcmp.eq.s32.totalorder %v1417, 1
      %v1450 = vsel %vm1418, %v776, 0.0
      %v1451 = vsel %vm1419, %v777, 0.0
      %v1452 = vsel %vm1420, %v778, 0.0
      %v1453 = vsel %vm1421, %v779, 0.0
      %v1454 = vsel %vm1422, %v780, 0.0
      %v1455 = vsel %vm1423, %v781, 0.0
      %v1456 = vsel %vm1424, %v782, 0.0
      %v1457 = vsel %vm1425, %v783, 0.0
      %v1458 = vsel %vm1426, %v784, 0.0
      %v1459 = vsel %vm1427, %v785, 0.0
      %v1460 = vsel %vm1428, %v786, 0.0
      %v1461 = vsel %vm1429, %v787, 0.0
      %v1462 = vsel %vm1430, %v788, 0.0
      %v1463 = vsel %vm1431, %v789, 0.0
      %v1464 = vsel %vm1432, %v790, 0.0
      %v1465 = vsel %vm1433, %v791, 0.0
      %v1466 = vsel %vm1434, %v792, 0.0
      %v1467 = vsel %vm1435, %v793, 0.0
      %v1468 = vsel %vm1436, %v794, 0.0
      %v1469 = vsel %vm1437, %v795, 0.0
      %v1470 = vsel %vm1438, %v796, 0.0
      %v1471 = vsel %vm1439, %v797, 0.0
      %v1472 = vsel %vm1440, %v798, 0.0
      %v1473 = vsel %vm1441, %v799, 0.0
      %v1474 = vsel %vm1442, %v800, 0.0
      %v1475 = vsel %vm1443, %v801, 0.0
      %v1476 = vsel %vm1444, %v802, 0.0
      %v1477 = vsel %vm1445, %v803, 0.0
      %v1478 = vsel %vm1446, %v804, 0.0
      %v1479 = vsel %vm1447, %v805, 0.0
      %v1480 = vsel %vm1448, %v806, 0.0
      %v1481 = vsel %vm1449, %v807, 0.0
      %v1482 = vrot.slane %v1322, 7
      %v1483 = vrot.slane %v1323, 7
      %v1484 = vrot.slane %v1324, 7
      %v1485 = vrot.slane %v1325, 7
      %v1486 = vrot.slane %v1326, 7
      %v1487 = vrot.slane %v1327, 7
      %v1488 = vrot.slane %v1328, 7
      %v1489 = vrot.slane %v1329, 7
      %v1490 = vrot.slane %v1330, 7
      %v1491 = vrot.slane %v1331, 7
      %v1492 = vrot.slane %v1332, 7
      %v1493 = vrot.slane %v1333, 7
      %v1494 = vrot.slane %v1334, 7
      %v1495 = vrot.slane %v1335, 7
      %v1496 = vrot.slane %v1336, 7
      %v1497 = vrot.slane %v1337, 7
      %v1498 = vrot.slane %v1338, 7
      %v1499 = vrot.slane %v1339, 7
      %v1500 = vrot.slane %v1340, 7
      %v1501 = vrot.slane %v1341, 7
      %v1502 = vrot.slane %v1342, 7
      %v1503 = vrot.slane %v1343, 7
      %v1504 = vrot.slane %v1344, 7
      %v1505 = vrot.slane %v1345, 7
      %v1506 = vrot.slane %v1346, 7
      %v1507 = vrot.slane %v1347, 7
      %v1508 = vrot.slane %v1348, 7
      %v1509 = vrot.slane %v1349, 7
      %v1510 = vrot.slane %v1350, 7
      %v1511 = vrot.slane %v1351, 7
      %v1512 = vrot.slane %v1352, 7
      %v1513 = vrot.slane %v1353, 7
      %vm1514 = vcmp.lt.s32.totalorder %v809, 1
      %v1515 = vsel %vm1514, %v1513, 0.0
      %v1516 = vsel %vm1514, %v1512, %v1513
      %v1517 = vsel %vm1514, %v1511, %v1512
      %v1518 = vsel %vm1514, %v1510, %v1511
      %v1519 = vsel %vm1514, %v1509, %v1510
      %v1520 = vsel %vm1514, %v1508, %v1509
      %v1521 = vsel %vm1514, %v1507, %v1508
      %v1522 = vsel %vm1514, %v1506, %v1507
      %v1523 = vsel %vm1514, %v1505, %v1506
      %v1524 = vsel %vm1514, %v1504, %v1505
      %v1525 = vsel %vm1514, %v1503, %v1504
      %v1526 = vsel %vm1514, %v1502, %v1503
      %v1527 = vsel %vm1514, %v1501, %v1502
      %v1528 = vsel %vm1514, %v1500, %v1501
      %v1529 = vsel %vm1514, %v1499, %v1500
      %v1530 = vsel %vm1514, %v1498, %v1499
      %v1531 = vsel %vm1514, %v1497, %v1498
      %v1532 = vsel %vm1514, %v1496, %v1497
      %v1533 = vsel %vm1514, %v1495, %v1496
      %v1534 = vsel %vm1514, %v1494, %v1495
      %v1535 = vsel %vm1514, %v1493, %v1494
      %v1536 = vsel %vm1514, %v1492, %v1493
      %v1537 = vsel %vm1514, %v1491, %v1492
      %v1538 = vsel %vm1514, %v1490, %v1491
      %v1539 = vsel %vm1514, %v1489, %v1490
      %v1540 = vsel %vm1514, %v1488, %v1489
      %v1541 = vsel %vm1514, %v1487, %v1488
      %v1542 = vsel %vm1514, %v1486, %v1487
      %v1543 = vsel %vm1514, %v1485, %v1486
      %v1544 = vsel %vm1514, %v1484, %v1485
      %v1545 = vsel %vm1514, %v1483, %v1484
      %v1546 = vsel %vm1514, %v1482, %v1483
      %v1547 = vsel %vm1514, 0.0, %v1482
      %v1548 = vrot.slane %v1450, 1
      %v1549 = vrot.slane %v1451, 1
      %v1550 = vrot.slane %v1452, 1
      %v1551 = vrot.slane %v1453, 1
      %v1552 = vrot.slane %v1454, 1
      %v1553 = vrot.slane %v1455, 1
      %v1554 = vrot.slane %v1456, 1
      %v1555 = vrot.slane %v1457, 1
      %v1556 = vrot.slane %v1458, 1
      %v1557 = vrot.slane %v1459, 1
      %v1558 = vrot.slane %v1460, 1
      %v1559 = vrot.slane %v1461, 1
      %v1560 = vrot.slane %v1462, 1
      %v1561 = vrot.slane %v1463, 1
      %v1562 = vrot.slane %v1464, 1
      %v1563 = vrot.slane %v1465, 1
      %v1564 = vrot.slane %v1466, 1
      %v1565 = vrot.slane %v1467, 1
      %v1566 = vrot.slane %v1468, 1
      %v1567 = vrot.slane %v1469, 1
      %v1568 = vrot.slane %v1470, 1
      %v1569 = vrot.slane %v1471, 1
      %v1570 = vrot.slane %v1472, 1
      %v1571 = vrot.slane %v1473, 1
      %v1572 = vrot.slane %v1474, 1
      %v1573 = vrot.slane %v1475, 1
      %v1574 = vrot.slane %v1476, 1
      %v1575 = vrot.slane %v1477, 1
      %v1576 = vrot.slane %v1478, 1
      %v1577 = vrot.slane %v1479, 1
      %v1578 = vrot.slane %v1480, 1
      %v1579 = vrot.slane %v1481, 1
      %vm1580 = vcmp.lt.s32.totalorder %v809, 7
      %v1581 = vsel %vm1580, %v1579, 0.0
      %v1582 = vsel %vm1580, %v1578, %v1579
      %v1583 = vsel %vm1580, %v1577, %v1578
      %v1584 = vsel %vm1580, %v1576, %v1577
      %v1585 = vsel %vm1580, %v1575, %v1576
      %v1586 = vsel %vm1580, %v1574, %v1575
      %v1587 = vsel %vm1580, %v1573, %v1574
      %v1588 = vsel %vm1580, %v1572, %v1573
      %v1589 = vsel %vm1580, %v1571, %v1572
      %v1590 = vsel %vm1580, %v1570, %v1571
      %v1591 = vsel %vm1580, %v1569, %v1570
      %v1592 = vsel %vm1580, %v1568, %v1569
      %v1593 = vsel %vm1580, %v1567, %v1568
      %v1594 = vsel %vm1580, %v1566, %v1567
      %v1595 = vsel %vm1580, %v1565, %v1566
      %v1596 = vsel %vm1580, %v1564, %v1565
      %v1597 = vsel %vm1580, %v1563, %v1564
      %v1598 = vsel %vm1580, %v1562, %v1563
      %v1599 = vsel %vm1580, %v1561, %v1562
      %v1600 = vsel %vm1580, %v1560, %v1561
      %v1601 = vsel %vm1580, %v1559, %v1560
      %v1602 = vsel %vm1580, %v1558, %v1559
      %v1603 = vsel %vm1580, %v1557, %v1558
      %v1604 = vsel %vm1580, %v1556, %v1557
      %v1605 = vsel %vm1580, %v1555, %v1556
      %v1606 = vsel %vm1580, %v1554, %v1555
      %v1607 = vsel %vm1580, %v1553, %v1554
      %v1608 = vsel %vm1580, %v1552, %v1553
      %v1609 = vsel %vm1580, %v1551, %v1552
      %v1610 = vsel %vm1580, %v1550, %v1551
      %v1611 = vsel %vm1580, %v1549, %v1550
      %v1612 = vsel %vm1580, %v1548, %v1549
      %v1613 = vsel %vm1580, 0.0, %v1548
      %1647 = vrot.lane.b32.xlu0 0.0, 32
      %v1648 = vpop.permute.xlu0 %1647
      %1649 = vrot.lane.b32.xlu0 %v776, 32
      %v1650 = vpop.permute.xlu0 %1649
      %1651 = vrot.lane.b32.xlu0 %v777, 32
      %v1652 = vpop.permute.xlu0 %1651
      %1653 = vrot.lane.b32.xlu0 %v778, 32
      %v1654 = vpop.permute.xlu0 %1653
      %1655 = vrot.lane.b32.xlu0 %v779, 32
      %v1656 = vpop.permute.xlu0 %1655
      %1657 = vrot.lane.b32.xlu0 %v780, 32
      %v1658 = vpop.permute.xlu0 %1657
      %1659 = vrot.lane.b32.xlu0 %v781, 32
      %v1660 = vpop.permute.xlu0 %1659
      %1661 = vrot.lane.b32.xlu0 %v782, 32
      %v1662 = vpop.permute.xlu0 %1661
      %1663 = vrot.lane.b32.xlu0 %v783, 32
      %v1664 = vpop.permute.xlu0 %1663
      %1665 = vrot.lane.b32.xlu0 %v784, 32
      %v1666 = vpop.permute.xlu0 %1665
      %1667 = vrot.lane.b32.xlu0 %v785, 32
      %v1668 = vpop.permute.xlu0 %1667
      %1669 = vrot.lane.b32.xlu0 %v786, 32
      %v1670 = vpop.permute.xlu0 %1669
      %1671 = vrot.lane.b32.xlu0 %v787, 32
      %v1672 = vpop.permute.xlu0 %1671
      %1673 = vrot.lane.b32.xlu0 %v788, 32
      %v1674 = vpop.permute.xlu0 %1673
      %1675 = vrot.lane.b32.xlu0 %v789, 32
      %v1676 = vpop.permute.xlu0 %1675
      %1677 = vrot.lane.b32.xlu0 %v790, 32
      %v1678 = vpop.permute.xlu0 %1677
      %1679 = vrot.lane.b32.xlu0 %v791, 32
      %v1680 = vpop.permute.xlu0 %1679
      %1681 = vrot.lane.b32.xlu0 %v792, 32
      %v1682 = vpop.permute.xlu0 %1681
      %1683 = vrot.lane.b32.xlu0 %v793, 32
      %v1684 = vpop.permute.xlu0 %1683
      %1685 = vrot.lane.b32.xlu0 %v794, 32
      %v1686 = vpop.permute.xlu0 %1685
      %1687 = vrot.lane.b32.xlu0 %v795, 32
      %v1688 = vpop.permute.xlu0 %1687
      %1689 = vrot.lane.b32.xlu0 %v796, 32
      %v1690 = vpop.permute.xlu0 %1689
      %1691 = vrot.lane.b32.xlu0 %v797, 32
      %v1692 = vpop.permute.xlu0 %1691
      %1693 = vrot.lane.b32.xlu0 %v798, 32
      %v1694 = vpop.permute.xlu0 %1693
      %1695 = vrot.lane.b32.xlu0 %v799, 32
      %v1696 = vpop.permute.xlu0 %1695
      %1697 = vrot.lane.b32.xlu0 %v800, 32
      %v1698 = vpop.permute.xlu0 %1697
      %1699 = vrot.lane.b32.xlu0 %v801, 32
      %v1700 = vpop.permute.xlu0 %1699
      %1701 = vrot.lane.b32.xlu0 %v802, 32
      %v1702 = vpop.permute.xlu0 %1701
      %1703 = vrot.lane.b32.xlu0 %v803, 32
      %v1704 = vpop.permute.xlu0 %1703
      %1705 = vrot.lane.b32.xlu0 %v804, 32
      %v1706 = vpop.permute.xlu0 %1705
      %1707 = vrot.lane.b32.xlu0 %v805, 32
      %v1708 = vpop.permute.xlu0 %1707
      %1709 = vrot.lane.b32.xlu0 %v806, 32
      %v1710 = vpop.permute.xlu0 %1709
      %1711 = vrot.lane.b32.xlu0 %v807, 32
      %v1712 = vpop.permute.xlu0 %1711
      %1780 = vrot.lane.b32.xlu0 0.0, 64
      %v1781 = vpop.permute.xlu0 %1780
      %1782 = vrot.lane.b32.xlu0 %v1613, 64
      %v1783 = vpop.permute.xlu0 %1782
      %1784 = vrot.lane.b32.xlu0 %v1612, 64
      %v1785 = vpop.permute.xlu0 %1784
      %1786 = vrot.lane.b32.xlu0 %v1611, 64
      %v1787 = vpop.permute.xlu0 %1786
      %1788 = vrot.lane.b32.xlu0 %v1610, 64
      %v1789 = vpop.permute.xlu0 %1788
      %1790 = vrot.lane.b32.xlu0 %v1609, 64
      %v1791 = vpop.permute.xlu0 %1790
      %1792 = vrot.lane.b32.xlu0 %v1608, 64
      %v1793 = vpop.permute.xlu0 %1792
      %1794 = vrot.lane.b32.xlu0 %v1607, 64
      %v1795 = vpop.permute.xlu0 %1794
      %1796 = vrot.lane.b32.xlu0 %v1606, 64
      %v1797 = vpop.permute.xlu0 %1796
      %1798 = vrot.lane.b32.xlu0 %v1605, 64
      %v1799 = vpop.permute.xlu0 %1798
      %1800 = vrot.lane.b32.xlu0 %v1604, 64
      %v1801 = vpop.permute.xlu0 %1800
      %1802 = vrot.lane.b32.xlu0 %v1603, 64
      %v1803 = vpop.permute.xlu0 %1802
      %1804 = vrot.lane.b32.xlu0 %v1602, 64
      %v1805 = vpop.permute.xlu0 %1804
      %1806 = vrot.lane.b32.xlu0 %v1601, 64
      %v1807 = vpop.permute.xlu0 %1806
      %1808 = vrot.lane.b32.xlu0 %v1600, 64
      %v1809 = vpop.permute.xlu0 %1808
      %1810 = vrot.lane.b32.xlu0 %v1599, 64
      %v1811 = vpop.permute.xlu0 %1810
      %1812 = vrot.lane.b32.xlu0 %v1598, 64
      %v1813 = vpop.permute.xlu0 %1812
      %1814 = vrot.lane.b32.xlu0 %v1597, 64
      %v1815 = vpop.permute.xlu0 %1814
      %1816 = vrot.lane.b32.xlu0 %v1596, 64
      %v1817 = vpop.permute.xlu0 %1816
      %1818 = vrot.lane.b32.xlu0 %v1595, 64
      %v1819 = vpop.permute.xlu0 %1818
      %1820 = vrot.lane.b32.xlu0 %v1594, 64
      %v1821 = vpop.permute.xlu0 %1820
      %1822 = vrot.lane.b32.xlu0 %v1593, 64
      %v1823 = vpop.permute.xlu0 %1822
      %1824 = vrot.lane.b32.xlu0 %v1592, 64
      %v1825 = vpop.permute.xlu0 %1824
      %1826 = vrot.lane.b32.xlu0 %v1591, 64
      %v1827 = vpop.permute.xlu0 %1826
      %1828 = vrot.lane.b32.xlu0 %v1590, 64
      %v1829 = vpop.permute.xlu0 %1828
      %1830 = vrot.lane.b32.xlu0 %v1589, 64
      %v1831 = vpop.permute.xlu0 %1830
      %1832 = vrot.lane.b32.xlu0 %v1588, 64
      %v1833 = vpop.permute.xlu0 %1832
      %1834 = vrot.lane.b32.xlu0 %v1587, 64
      %v1835 = vpop.permute.xlu0 %1834
      %1836 = vrot.lane.b32.xlu0 %v1586, 64
      %v1837 = vpop.permute.xlu0 %1836
      %1838 = vrot.lane.b32.xlu0 %v1585, 64
      %v1839 = vpop.permute.xlu0 %1838
      %1840 = vrot.lane.b32.xlu0 %v1584, 64
      %v1841 = vpop.permute.xlu0 %1840
      %1842 = vrot.lane.b32.xlu0 %v1583, 64
      %v1843 = vpop.permute.xlu0 %1842
      %1844 = vrot.lane.b32.xlu0 %v1582, 64
      %v1845 = vpop.permute.xlu0 %1844
      %1846 = vrot.lane.b32.xlu0 %v1581, 64
      %v1847 = vpop.permute.xlu0 %1846
      %1916 = vrot.lane.b32.xlu0 0.0, 96
      %v1917 = vpop.permute.xlu0 %1916
      %1918 = vrot.lane.b32.xlu0 %v1547, 96
      %v1919 = vpop.permute.xlu0 %1918
      %1920 = vrot.lane.b32.xlu0 %v1546, 96
      %v1921 = vpop.permute.xlu0 %1920
      %1922 = vrot.lane.b32.xlu0 %v1545, 96
      %v1923 = vpop.permute.xlu0 %1922
      %1924 = vrot.lane.b32.xlu0 %v1544, 96
      %v1925 = vpop.permute.xlu0 %1924
      %1926 = vrot.lane.b32.xlu0 %v1543, 96
      %v1927 = vpop.permute.xlu0 %1926
      %1928 = vrot.lane.b32.xlu0 %v1542, 96
      %v1929 = vpop.permute.xlu0 %1928
      %1930 = vrot.lane.b32.xlu0 %v1541, 96
      %v1931 = vpop.permute.xlu0 %1930
      %1932 = vrot.lane.b32.xlu0 %v1540, 96
      %v1933 = vpop.permute.xlu0 %1932
      %1934 = vrot.lane.b32.xlu0 %v1539, 96
      %v1935 = vpop.permute.xlu0 %1934
      %1936 = vrot.lane.b32.xlu0 %v1538, 96
      %v1937 = vpop.permute.xlu0 %1936
      %1938 = vrot.lane.b32.xlu0 %v1537, 96
      %v1939 = vpop.permute.xlu0 %1938
      %1940 = vrot.lane.b32.xlu0 %v1536, 96
      %v1941 = vpop.permute.xlu0 %1940
      %1942 = vrot.lane.b32.xlu0 %v1535, 96
      %v1943 = vpop.permute.xlu0 %1942
      %1944 = vrot.lane.b32.xlu0 %v1534, 96
      %v1945 = vpop.permute.xlu0 %1944
      %1946 = vrot.lane.b32.xlu0 %v1533, 96
      %v1947 = vpop.permute.xlu0 %1946
      %1948 = vrot.lane.b32.xlu0 %v1532, 96
      %v1949 = vpop.permute.xlu0 %1948
      %1950 = vrot.lane.b32.xlu0 %v1531, 96
      %v1951 = vpop.permute.xlu0 %1950
      %1952 = vrot.lane.b32.xlu0 %v1530, 96
      %v1953 = vpop.permute.xlu0 %1952
      %1954 = vrot.lane.b32.xlu0 %v1529, 96
      %v1955 = vpop.permute.xlu0 %1954
      %1956 = vrot.lane.b32.xlu0 %v1528, 96
      %v1957 = vpop.permute.xlu0 %1956
      %1958 = vrot.lane.b32.xlu0 %v1527, 96
      %v1959 = vpop.permute.xlu0 %1958
      %1960 = vrot.lane.b32.xlu0 %v1526, 96
      %v1961 = vpop.permute.xlu0 %1960
      %1962 = vrot.lane.b32.xlu0 %v1525, 96
      %v1963 = vpop.permute.xlu0 %1962
      %1964 = vrot.lane.b32.xlu0 %v1524, 96
      %v1965 = vpop.permute.xlu0 %1964
      %1966 = vrot.lane.b32.xlu0 %v1523, 96
      %v1967 = vpop.permute.xlu0 %1966
      %1968 = vrot.lane.b32.xlu0 %v1522, 96
      %v1969 = vpop.permute.xlu0 %1968
      %1970 = vrot.lane.b32.xlu0 %v1521, 96
      %v1971 = vpop.permute.xlu0 %1970
      %1972 = vrot.lane.b32.xlu0 %v1520, 96
      %v1973 = vpop.permute.xlu0 %1972
      %1974 = vrot.lane.b32.xlu0 %v1519, 96
      %v1975 = vpop.permute.xlu0 %1974
      %1976 = vrot.lane.b32.xlu0 %v1518, 96
      %v1977 = vpop.permute.xlu0 %1976
      %1978 = vrot.lane.b32.xlu0 %v1517, 96
      %v1979 = vpop.permute.xlu0 %1978
      %1980 = vrot.lane.b32.xlu0 %v1516, 96
      %v1981 = vpop.permute.xlu0 %1980
      %1982 = vrot.lane.b32.xlu0 %v1515, 96
      %v1983 = vpop.permute.xlu0 %1982
      %2018 = vrot.lane.b32.xlu0 0.0, 32
      %v2019 = vpop.permute.xlu0 %2018
      %2020 = vrot.lane.b32.xlu0 %v1613, 32
      %v2021 = vpop.permute.xlu0 %2020
      %2022 = vrot.lane.b32.xlu0 %v1612, 32
      %v2023 = vpop.permute.xlu0 %2022
      %2024 = vrot.lane.b32.xlu0 %v1611, 32
      %v2025 = vpop.permute.xlu0 %2024
      %2026 = vrot.lane.b32.xlu0 %v1610, 32
      %v2027 = vpop.permute.xlu0 %2026
      %2028 = vrot.lane.b32.xlu0 %v1609, 32
      %v2029 = vpop.permute.xlu0 %2028
      %2030 = vrot.lane.b32.xlu0 %v1608, 32
      %v2031 = vpop.permute.xlu0 %2030
      %2032 = vrot.lane.b32.xlu0 %v1607, 32
      %v2033 = vpop.permute.xlu0 %2032
      %2034 = vrot.lane.b32.xlu0 %v1606, 32
      %v2035 = vpop.permute.xlu0 %2034
      %2036 = vrot.lane.b32.xlu0 %v1605, 32
      %v2037 = vpop.permute.xlu0 %2036
      %2038 = vrot.lane.b32.xlu0 %v1604, 32
      %v2039 = vpop.permute.xlu0 %2038
      %2040 = vrot.lane.b32.xlu0 %v1603, 32
      %v2041 = vpop.permute.xlu0 %2040
      %2042 = vrot.lane.b32.xlu0 %v1602, 32
      %v2043 = vpop.permute.xlu0 %2042
      %2044 = vrot.lane.b32.xlu0 %v1601, 32
      %v2045 = vpop.permute.xlu0 %2044
      %2046 = vrot.lane.b32.xlu0 %v1600, 32
      %v2047 = vpop.permute.xlu0 %2046
      %2048 = vrot.lane.b32.xlu0 %v1599, 32
      %v2049 = vpop.permute.xlu0 %2048
      %2050 = vrot.lane.b32.xlu0 %v1598, 32
      %v2051 = vpop.permute.xlu0 %2050
      %2052 = vrot.lane.b32.xlu0 %v1597, 32
      %v2053 = vpop.permute.xlu0 %2052
      %2054 = vrot.lane.b32.xlu0 %v1596, 32
      %v2055 = vpop.permute.xlu0 %2054
      %2056 = vrot.lane.b32.xlu0 %v1595, 32
      %v2057 = vpop.permute.xlu0 %2056
      %2058 = vrot.lane.b32.xlu0 %v1594, 32
      %v2059 = vpop.permute.xlu0 %2058
      %2060 = vrot.lane.b32.xlu0 %v1593, 32
      %v2061 = vpop.permute.xlu0 %2060
      %2062 = vrot.lane.b32.xlu0 %v1592, 32
      %v2063 = vpop.permute.xlu0 %2062
      %2064 = vrot.lane.b32.xlu0 %v1591, 32
      %v2065 = vpop.permute.xlu0 %2064
      %2066 = vrot.lane.b32.xlu0 %v1590, 32
      %v2067 = vpop.permute.xlu0 %2066
      %2068 = vrot.lane.b32.xlu0 %v1589, 32
      %v2069 = vpop.permute.xlu0 %2068
      %2070 = vrot.lane.b32.xlu0 %v1588, 32
      %v2071 = vpop.permute.xlu0 %2070
      %2072 = vrot.lane.b32.xlu0 %v1587, 32
      %v2073 = vpop.permute.xlu0 %2072
      %2074 = vrot.lane.b32.xlu0 %v1586, 32
      %v2075 = vpop.permute.xlu0 %2074
      %2076 = vrot.lane.b32.xlu0 %v1585, 32
      %v2077 = vpop.permute.xlu0 %2076
      %2078 = vrot.lane.b32.xlu0 %v1584, 32
      %v2079 = vpop.permute.xlu0 %2078
      %2080 = vrot.lane.b32.xlu0 %v1583, 32
      %v2081 = vpop.permute.xlu0 %2080
      %2082 = vrot.lane.b32.xlu0 %v1582, 32
      %v2083 = vpop.permute.xlu0 %2082
      %2084 = vrot.lane.b32.xlu0 %v1581, 32
      %v2085 = vpop.permute.xlu0 %2084
      %2120 = vrot.lane.b32.xlu0 %v1547, 64
      %v2121 = vpop.permute.xlu0 %2120
      %2122 = vrot.lane.b32.xlu0 %v1546, 64
      %v2123 = vpop.permute.xlu0 %2122
      %2124 = vrot.lane.b32.xlu0 %v1545, 64
      %v2125 = vpop.permute.xlu0 %2124
      %2126 = vrot.lane.b32.xlu0 %v1544, 64
      %v2127 = vpop.permute.xlu0 %2126
      %2128 = vrot.lane.b32.xlu0 %v1543, 64
      %v2129 = vpop.permute.xlu0 %2128
      %2130 = vrot.lane.b32.xlu0 %v1542, 64
      %v2131 = vpop.permute.xlu0 %2130
      %2132 = vrot.lane.b32.xlu0 %v1541, 64
      %v2133 = vpop.permute.xlu0 %2132
      %2134 = vrot.lane.b32.xlu0 %v1540, 64
      %v2135 = vpop.permute.xlu0 %2134
      %2136 = vrot.lane.b32.xlu0 %v1539, 64
      %v2137 = vpop.permute.xlu0 %2136
      %2138 = vrot.lane.b32.xlu0 %v1538, 64
      %v2139 = vpop.permute.xlu0 %2138
      %2140 = vrot.lane.b32.xlu0 %v1537, 64
      %v2141 = vpop.permute.xlu0 %2140
      %2142 = vrot.lane.b32.xlu0 %v1536, 64
      %v2143 = vpop.permute.xlu0 %2142
      %2144 = vrot.lane.b32.xlu0 %v1535, 64
      %v2145 = vpop.permute.xlu0 %2144
      %2146 = vrot.lane.b32.xlu0 %v1534, 64
      %v2147 = vpop.permute.xlu0 %2146
      %2148 = vrot.lane.b32.xlu0 %v1533, 64
      %v2149 = vpop.permute.xlu0 %2148
      %2150 = vrot.lane.b32.xlu0 %v1532, 64
      %v2151 = vpop.permute.xlu0 %2150
      %2152 = vrot.lane.b32.xlu0 %v1531, 64
      %v2153 = vpop.permute.xlu0 %2152
      %2154 = vrot.lane.b32.xlu0 %v1530, 64
      %v2155 = vpop.permute.xlu0 %2154
      %2156 = vrot.lane.b32.xlu0 %v1529, 64
      %v2157 = vpop.permute.xlu0 %2156
      %2158 = vrot.lane.b32.xlu0 %v1528, 64
      %v2159 = vpop.permute.xlu0 %2158
      %2160 = vrot.lane.b32.xlu0 %v1527, 64
      %v2161 = vpop.permute.xlu0 %2160
      %2162 = vrot.lane.b32.xlu0 %v1526, 64
      %v2163 = vpop.permute.xlu0 %2162
      %2164 = vrot.lane.b32.xlu0 %v1525, 64
      %v2165 = vpop.permute.xlu0 %2164
      %2166 = vrot.lane.b32.xlu0 %v1524, 64
      %v2167 = vpop.permute.xlu0 %2166
      %2168 = vrot.lane.b32.xlu0 %v1523, 64
      %v2169 = vpop.permute.xlu0 %2168
      %2170 = vrot.lane.b32.xlu0 %v1522, 64
      %v2171 = vpop.permute.xlu0 %2170
      %2172 = vrot.lane.b32.xlu0 %v1521, 64
      %v2173 = vpop.permute.xlu0 %2172
      %2174 = vrot.lane.b32.xlu0 %v1520, 64
      %v2175 = vpop.permute.xlu0 %2174
      %2176 = vrot.lane.b32.xlu0 %v1519, 64
      %v2177 = vpop.permute.xlu0 %2176
      %2178 = vrot.lane.b32.xlu0 %v1518, 64
      %v2179 = vpop.permute.xlu0 %2178
      %2180 = vrot.lane.b32.xlu0 %v1517, 64
      %v2181 = vpop.permute.xlu0 %2180
      %2182 = vrot.lane.b32.xlu0 %v1516, 64
      %v2183 = vpop.permute.xlu0 %2182
      %2184 = vrot.lane.b32.xlu0 %v1515, 64
      %v2185 = vpop.permute.xlu0 %2184
      %2186 = vrot.lane.b32.xlu0 0.0, 64
      %v2187 = vpop.permute.xlu0 %2186
      %2222 = vrot.lane.b32.xlu0 %v776, 96
      %v2223 = vpop.permute.xlu0 %2222
      %2224 = vrot.lane.b32.xlu0 %v777, 96
      %v2225 = vpop.permute.xlu0 %2224
      %2226 = vrot.lane.b32.xlu0 %v778, 96
      %v2227 = vpop.permute.xlu0 %2226
      %2228 = vrot.lane.b32.xlu0 %v779, 96
      %v2229 = vpop.permute.xlu0 %2228
      %2230 = vrot.lane.b32.xlu0 %v780, 96
      %v2231 = vpop.permute.xlu0 %2230
      %2232 = vrot.lane.b32.xlu0 %v781, 96
      %v2233 = vpop.permute.xlu0 %2232
      %2234 = vrot.lane.b32.xlu0 %v782, 96
      %v2235 = vpop.permute.xlu0 %2234
      %2236 = vrot.lane.b32.xlu0 %v783, 96
      %v2237 = vpop.permute.xlu0 %2236
      %2238 = vrot.lane.b32.xlu0 %v784, 96
      %v2239 = vpop.permute.xlu0 %2238
      %2240 = vrot.lane.b32.xlu0 %v785, 96
      %v2241 = vpop.permute.xlu0 %2240
      %2242 = vrot.lane.b32.xlu0 %v786, 96
      %v2243 = vpop.permute.xlu0 %2242
      %2244 = vrot.lane.b32.xlu0 %v787, 96
      %v2245 = vpop.permute.xlu0 %2244
      %2246 = vrot.lane.b32.xlu0 %v788, 96
      %v2247 = vpop.permute.xlu0 %2246
      %2248 = vrot.lane.b32.xlu0 %v789, 96
      %v2249 = vpop.permute.xlu0 %2248
      %2250 = vrot.lane.b32.xlu0 %v790, 96
      %v2251 = vpop.permute.xlu0 %2250
      %2252 = vrot.lane.b32.xlu0 %v791, 96
      %v2253 = vpop.permute.xlu0 %2252
      %2254 = vrot.lane.b32.xlu0 %v792, 96
      %v2255 = vpop.permute.xlu0 %2254
      %2256 = vrot.lane.b32.xlu0 %v793, 96
      %v2257 = vpop.permute.xlu0 %2256
      %2258 = vrot.lane.b32.xlu0 %v794, 96
      %v2259 = vpop.permute.xlu0 %2258
      %2260 = vrot.lane.b32.xlu0 %v795, 96
      %v2261 = vpop.permute.xlu0 %2260
      %2262 = vrot.lane.b32.xlu0 %v796, 96
      %v2263 = vpop.permute.xlu0 %2262
      %2264 = vrot.lane.b32.xlu0 %v797, 96
      %v2265 = vpop.permute.xlu0 %2264
      %2266 = vrot.lane.b32.xlu0 %v798, 96
      %v2267 = vpop.permute.xlu0 %2266
      %2268 = vrot.lane.b32.xlu0 %v799, 96
      %v2269 = vpop.permute.xlu0 %2268
      %2270 = vrot.lane.b32.xlu0 %v800, 96
      %v2271 = vpop.permute.xlu0 %2270
      %2272 = vrot.lane.b32.xlu0 %v801, 96
      %v2273 = vpop.permute.xlu0 %2272
      %2274 = vrot.lane.b32.xlu0 %v802, 96
      %v2275 = vpop.permute.xlu0 %2274
      %2276 = vrot.lane.b32.xlu0 %v803, 96
      %v2277 = vpop.permute.xlu0 %2276
      %2278 = vrot.lane.b32.xlu0 %v804, 96
      %v2279 = vpop.permute.xlu0 %2278
      %2280 = vrot.lane.b32.xlu0 %v805, 96
      %v2281 = vpop.permute.xlu0 %2280
      %2282 = vrot.lane.b32.xlu0 %v806, 96
      %v2283 = vpop.permute.xlu0 %2282
      %2284 = vrot.lane.b32.xlu0 %v807, 96
      %v2285 = vpop.permute.xlu0 %2284
      %2286 = vrot.lane.b32.xlu0 0.0, 96
      %v2287 = vpop.permute.xlu0 %2286
      %vm2321 = vcmask 261120
      %v2322 = vsel %vm2321, %v1515, %v1648
      %v2323 = vsel %vm2321, 0.0, %v1648
      %v2324 = vsel %vm2321, %v1547, %v1650
      %v2325 = vsel %vm2321, %v1546, %v1652
      %v2326 = vsel %vm2321, %v1545, %v1654
      %v2327 = vsel %vm2321, %v1544, %v1656
      %v2328 = vsel %vm2321, %v1543, %v1658
      %v2329 = vsel %vm2321, %v1542, %v1660
      %v2330 = vsel %vm2321, %v1541, %v1662
      %v2331 = vsel %vm2321, %v1540, %v1664
      %v2332 = vsel %vm2321, %v1539, %v1666
      %v2333 = vsel %vm2321, %v1538, %v1668
      %v2334 = vsel %vm2321, %v1537, %v1670
      %v2335 = vsel %vm2321, %v1536, %v1672
      %v2336 = vsel %vm2321, %v1535, %v1674
      %v2337 = vsel %vm2321, %v1534, %v1676
      %v2338 = vsel %vm2321, %v1533, %v1678
      %v2339 = vsel %vm2321, %v1532, %v1680
      %v2340 = vsel %vm2321, %v1531, %v1682
      %v2341 = vsel %vm2321, %v1530, %v1684
      %v2342 = vsel %vm2321, %v1529, %v1686
      %v2343 = vsel %vm2321, %v1528, %v1688
      %v2344 = vsel %vm2321, %v1527, %v1690
      %v2345 = vsel %vm2321, %v1526, %v1692
      %v2346 = vsel %vm2321, %v1525, %v1694
      %v2347 = vsel %vm2321, %v1524, %v1696
      %v2348 = vsel %vm2321, %v1523, %v1698
      %v2349 = vsel %vm2321, %v1522, %v1700
      %v2350 = vsel %vm2321, %v1521, %v1702
      %v2351 = vsel %vm2321, %v1520, %v1704
      %v2352 = vsel %vm2321, %v1519, %v1706
      %v2353 = vsel %vm2321, %v1518, %v1708
      %v2354 = vsel %vm2321, %v1517, %v1710
      %v2355 = vsel %vm2321, %v1516, %v1712
      %vm2356 = vcmask 523264
      %v2357 = vsel %vm2356, %v2322, %v1781
      %v2358 = vsel %vm2356, %v2323, %v1781
      %v2359 = vsel %vm2356, %v2323, %v1783
      %v2360 = vsel %vm2356, %v2324, %v1785
      %v2361 = vsel %vm2356, %v2325, %v1787
      %v2362 = vsel %vm2356, %v2326, %v1789
      %v2363 = vsel %vm2356, %v2327, %v1791
      %v2364 = vsel %vm2356, %v2328, %v1793
      %v2365 = vsel %vm2356, %v2329, %v1795
      %v2366 = vsel %vm2356, %v2330, %v1797
      %v2367 = vsel %vm2356, %v2331, %v1799
      %v2368 = vsel %vm2356, %v2332, %v1801
      %v2369 = vsel %vm2356, %v2333, %v1803
      %v2370 = vsel %vm2356, %v2334, %v1805
      %v2371 = vsel %vm2356, %v2335, %v1807
      %v2372 = vsel %vm2356, %v2336, %v1809
      %v2373 = vsel %vm2356, %v2337, %v1811
      %v2374 = vsel %vm2356, %v2338, %v1813
      %v2375 = vsel %vm2356, %v2339, %v1815
      %v2376 = vsel %vm2356, %v2340, %v1817
      %v2377 = vsel %vm2356, %v2341, %v1819
      %v2378 = vsel %vm2356, %v2342, %v1821
      %v2379 = vsel %vm2356, %v2343, %v1823
      %v2380 = vsel %vm2356, %v2344, %v1825
      %v2381 = vsel %vm2356, %v2345, %v1827
      %v2382 = vsel %vm2356, %v2346, %v1829
      %v2383 = vsel %vm2356, %v2347, %v1831
      %v2384 = vsel %vm2356, %v2348, %v1833
      %v2385 = vsel %vm2356, %v2349, %v1835
      %v2386 = vsel %vm2356, %v2350, %v1837
      %v2387 = vsel %vm2356, %v2351, %v1839
      %v2388 = vsel %vm2356, %v2352, %v1841
      %v2389 = vsel %vm2356, %v2353, %v1843
      %v2390 = vsel %vm2356, %v2354, %v1845
      %v2391 = vsel %vm2356, %v2355, %v1847
      %vm2392 = vcmask 785408
      %v2393 = vsel %vm2392, %v2357, %v1917
      %v2394 = vsel %vm2392, %v2358, %v1917
      %v2395 = vsel %vm2392, %v2358, %v1919
      %v2396 = vsel %vm2392, %v2359, %v1921
      %v2397 = vsel %vm2392, %v2360, %v1923
      %v2398 = vsel %vm2392, %v2361, %v1925
      %v2399 = vsel %vm2392, %v2362, %v1927
      %v2400 = vsel %vm2392, %v2363, %v1929
      %v2401 = vsel %vm2392, %v2364, %v1931
      %v2402 = vsel %vm2392, %v2365, %v1933
      %v2403 = vsel %vm2392, %v2366, %v1935
      %v2404 = vsel %vm2392, %v2367, %v1937
      %v2405 = vsel %vm2392, %v2368, %v1939
      %v2406 = vsel %vm2392, %v2369, %v1941
      %v2407 = vsel %vm2392, %v2370, %v1943
      %v2408 = vsel %vm2392, %v2371, %v1945
      %v2409 = vsel %vm2392, %v2372, %v1947
      %v2410 = vsel %vm2392, %v2373, %v1949
      %v2411 = vsel %vm2392, %v2374, %v1951
      %v2412 = vsel %vm2392, %v2375, %v1953
      %v2413 = vsel %vm2392, %v2376, %v1955
      %v2414 = vsel %vm2392, %v2377, %v1957
      %v2415 = vsel %vm2392, %v2378, %v1959
      %v2416 = vsel %vm2392, %v2379, %v1961
      %v2417 = vsel %vm2392, %v2380, %v1963
      %v2418 = vsel %vm2392, %v2381, %v1965
      %v2419 = vsel %vm2392, %v2382, %v1967
      %v2420 = vsel %vm2392, %v2383, %v1969
      %v2421 = vsel %vm2392, %v2384, %v1971
      %v2422 = vsel %vm2392, %v2385, %v1973
      %v2423 = vsel %vm2392, %v2386, %v1975
      %v2424 = vsel %vm2392, %v2387, %v1977
      %v2425 = vsel %vm2392, %v2388, %v1979
      %v2426 = vsel %vm2392, %v2389, %v1981
      %v2427 = vsel %vm2392, %v2390, %v1983
      %v2428 = vsel %vm2392, %v2391, %v1917
      %v2429 = vsel %vm2321, 0.0, %v2019
      %v2430 = vsel %vm2321, 0.0, %v2021
      %v2431 = vsel %vm2321, %v776, %v2023
      %v2432 = vsel %vm2321, %v777, %v2025
      %v2433 = vsel %vm2321, %v778, %v2027
      %v2434 = vsel %vm2321, %v779, %v2029
      %v2435 = vsel %vm2321, %v780, %v2031
      %v2436 = vsel %vm2321, %v781, %v2033
      %v2437 = vsel %vm2321, %v782, %v2035
      %v2438 = vsel %vm2321, %v783, %v2037
      %v2439 = vsel %vm2321, %v784, %v2039
      %v2440 = vsel %vm2321, %v785, %v2041
      %v2441 = vsel %vm2321, %v786, %v2043
      %v2442 = vsel %vm2321, %v787, %v2045
      %v2443 = vsel %vm2321, %v788, %v2047
      %v2444 = vsel %vm2321, %v789, %v2049
      %v2445 = vsel %vm2321, %v790, %v2051
      %v2446 = vsel %vm2321, %v791, %v2053
      %v2447 = vsel %vm2321, %v792, %v2055
      %v2448 = vsel %vm2321, %v793, %v2057
      %v2449 = vsel %vm2321, %v794, %v2059
      %v2450 = vsel %vm2321, %v795, %v2061
      %v2451 = vsel %vm2321, %v796, %v2063
      %v2452 = vsel %vm2321, %v797, %v2065
      %v2453 = vsel %vm2321, %v798, %v2067
      %v2454 = vsel %vm2321, %v799, %v2069
      %v2455 = vsel %vm2321, %v800, %v2071
      %v2456 = vsel %vm2321, %v801, %v2073
      %v2457 = vsel %vm2321, %v802, %v2075
      %v2458 = vsel %vm2321, %v803, %v2077
      %v2459 = vsel %vm2321, %v804, %v2079
      %v2460 = vsel %vm2321, %v805, %v2081
      %v2461 = vsel %vm2321, %v806, %v2083
      %v2462 = vsel %vm2321, %v807, %v2085
      %v2463 = vsel %vm2356, %v2429, %v2121
      %v2464 = vsel %vm2356, %v2430, %v2123
      %v2465 = vsel %vm2356, %v2431, %v2125
      %v2466 = vsel %vm2356, %v2432, %v2127
      %v2467 = vsel %vm2356, %v2433, %v2129
      %v2468 = vsel %vm2356, %v2434, %v2131
      %v2469 = vsel %vm2356, %v2435, %v2133
      %v2470 = vsel %vm2356, %v2436, %v2135
      %v2471 = vsel %vm2356, %v2437, %v2137
      %v2472 = vsel %vm2356, %v2438, %v2139
      %v2473 = vsel %vm2356, %v2439, %v2141
      %v2474 = vsel %vm2356, %v2440, %v2143
      %v2475 = vsel %vm2356, %v2441, %v2145
      %v2476 = vsel %vm2356, %v2442, %v2147
      %v2477 = vsel %vm2356, %v2443, %v2149
      %v2478 = vsel %vm2356, %v2444, %v2151
      %v2479 = vsel %vm2356, %v2445, %v2153
      %v2480 = vsel %vm2356, %v2446, %v2155
      %v2481 = vsel %vm2356, %v2447, %v2157
      %v2482 = vsel %vm2356, %v2448, %v2159
      %v2483 = vsel %vm2356, %v2449, %v2161
      %v2484 = vsel %vm2356, %v2450, %v2163
      %v2485 = vsel %vm2356, %v2451, %v2165
      %v2486 = vsel %vm2356, %v2452, %v2167
      %v2487 = vsel %vm2356, %v2453, %v2169
      %v2488 = vsel %vm2356, %v2454, %v2171
      %v2489 = vsel %vm2356, %v2455, %v2173
      %v2490 = vsel %vm2356, %v2456, %v2175
      %v2491 = vsel %vm2356, %v2457, %v2177
      %v2492 = vsel %vm2356, %v2458, %v2179
      %v2493 = vsel %vm2356, %v2459, %v2181
      %v2494 = vsel %vm2356, %v2460, %v2183
      %v2495 = vsel %vm2356, %v2461, %v2185
      %v2496 = vsel %vm2356, %v2462, %v2187
      %v2497 = vsel %vm2356, %v2429, %v2187
      %v2498 = vsel %vm2392, %v2463, %v2223
      %v2499 = vsel %vm2392, %v2464, %v2225
      %v2500 = vsel %vm2392, %v2465, %v2227
      %v2501 = vsel %vm2392, %v2466, %v2229
      %v2502 = vsel %vm2392, %v2467, %v2231
      %v2503 = vsel %vm2392, %v2468, %v2233
      %v2504 = vsel %vm2392, %v2469, %v2235
      %v2505 = vsel %vm2392, %v2470, %v2237
      %v2506 = vsel %vm2392, %v2471, %v2239
      %v2507 = vsel %vm2392, %v2472, %v2241
      %v2508 = vsel %vm2392, %v2473, %v2243
      %v2509 = vsel %vm2392, %v2474, %v2245
      %v2510 = vsel %vm2392, %v2475, %v2247
      %v2511 = vsel %vm2392, %v2476, %v2249
      %v2512 = vsel %vm2392, %v2477, %v2251
      %v2513 = vsel %vm2392, %v2478, %v2253
      %v2514 = vsel %vm2392, %v2479, %v2255
      %v2515 = vsel %vm2392, %v2480, %v2257
      %v2516 = vsel %vm2392, %v2481, %v2259
      %v2517 = vsel %vm2392, %v2482, %v2261
      %v2518 = vsel %vm2392, %v2483, %v2263
      %v2519 = vsel %vm2392, %v2484, %v2265
      %v2520 = vsel %vm2392, %v2485, %v2267
      %v2521 = vsel %vm2392, %v2486, %v2269
      %v2522 = vsel %vm2392, %v2487, %v2271
      %v2523 = vsel %vm2392, %v2488, %v2273
      %v2524 = vsel %vm2392, %v2489, %v2275
      %v2525 = vsel %vm2392, %v2490, %v2277
      %v2526 = vsel %vm2392, %v2491, %v2279
      %v2527 = vsel %vm2392, %v2492, %v2281
      %v2528 = vsel %vm2392, %v2493, %v2283
      %v2529 = vsel %vm2392, %v2494, %v2285
      %v2530 = vsel %vm2392, %v2495, %v2287
      %v2531 = vsel %vm2392, %v2496, %v2287
      %v2532 = vsel %vm2392, %v2497, %v2287
      %v2533 = vpack.c.bf16 %v2394, %v2393
      %v2534 = vpack.c.bf16 %v2499, %v2498
      %v2535 = vpack.c.bf16 %v1611, %v1612
      %v2536 = vpack.c.bf16 %v2396, %v2395
      %v2537 = vpack.c.bf16 %v2501, %v2500
      %v2538 = vpack.c.bf16 %v1609, %v1610
      %v2539 = vpack.c.bf16 %v2398, %v2397
      %v2540 = vpack.c.bf16 %v2503, %v2502
      %v2541 = vpack.c.bf16 %v1607, %v1608
      %v2542 = vpack.c.bf16 %v2400, %v2399
      %v2543 = vpack.c.bf16 %v2505, %v2504
      %v2544 = vpack.c.bf16 %v1605, %v1606
      %v2545 = vpack.c.bf16 %v2402, %v2401
      %v2546 = vpack.c.bf16 %v2507, %v2506
      %v2547 = vpack.c.bf16 %v1603, %v1604
      %v2548 = vpack.c.bf16 %v2404, %v2403
      %v2549 = vpack.c.bf16 %v2509, %v2508
      %v2550 = vpack.c.bf16 %v1601, %v1602
      %v2551 = vpack.c.bf16 %v2406, %v2405
      %v2552 = vpack.c.bf16 %v2511, %v2510
      %v2553 = vpack.c.bf16 %v1599, %v1600
      %v2554 = vpack.c.bf16 %v2408, %v2407
      %v2555 = vpack.c.bf16 %v2513, %v2512
      %v2556 = vpack.c.bf16 %v1597, %v1598
      %v2557 = vpack.c.bf16 %v2410, %v2409
      %v2558 = vpack.c.bf16 %v2515, %v2514
      %v2559 = vpack.c.bf16 %v1595, %v1596
      %v2560 = vpack.c.bf16 %v2412, %v2411
      %v2561 = vpack.c.bf16 %v2517, %v2516
      %v2562 = vpack.c.bf16 %v1593, %v1594
      %v2563 = vpack.c.bf16 %v2414, %v2413
      %v2564 = vpack.c.bf16 %v2519, %v2518
      %v2565 = vpack.c.bf16 %v1591, %v1592
      %v2566 = vpack.c.bf16 %v2416, %v2415
      %v2567 = vpack.c.bf16 %v2521, %v2520
      %v2568 = vpack.c.bf16 %v1589, %v1590
      %v2569 = vpack.c.bf16 %v2418, %v2417
      %v2570 = vpack.c.bf16 %v2523, %v2522
      %v2571 = vpack.c.bf16 %v1587, %v1588
      %v2572 = vpack.c.bf16 %v2420, %v2419
      %v2573 = vpack.c.bf16 %v2525, %v2524
      %v2574 = vpack.c.bf16 %v1585, %v1586
      %v2575 = vpack.c.bf16 %v2422, %v2421
      %v2576 = vpack.c.bf16 %v2527, %v2526
      %v2577 = vpack.c.bf16 %v1583, %v1584
      %v2578 = vpack.c.bf16 %v2424, %v2423
      %v2579 = vpack.c.bf16 %v2529, %v2528
      %v2580 = vpack.c.bf16 %v1581, %v1582
      %v2581 = vpack.c.bf16 %v2426, %v2425
      %v2582 = vpack.c.bf16 %v2531, %v2530
      %v2583 = vpack.c.bf16 0.0, 0.0
      %v2584 = vpack.c.bf16 %v2428, %v2427
      %v2585 = vpack.c.bf16 %v2532, %v2532
      %v2586 = vpack.c.bf16 %v1613, 0.0
      %v2587 = vld [vmem:[%s4] sm:$0xf]
      %v2588 = vld [vmem:[%s4 + $0x4] sm:$0xf]
      %v2589 = vld [vmem:[%s4 + $0x8] sm:$0xf]
      %v2590 = vld [vmem:[%s4 + $0xc] sm:$0xf]
      %v2591 = vld [vmem:[%s4 + $0x10] sm:$0xf]
      %v2592 = vld [vmem:[%s4 + $0x14] sm:$0xf]
      %v2593 = vld [vmem:[%s4 + $0x18] sm:$0xf]
      %v2594 = vld [vmem:[%s4 + $0x1c] sm:$0xf]
      %v2595 = vld [vmem:[%s4 + $0x20] sm:$0xf]
      %v2596 = vld [vmem:[%s4 + $0x24] sm:$0xf]
      %v2597 = vld [vmem:[%s4 + $0x28] sm:$0xf]
      %v2598 = vld [vmem:[%s4 + $0x2c] sm:$0xf]
      %v2599 = vld [vmem:[%s4 + $0x30] sm:$0xf]
      %v2600 = vld [vmem:[%s4 + $0x34] sm:$0xf]
      %v2601 = vld [vmem:[%s4 + $0x38] sm:$0xf]
      %v2602 = vld [vmem:[%s4 + $0x3c] sm:$0xf]
      %v2603 = vld [vmem:[%s4 + $0x40] sm:$0xf]
      %v2604 = vld [vmem:[%s4 + $0x44] sm:$0xf]
      %v2605 = vld [vmem:[%s4 + $0x48] sm:$0xf]
      %v2606 = vld [vmem:[%s4 + $0x4c] sm:$0xf]
      %v2607 = vld [vmem:[%s4 + $0x50] sm:$0xf]
      %v2608 = vld [vmem:[%s4 + $0x54] sm:$0xf]
      %v2609 = vld [vmem:[%s4 + $0x58] sm:$0xf]
      %v2610 = vld [vmem:[%s4 + $0x5c] sm:$0xf]
      %v2611 = vld [vmem:[%s4 + $0x60] sm:$0xf]
      %v2612 = vld [vmem:[%s4 + $0x64] sm:$0xf]
      %v2613 = vld [vmem:[%s4 + $0x68] sm:$0xf]
      %v2614 = vld [vmem:[%s4 + $0x6c] sm:$0xf]
      %v2615 = vld [vmem:[%s4 + $0x70] sm:$0xf]
      %v2616 = vld [vmem:[%s4 + $0x74] sm:$0xf]
      %v2617 = vld [vmem:[%s4 + $0x78] sm:$0xf]
      %v2618 = vld [vmem:[%s4 + $0x7c] sm:$0xf]
      %v2619 = vld [vmem:[%s4 + $0x80] sm:$0xf]
      %v2620 = vld [vmem:[%s4 + $0x84] sm:$0xf]
      %v2621 = vld [vmem:[%s4 + $0x88] sm:$0xf]
      %v2622 = vld [vmem:[%s4 + $0x8c] sm:$0xf]
      %v2659 = vunpack.c.l.b16 %v2587
      %v2660 = vunpack.c.l.b16 %v2588
      %v2661 = vunpack.c.l.b16 %v2589
      %v2662 = vunpack.c.l.b16 %v2590
      %v2663 = vunpack.c.l.b16 %v2591
      %v2664 = vunpack.c.l.b16 %v2592
      %v2665 = vunpack.c.l.b16 %v2593
      %v2666 = vunpack.c.l.b16 %v2594
      %v2667 = vunpack.c.l.b16 %v2595
      %v2668 = vunpack.c.l.b16 %v2596
      %v2669 = vunpack.c.l.b16 %v2597
      %v2670 = vunpack.c.l.b16 %v2598
      %v2671 = vunpack.c.l.b16 %v2599
      %v2672 = vunpack.c.l.b16 %v2600
      %v2673 = vunpack.c.l.b16 %v2601
      %v2674 = vunpack.c.l.b16 %v2602
      %v2675 = vunpack.c.l.b16 %v2603
      %v2676 = vunpack.c.l.b16 %v2604
      %v2677 = vunpack.c.l.b16 %v2605
      %v2678 = vunpack.c.l.b16 %v2606
      %v2679 = vunpack.c.l.b16 %v2607
      %v2680 = vunpack.c.l.b16 %v2608
      %v2681 = vunpack.c.l.b16 %v2609
      %v2682 = vunpack.c.l.b16 %v2610
      %v2683 = vunpack.c.l.b16 %v2611
      %v2684 = vunpack.c.l.b16 %v2612
      %v2685 = vunpack.c.l.b16 %v2613
      %v2686 = vunpack.c.l.b16 %v2614
      %v2687 = vunpack.c.l.b16 %v2615
      %v2688 = vunpack.c.l.b16 %v2616
      %v2689 = vunpack.c.l.b16 %v2617
      %v2690 = vunpack.c.l.b16 %v2618
      %v2691 = vunpack.c.l.b16 %v2619
      %v2692 = vunpack.c.l.b16 %v2620
      %v2693 = vunpack.c.l.b16 %v2621
      %v2694 = vunpack.c.l.b16 %v2622
      %v2695 = vpack.c.b16 %v2660, %v2659
      %v2696 = vpack.c.b16 %v2662, %v2661
      %v2697 = vpack.c.b16 %v2664, %v2663
      %v2698 = vpack.c.b16 %v2666, %v2665
      %v2699 = vpack.c.b16 %v2668, %v2667
      %v2700 = vpack.c.b16 %v2670, %v2669
      %v2701 = vpack.c.b16 %v2672, %v2671
      %v2702 = vpack.c.b16 %v2674, %v2673
      %v2703 = vpack.c.b16 %v2676, %v2675
      %v2704 = vpack.c.b16 %v2678, %v2677
      %v2705 = vpack.c.b16 %v2680, %v2679
      %v2706 = vpack.c.b16 %v2682, %v2681
      %v2707 = vpack.c.b16 %v2684, %v2683
      %v2708 = vpack.c.b16 %v2686, %v2685
      %v2709 = vpack.c.b16 %v2688, %v2687
      %v2710 = vpack.c.b16 %v2690, %v2689
      %v2711 = vpack.c.b16 %v2692, %v2691
      %v2712 = vpack.c.b16 %v2694, %v2693
      %v2732 = vsel %vm2321, %v2535, 0
      %v2735 = vsel %vm2321, %v2538, 0
      %v2738 = vsel %vm2321, %v2541, 0
      %v2741 = vsel %vm2321, %v2544, 0
      %v2744 = vsel %vm2321, %v2547, 0
      %v2747 = vsel %vm2321, %v2550, 0
      %v2750 = vsel %vm2321, %v2553, 0
      %v2753 = vsel %vm2321, %v2556, 0
      %v2756 = vsel %vm2321, %v2559, 0
      %v2759 = vsel %vm2321, %v2562, 0
      %v2762 = vsel %vm2321, %v2565, 0
      %v2765 = vsel %vm2321, %v2568, 0
      %v2768 = vsel %vm2321, %v2571, 0
      %v2771 = vsel %vm2321, %v2574, 0
      %v2774 = vsel %vm2321, %v2577, 0
      %v2777 = vsel %vm2321, %v2580, 0
      %v2780 = vsel %vm2321, %v2583, 0
      %v2783 = vsel %vm2321, %v2586, 0
      %2785 = vmatprep.subr.bf16.mxu0 0
      %2786 = vmatpush1.bf16.msra.mxu0 %v2702
      %2787 = vmatprep.subr.bf16.mxu0 0
      %2788 = vmatpush1.bf16.msra.mxu0 %v2701
      %2789 = vmatprep.subr.bf16.mxu0 0
      %2790 = vmatpush1.bf16.msra.mxu0 %v2700
      %2791 = vmatprep.subr.bf16.mxu0 0
      %2792 = vmatpush1.bf16.msra.mxu0 %v2699
      %2793 = vmatprep.subr.bf16.mxu0 0
      %2794 = vmatpush1.bf16.msra.mxu0 %v2698
      %2795 = vmatprep.subr.bf16.mxu0 0
      %2796 = vmatpush1.bf16.msra.mxu0 %v2697
      %2797 = vmatprep.subr.bf16.mxu0 0
      %2798 = vmatpush1.bf16.msra.mxu0 %v2696
      %2799 = vmatprep.subr.bf16.mxu0 0
      %2800 = vmatpush1.bf16.msra.mxu0 %v2695
      %2801 = vmatprep.subr.bf16.mxu0 0
      %2802 = vmatpush2.bf16.msra.mxu0 %v2710
      %2803 = vmatprep.subr.bf16.mxu0 0
      %2804 = vmatpush2.bf16.msra.mxu0 %v2709
      %2805 = vmatprep.subr.bf16.mxu0 0
      %2806 = vmatpush2.bf16.msra.mxu0 %v2708
      %2807 = vmatprep.subr.bf16.mxu0 0
      %2808 = vmatpush2.bf16.msra.mxu0 %v2707
      %2809 = vmatprep.subr.bf16.mxu0 0
      %2810 = vmatpush2.bf16.msra.mxu0 %v2706
      %2811 = vmatprep.subr.bf16.mxu0 0
      %2812 = vmatpush2.bf16.msra.mxu0 %v2705
      %2813 = vmatprep.subr.bf16.mxu0 0
      %2814 = vmatpush2.bf16.msra.mxu0 %v2704
      %2815 = vmatprep.subr.bf16.mxu0 0
      %2816 = vmatpush2.bf16.msra.mxu0 %v2703
      %2817 = vmatprep.mubr.bf16.mxu0 %v2534
      %2818 = vmatmul.mubr.bf16.gmra.mxu0 %v2533
      %v2819 = vpop.f32.mrf.mxu0
      %v2820 = vpop.f32.mrf.mxu0
      %v2821 = vpop.f32.mrf.mxu0
      %v2822 = vpop.f32.mrf.mxu0
      %2823 = vmatprep.mubr.bf16.mxu0 %v2537
      %2824 = vmatmul.mubr.bf16.gmra.mxu0 %v2536
      %v2825 = vpop.f32.mrf.mxu0
      %v2826 = vadd.f32 0.0, %v2825
      %v2827 = vpop.f32.mrf.mxu0
      %v2828 = vpop.f32.mrf.mxu0
      %v2829 = vadd.f32 0.0, %v2828
      %v2830 = vpop.f32.mrf.mxu0
      %2831 = vmatprep.mubr.bf16.mxu0 %v2540
      %2832 = vmatmul.mubr.bf16.gmra.mxu0 %v2539
      %v2833 = vpop.f32.mrf.mxu0
      %v2834 = vadd.f32 0.0, %v2833
      %v2835 = vpop.f32.mrf.mxu0
      %v2836 = vpop.f32.mrf.mxu0
      %v2837 = vadd.f32 0.0, %v2836
      %v2838 = vpop.f32.mrf.mxu0
      %2839 = vmatprep.mubr.bf16.mxu0 %v2543
      %2840 = vmatmul.mubr.bf16.gmra.mxu0 %v2542
      %v2841 = vpop.f32.mrf.mxu0
      %v2842 = vadd.f32 0.0, %v2841
      %v2843 = vpop.f32.mrf.mxu0
      %v2844 = vpop.f32.mrf.mxu0
      %v2845 = vadd.f32 0.0, %v2844
      %v2846 = vpop.f32.mrf.mxu0
      %2847 = vmatprep.mubr.bf16.mxu0 %v2546
      %2848 = vmatmul.mubr.bf16.gmra.mxu0 %v2545
      %v2849 = vpop.f32.mrf.mxu0
      %v2850 = vadd.f32 0.0, %v2849
      %v2851 = vpop.f32.mrf.mxu0
      %v2852 = vpop.f32.mrf.mxu0
      %v2853 = vadd.f32 0.0, %v2852
      %v2854 = vpop.f32.mrf.mxu0
      %2855 = vmatprep.mubr.bf16.mxu0 %v2549
      %2856 = vmatmul.mubr.bf16.gmra.mxu0 %v2548
      %v2857 = vpop.f32.mrf.mxu0
      %v2858 = vadd.f32 0.0, %v2857
      %v2859 = vpop.f32.mrf.mxu0
      %v2860 = vpop.f32.mrf.mxu0
      %v2861 = vadd.f32 0.0, %v2860
      %v2862 = vpop.f32.mrf.mxu0
      %2863 = vmatprep.mubr.bf16.mxu0 %v2552
      %2864 = vmatmul.mubr.bf16.gmra.mxu0 %v2551
      %v2865 = vpop.f32.mrf.mxu0
      %v2866 = vadd.f32 0.0, %v2865
      %v2867 = vpop.f32.mrf.mxu0
      %v2868 = vpop.f32.mrf.mxu0
      %v2869 = vadd.f32 0.0, %v2868
      %v2870 = vpop.f32.mrf.mxu0
      %2871 = vmatprep.mubr.bf16.mxu0 %v2555
      %2872 = vmatmul.mubr.bf16.gmra.mxu0 %v2554
      %v2873 = vpop.f32.mrf.mxu0
      %v2874 = vadd.f32 0.0, %v2873
      %v2875 = vpop.f32.mrf.mxu0
      %v2876 = vpop.f32.mrf.mxu0
      %v2877 = vadd.f32 0.0, %v2876
      %v2878 = vpop.f32.mrf.mxu0
      %2879 = vmatprep.mubr.bf16.mxu0 %v2558
      %2880 = vmatmul.mubr.bf16.gmra.mxu0 %v2557
      %v2881 = vpop.f32.mrf.mxu0
      %v2882 = vadd.f32 0.0, %v2881
      %v2883 = vpop.f32.mrf.mxu0
      %v2884 = vpop.f32.mrf.mxu0
      %v2885 = vadd.f32 0.0, %v2884
      %v2886 = vpop.f32.mrf.mxu0
      %2887 = vmatprep.mubr.bf16.mxu0 %v2561
      %2888 = vmatmul.mubr.bf16.gmra.mxu0 %v2560
      %v2889 = vpop.f32.mrf.mxu0
      %v2890 = vadd.f32 0.0, %v2889
      %v2891 = vpop.f32.mrf.mxu0
      %v2892 = vpop.f32.mrf.mxu0
      %v2893 = vadd.f32 0.0, %v2892
      %v2894 = vpop.f32.mrf.mxu0
      %2895 = vmatprep.mubr.bf16.mxu0 %v2564
      %2896 = vmatmul.mubr.bf16.gmra.mxu0 %v2563
      %v2897 = vpop.f32.mrf.mxu0
      %v2898 = vadd.f32 0.0, %v2897
      %v2899 = vpop.f32.mrf.mxu0
      %v2900 = vpop.f32.mrf.mxu0
      %v2901 = vadd.f32 0.0, %v2900
      %v2902 = vpop.f32.mrf.mxu0
      %2903 = vmatprep.mubr.bf16.mxu0 %v2567
      %2904 = vmatmul.mubr.bf16.gmra.mxu0 %v2566
      %v2905 = vpop.f32.mrf.mxu0
      %v2906 = vadd.f32 0.0, %v2905
      %v2907 = vpop.f32.mrf.mxu0
      %v2908 = vpop.f32.mrf.mxu0
      %v2909 = vadd.f32 0.0, %v2908
      %v2910 = vpop.f32.mrf.mxu0
      %2911 = vmatprep.mubr.bf16.mxu0 %v2570
      %2912 = vmatmul.mubr.bf16.gmra.mxu0 %v2569
      %v2913 = vpop.f32.mrf.mxu0
      %v2914 = vadd.f32 0.0, %v2913
      %v2915 = vpop.f32.mrf.mxu0
      %v2916 = vpop.f32.mrf.mxu0
      %v2917 = vadd.f32 0.0, %v2916
      %v2918 = vpop.f32.mrf.mxu0
      %2919 = vmatprep.mubr.bf16.mxu0 %v2573
      %2920 = vmatmul.mubr.bf16.gmra.mxu0 %v2572
      %v2921 = vpop.f32.mrf.mxu0
      %v2922 = vadd.f32 0.0, %v2921
      %v2923 = vpop.f32.mrf.mxu0
      %v2924 = vpop.f32.mrf.mxu0
      %v2925 = vadd.f32 0.0, %v2924
      %v2926 = vpop.f32.mrf.mxu0
      %2927 = vmatprep.mubr.bf16.mxu0 %v2576
      %2928 = vmatmul.mubr.bf16.gmra.mxu0 %v2575
      %v2929 = vpop.f32.mrf.mxu0
      %v2930 = vadd.f32 0.0, %v2929
      %v2931 = vpop.f32.mrf.mxu0
      %v2932 = vpop.f32.mrf.mxu0
      %v2933 = vadd.f32 0.0, %v2932
      %v2934 = vpop.f32.mrf.mxu0
      %2935 = vmatprep.mubr.bf16.mxu0 %v2579
      %2936 = vmatmul.mubr.bf16.gmra.mxu0 %v2578
      %v2937 = vpop.f32.mrf.mxu0
      %v2938 = vadd.f32 0.0, %v2937
      %v2939 = vpop.f32.mrf.mxu0
      %v2940 = vpop.f32.mrf.mxu0
      %v2941 = vadd.f32 0.0, %v2940
      %v2942 = vpop.f32.mrf.mxu0
      %2943 = vmatprep.mubr.bf16.mxu0 %v2582
      %2944 = vmatmul.mubr.bf16.gmra.mxu0 %v2581
      %v2945 = vpop.f32.mrf.mxu0
      %v2946 = vadd.f32 0.0, %v2945
      %v2947 = vpop.f32.mrf.mxu0
      %v2948 = vpop.f32.mrf.mxu0
      %v2949 = vadd.f32 0.0, %v2948
      %v2950 = vpop.f32.mrf.mxu0
      %2951 = vmatprep.mubr.bf16.mxu0 %v2585
      %2952 = vmatmul.mubr.bf16.gmra.mxu0 %v2584
      %v2953 = vpop.f32.mrf.mxu0
      %v2954 = vpop.f32.mrf.mxu0
      %v2955 = vpop.f32.mrf.mxu0
      %v2956 = vpop.f32.mrf.mxu0
      %2957 = vdwg.mxu0
      %2958 = vmatprep.subr.bf16.mxu0 0
      %2959 = vmatpush1.bf16.msra.mxu0 0
      %2960 = vmatprep.subr.bf16.mxu0 0
      %2961 = vmatpush1.bf16.msra.mxu0 0
      %2962 = vmatprep.subr.bf16.mxu0 0
      %2963 = vmatpush1.bf16.msra.mxu0 0
      %2964 = vmatprep.subr.bf16.mxu0 0
      %2965 = vmatpush1.bf16.msra.mxu0 0
      %2966 = vmatprep.subr.bf16.mxu0 0
      %2967 = vmatpush1.bf16.msra.mxu0 0
      %2968 = vmatprep.subr.bf16.mxu0 0
      %2969 = vmatpush1.bf16.msra.mxu0 0
      %2970 = vmatprep.subr.bf16.mxu0 0
      %2971 = vmatpush1.bf16.msra.mxu0 %v2712
      %2972 = vmatprep.subr.bf16.mxu0 0
      %2973 = vmatpush1.bf16.msra.mxu0 %v2711
      %2974 = vmatprep.subr.bf16.mxu0 0
      %2975 = vmatpush2.bf16.msra.mxu0 0
      %2976 = vmatprep.subr.bf16.mxu0 0
      %2977 = vmatpush2.bf16.msra.mxu0 0
      %2978 = vmatprep.subr.bf16.mxu0 0
      %2979 = vmatpush2.bf16.msra.mxu0 0
      %2980 = vmatprep.subr.bf16.mxu0 0
      %2981 = vmatpush2.bf16.msra.mxu0 0
      %2982 = vmatprep.subr.bf16.mxu0 0
      %2983 = vmatpush2.bf16.msra.mxu0 0
      %2984 = vmatprep.subr.bf16.mxu0 0
      %2985 = vmatpush2.bf16.msra.mxu0 0
      %2986 = vmatprep.subr.bf16.mxu0 0
      %2987 = vmatpush2.bf16.msra.mxu0 0
      %2988 = vmatprep.subr.bf16.mxu0 0
      %2989 = vmatpush2.bf16.msra.mxu0 0
      %2990 = vmatprep.mubr.bf16.mxu0 0
      %2991 = vmatmul.mubr.bf16.gmra.mxu0 %v2732
      %v2992 = vpop.f32.mrf.mxu0
      %v2993 = vpop.f32.mrf.mxu0
      %v2994 = vpop.f32.mrf.mxu0
      %v2995 = vpop.f32.mrf.mxu0
      %2996 = vmatprep.mubr.bf16.mxu0 0
      %2997 = vmatmul.mubr.bf16.gmra.mxu0 %v2735
      %v2998 = vpop.f32.mrf.mxu0
      %v2999 = vadd.f32 %v2826, %v2998
      %v3000 = vpop.f32.mrf.mxu0
      %v3001 = vpop.f32.mrf.mxu0
      %v3002 = vadd.f32 %v2829, %v3001
      %v3003 = vpop.f32.mrf.mxu0
      %3004 = vmatprep.mubr.bf16.mxu0 0
      %3005 = vmatmul.mubr.bf16.gmra.mxu0 %v2738
      %v3006 = vpop.f32.mrf.mxu0
      %v3007 = vadd.f32 %v2834, %v3006
      %v3008 = vpop.f32.mrf.mxu0
      %v3009 = vpop.f32.mrf.mxu0
      %v3010 = vadd.f32 %v2837, %v3009
      %v3011 = vpop.f32.mrf.mxu0
      %3012 = vmatprep.mubr.bf16.mxu0 0
      %3013 = vmatmul.mubr.bf16.gmra.mxu0 %v2741
      %v3014 = vpop.f32.mrf.mxu0
      %v3015 = vadd.f32 %v2842, %v3014
      %v3016 = vpop.f32.mrf.mxu0
      %v3017 = vpop.f32.mrf.mxu0
      %v3018 = vadd.f32 %v2845, %v3017
      %v3019 = vpop.f32.mrf.mxu0
      %3020 = vmatprep.mubr.bf16.mxu0 0
      %3021 = vmatmul.mubr.bf16.gmra.mxu0 %v2744
      %v3022 = vpop.f32.mrf.mxu0
      %v3023 = vadd.f32 %v2850, %v3022
      %v3024 = vpop.f32.mrf.mxu0
      %v3025 = vpop.f32.mrf.mxu0
      %v3026 = vadd.f32 %v2853, %v3025
      %v3027 = vpop.f32.mrf.mxu0
      %3028 = vmatprep.mubr.bf16.mxu0 0
      %3029 = vmatmul.mubr.bf16.gmra.mxu0 %v2747
      %v3030 = vpop.f32.mrf.mxu0
      %v3031 = vadd.f32 %v2858, %v3030
      %v3032 = vpop.f32.mrf.mxu0
      %v3033 = vpop.f32.mrf.mxu0
      %v3034 = vadd.f32 %v2861, %v3033
      %v3035 = vpop.f32.mrf.mxu0
      %3036 = vmatprep.mubr.bf16.mxu0 0
      %3037 = vmatmul.mubr.bf16.gmra.mxu0 %v2750
      %v3038 = vpop.f32.mrf.mxu0
      %v3039 = vadd.f32 %v2866, %v3038
      %v3040 = vpop.f32.mrf.mxu0
      %v3041 = vpop.f32.mrf.mxu0
      %v3042 = vadd.f32 %v2869, %v3041
      %v3043 = vpop.f32.mrf.mxu0
      %3044 = vmatprep.mubr.bf16.mxu0 0
      %3045 = vmatmul.mubr.bf16.gmra.mxu0 %v2753
      %v3046 = vpop.f32.mrf.mxu0
      %v3047 = vadd.f32 %v2874, %v3046
      %v3048 = vpop.f32.mrf.mxu0
      %v3049 = vpop.f32.mrf.mxu0
      %v3050 = vadd.f32 %v2877, %v3049
      %v3051 = vpop.f32.mrf.mxu0
      %3052 = vmatprep.mubr.bf16.mxu0 0
      %3053 = vmatmul.mubr.bf16.gmra.mxu0 %v2756
      %v3054 = vpop.f32.mrf.mxu0
      %v3055 = vadd.f32 %v2882, %v3054
      %v3056 = vpop.f32.mrf.mxu0
      %v3057 = vpop.f32.mrf.mxu0
      %v3058 = vadd.f32 %v2885, %v3057
      %v3059 = vpop.f32.mrf.mxu0
      %3060 = vmatprep.mubr.bf16.mxu0 0
      %3061 = vmatmul.mubr.bf16.gmra.mxu0 %v2759
      %v3062 = vpop.f32.mrf.mxu0
      %v3063 = vadd.f32 %v2890, %v3062
      %v3064 = vpop.f32.mrf.mxu0
      %v3065 = vpop.f32.mrf.mxu0
      %v3066 = vadd.f32 %v2893, %v3065
      %v3067 = vpop.f32.mrf.mxu0
      %3068 = vmatprep.mubr.bf16.mxu0 0
      %3069 = vmatmul.mubr.bf16.gmra.mxu0 %v2762
      %v3070 = vpop.f32.mrf.mxu0
      %v3071 = vadd.f32 %v2898, %v3070
      %v3072 = vpop.f32.mrf.mxu0
      %v3073 = vpop.f32.mrf.mxu0
      %v3074 = vadd.f32 %v2901, %v3073
      %v3075 = vpop.f32.mrf.mxu0
      %3076 = vmatprep.mubr.bf16.mxu0 0
      %3077 = vmatmul.mubr.bf16.gmra.mxu0 %v2765
      %v3078 = vpop.f32.mrf.mxu0
      %v3079 = vadd.f32 %v2906, %v3078
      %v3080 = vpop.f32.mrf.mxu0
      %v3081 = vpop.f32.mrf.mxu0
      %v3082 = vadd.f32 %v2909, %v3081
      %v3083 = vpop.f32.mrf.mxu0
      %3084 = vmatprep.mubr.bf16.mxu0 0
      %3085 = vmatmul.mubr.bf16.gmra.mxu0 %v2768
      %v3086 = vpop.f32.mrf.mxu0
      %v3087 = vadd.f32 %v2914, %v3086
      %v3088 = vpop.f32.mrf.mxu0
      %v3089 = vpop.f32.mrf.mxu0
      %v3090 = vadd.f32 %v2917, %v3089
      %v3091 = vpop.f32.mrf.mxu0
      %3092 = vmatprep.mubr.bf16.mxu0 0
      %3093 = vmatmul.mubr.bf16.gmra.mxu0 %v2771
      %v3094 = vpop.f32.mrf.mxu0
      %v3095 = vadd.f32 %v2922, %v3094
      %v3096 = vpop.f32.mrf.mxu0
      %v3097 = vpop.f32.mrf.mxu0
      %v3098 = vadd.f32 %v2925, %v3097
      %v3099 = vpop.f32.mrf.mxu0
      %3100 = vmatprep.mubr.bf16.mxu0 0
      %3101 = vmatmul.mubr.bf16.gmra.mxu0 %v2774
      %v3102 = vpop.f32.mrf.mxu0
      %v3103 = vadd.f32 %v2930, %v3102
      %v3104 = vpop.f32.mrf.mxu0
      %v3105 = vpop.f32.mrf.mxu0
      %v3106 = vadd.f32 %v2933, %v3105
      %v3107 = vpop.f32.mrf.mxu0
      %3108 = vmatprep.mubr.bf16.mxu0 0
      %3109 = vmatmul.mubr.bf16.gmra.mxu0 %v2777
      %v3110 = vpop.f32.mrf.mxu0
      %v3111 = vadd.f32 %v2938, %v3110
      %v3112 = vpop.f32.mrf.mxu0
      %v3113 = vpop.f32.mrf.mxu0
      %v3114 = vadd.f32 %v2941, %v3113
      %v3115 = vpop.f32.mrf.mxu0
      %3116 = vmatprep.mubr.bf16.mxu0 0
      %3117 = vmatmul.mubr.bf16.gmra.mxu0 %v2780
      %v3118 = vpop.f32.mrf.mxu0
      %v3119 = vadd.f32 %v2946, %v3118
      %v3120 = vpop.f32.mrf.mxu0
      %v3121 = vpop.f32.mrf.mxu0
      %v3122 = vadd.f32 %v2949, %v3121
      %v3123 = vpop.f32.mrf.mxu0
      %3124 = vmatprep.mubr.bf16.mxu0 0
      %3125 = vmatmul.mubr.bf16.gmra.mxu0 %v2783
      %v3126 = vpop.f32.mrf.mxu0
      %v3127 = vpop.f32.mrf.mxu0
      %v3128 = vpop.f32.mrf.mxu0
      %v3129 = vpop.f32.mrf.mxu0
      %3130 = vdwg.mxu0
      %v3131 = vld [vmem:[%s5] sm:$0x1]
      %v3133 = vlaneseq
      %v3134 = vshrl.u32 %v3133, 7
      %v3135 = vsub.s32 0, %v3134
      %v3136 = vrot.slane %v3131, %v3135
      %v3138 = vmul.f32 %v2999, %v3136
      %v3139 = vmul.f32 %v3002, %v3136
      %v3140 = vmul.f32 %v3007, %v3136
      %v3141 = vmul.f32 %v3010, %v3136
      %v3142 = vmul.f32 %v3015, %v3136
      %v3143 = vmul.f32 %v3018, %v3136
      %v3144 = vmul.f32 %v3023, %v3136
      %v3145 = vmul.f32 %v3026, %v3136
      %v3146 = vmul.f32 %v3031, %v3136
      %v3147 = vmul.f32 %v3034, %v3136
      %v3148 = vmul.f32 %v3039, %v3136
      %v3149 = vmul.f32 %v3042, %v3136
      %v3150 = vmul.f32 %v3047, %v3136
      %v3151 = vmul.f32 %v3050, %v3136
      %v3152 = vmul.f32 %v3055, %v3136
      %v3153 = vmul.f32 %v3058, %v3136
      %v3154 = vmul.f32 %v3063, %v3136
      %v3155 = vmul.f32 %v3066, %v3136
      %v3156 = vmul.f32 %v3071, %v3136
      %v3157 = vmul.f32 %v3074, %v3136
      %v3158 = vmul.f32 %v3079, %v3136
      %v3159 = vmul.f32 %v3082, %v3136
      %v3160 = vmul.f32 %v3087, %v3136
      %v3161 = vmul.f32 %v3090, %v3136
      %v3162 = vmul.f32 %v3095, %v3136
      %v3163 = vmul.f32 %v3098, %v3136
      %v3164 = vmul.f32 %v3103, %v3136
      %v3165 = vmul.f32 %v3106, %v3136
      %v3166 = vmul.f32 %v3111, %v3136
      %v3167 = vmul.f32 %v3114, %v3136
      %v3168 = vmul.f32 %v3119, %v3136
      %v3169 = vmul.f32 %v3122, %v3136
      %v3170 = vld [vmem:[%s6] sm:$0x1]
      %v3172 = vlaneseq
      %v3173 = vshrl.u32 %v3172, 7
      %v3174 = vsub.s32 0, %v3173
      %v3175 = vrot.slane %v3170, %v3174
      %v3177 = vadd.f32 %v3138, %v3175
      %v3178 = vadd.f32 %v3139, %v3175
      %v3179 = vadd.f32 %v3140, %v3175
      %v3180 = vadd.f32 %v3141, %v3175
      %v3181 = vadd.f32 %v3142, %v3175
      %v3182 = vadd.f32 %v3143, %v3175
      %v3183 = vadd.f32 %v3144, %v3175
      %v3184 = vadd.f32 %v3145, %v3175
      %v3185 = vadd.f32 %v3146, %v3175
      %v3186 = vadd.f32 %v3147, %v3175
      %v3187 = vadd.f32 %v3148, %v3175
      %v3188 = vadd.f32 %v3149, %v3175
      %v3189 = vadd.f32 %v3150, %v3175
      %v3190 = vadd.f32 %v3151, %v3175
      %v3191 = vadd.f32 %v3152, %v3175
      %v3192 = vadd.f32 %v3153, %v3175
      %v3193 = vadd.f32 %v3154, %v3175
      %v3194 = vadd.f32 %v3155, %v3175
      %v3195 = vadd.f32 %v3156, %v3175
      %v3196 = vadd.f32 %v3157, %v3175
      %v3197 = vadd.f32 %v3158, %v3175
      %v3198 = vadd.f32 %v3159, %v3175
      %v3199 = vadd.f32 %v3160, %v3175
      %v3200 = vadd.f32 %v3161, %v3175
      %v3201 = vadd.f32 %v3162, %v3175
      %v3202 = vadd.f32 %v3163, %v3175
      %v3203 = vadd.f32 %v3164, %v3175
      %v3204 = vadd.f32 %v3165, %v3175
      %v3205 = vadd.f32 %v3166, %v3175
      %v3206 = vadd.f32 %v3167, %v3175
      %v3207 = vadd.f32 %v3168, %v3175
      %v3208 = vadd.f32 %v3169, %v3175
      %v3209 = vmax.f32 %v3177, 0.0
      %v3210 = vmax.f32 %v3178, 0.0
      %v3211 = vmax.f32 %v3179, 0.0
      %v3212 = vmax.f32 %v3180, 0.0
      %v3213 = vmax.f32 %v3181, 0.0
      %v3214 = vmax.f32 %v3182, 0.0
      %v3215 = vmax.f32 %v3183, 0.0
      %v3216 = vmax.f32 %v3184, 0.0
      %v3217 = vmax.f32 %v3185, 0.0
      %v3218 = vmax.f32 %v3186, 0.0
      %v3219 = vmax.f32 %v3187, 0.0
      %v3220 = vmax.f32 %v3188, 0.0
      %v3221 = vmax.f32 %v3189, 0.0
      %v3222 = vmax.f32 %v3190, 0.0
      %v3223 = vmax.f32 %v3191, 0.0
      %v3224 = vmax.f32 %v3192, 0.0
      %v3225 = vmax.f32 %v3193, 0.0
      %v3226 = vmax.f32 %v3194, 0.0
      %v3227 = vmax.f32 %v3195, 0.0
      %v3228 = vmax.f32 %v3196, 0.0
      %v3229 = vmax.f32 %v3197, 0.0
      %v3230 = vmax.f32 %v3198, 0.0
      %v3231 = vmax.f32 %v3199, 0.0
      %v3232 = vmax.f32 %v3200, 0.0
      %v3233 = vmax.f32 %v3201, 0.0
      %v3234 = vmax.f32 %v3202, 0.0
      %v3235 = vmax.f32 %v3203, 0.0
      %v3236 = vmax.f32 %v3204, 0.0
      %v3237 = vmax.f32 %v3205, 0.0
      %v3238 = vmax.f32 %v3206, 0.0
      %v3239 = vmax.f32 %v3207, 0.0
      %v3240 = vmax.f32 %v3208, 0.0
      %v3241 = vpack.c.bf16 %v3210, %v3209
      %v3242 = vpack.c.bf16 %v3212, %v3211
      %v3243 = vpack.c.bf16 %v3214, %v3213
      %v3244 = vpack.c.bf16 %v3216, %v3215
      %v3245 = vpack.c.bf16 %v3218, %v3217
      %v3246 = vpack.c.bf16 %v3220, %v3219
      %v3247 = vpack.c.bf16 %v3222, %v3221
      %v3248 = vpack.c.bf16 %v3224, %v3223
      %v3249 = vpack.c.bf16 %v3226, %v3225
      %v3250 = vpack.c.bf16 %v3228, %v3227
      %v3251 = vpack.c.bf16 %v3230, %v3229
      %v3252 = vpack.c.bf16 %v3232, %v3231
      %v3253 = vpack.c.bf16 %v3234, %v3233
      %v3254 = vpack.c.bf16 %v3236, %v3235
      %v3255 = vpack.c.bf16 %v3238, %v3237
      %v3256 = vpack.c.bf16 %v3240, %v3239
      %v3257 = vld [vmem:[%s7] sm:$0xf]
      %v3258 = vld [vmem:[%s7 + $0x4] sm:$0xf]
      %v3259 = vld [vmem:[%s7 + $0x8] sm:$0xf]
      %v3260 = vld [vmem:[%s7 + $0xc] sm:$0xf]
      %v3265 = vunpack.c.l.b16 %v3257
      %v3266 = vunpack.c.l.b16 %v3258
      %v3267 = vunpack.c.l.b16 %v3259
      %v3268 = vunpack.c.l.b16 %v3260
      %v3269 = vpack.c.b16 %v3266, %v3265
      %v3270 = vpack.c.b16 %v3268, %v3267
      %v3274 = vsel %vm2321, %v3241, 0
      %v3277 = vsel %vm2321, %v3242, 0
      %v3280 = vsel %vm2321, %v3243, 0
      %v3283 = vsel %vm2321, %v3244, 0
      %v3286 = vsel %vm2321, %v3245, 0
      %v3289 = vsel %vm2321, %v3246, 0
      %v3292 = vsel %vm2321, %v3247, 0
      %v3295 = vsel %vm2321, %v3248, 0
      %v3298 = vsel %vm2321, %v3249, 0
      %v3301 = vsel %vm2321, %v3250, 0
      %v3304 = vsel %vm2321, %v3251, 0
      %v3307 = vsel %vm2321, %v3252, 0
      %v3310 = vsel %vm2321, %v3253, 0
      %v3313 = vsel %vm2321, %v3254, 0
      %v3316 = vsel %vm2321, %v3255, 0
      %v3319 = vsel %vm2321, %v3256, 0
      %3321 = vmatprep.subr.bf16.mxu0 0
      %3322 = vmatpush1.bf16.msra.mxu0 0
      %3323 = vmatprep.subr.bf16.mxu0 0
      %3324 = vmatpush1.bf16.msra.mxu0 0
      %3325 = vmatprep.subr.bf16.mxu0 0
      %3326 = vmatpush1.bf16.msra.mxu0 0
      %3327 = vmatprep.subr.bf16.mxu0 0
      %3328 = vmatpush1.bf16.msra.mxu0 0
      %3329 = vmatprep.subr.bf16.mxu0 0
      %3330 = vmatpush1.bf16.msra.mxu0 0
      %3331 = vmatprep.subr.bf16.mxu0 0
      %3332 = vmatpush1.bf16.msra.mxu0 0
      %3333 = vmatprep.subr.bf16.mxu0 0
      %3334 = vmatpush1.bf16.msra.mxu0 %v3270
      %3335 = vmatprep.subr.bf16.mxu0 0
      %3336 = vmatpush1.bf16.msra.mxu0 %v3269
      %3337 = vmatprep.subr.bf16.mxu0 0
      %3338 = vmatpush2.bf16.msra.mxu0 0
      %3339 = vmatprep.subr.bf16.mxu0 0
      %3340 = vmatpush2.bf16.msra.mxu0 0
      %3341 = vmatprep.subr.bf16.mxu0 0
      %3342 = vmatpush2.bf16.msra.mxu0 0
      %3343 = vmatprep.subr.bf16.mxu0 0
      %3344 = vmatpush2.bf16.msra.mxu0 0
      %3345 = vmatprep.subr.bf16.mxu0 0
      %3346 = vmatpush2.bf16.msra.mxu0 0
      %3347 = vmatprep.subr.bf16.mxu0 0
      %3348 = vmatpush2.bf16.msra.mxu0 0
      %3349 = vmatprep.subr.bf16.mxu0 0
      %3350 = vmatpush2.bf16.msra.mxu0 0
      %3351 = vmatprep.subr.bf16.mxu0 0
      %3352 = vmatpush2.bf16.msra.mxu0 0
      %3353 = vmatprep.mubr.bf16.mxu0 0
      %3354 = vmatmul.mubr.bf16.gmra.mxu0 %v3274
      %v3355 = vpop.f32.mrf.mxu0
      %v3356 = vadd.f32 0.0, %v3355
      %v3357 = vpop.f32.mrf.mxu0
      %v3358 = vpop.f32.mrf.mxu0
      %v3359 = vadd.f32 0.0, %v3358
      %v3360 = vpop.f32.mrf.mxu0
      %3361 = vmatprep.mubr.bf16.mxu0 0
      %3362 = vmatmul.mubr.bf16.gmra.mxu0 %v3277
      %v3363 = vpop.f32.mrf.mxu0
      %v3364 = vadd.f32 0.0, %v3363
      %v3365 = vpop.f32.mrf.mxu0
      %v3366 = vpop.f32.mrf.mxu0
      %v3367 = vadd.f32 0.0, %v3366
      %v3368 = vpop.f32.mrf.mxu0
      %3369 = vmatprep.mubr.bf16.mxu0 0
      %3370 = vmatmul.mubr.bf16.gmra.mxu0 %v3280
      %v3371 = vpop.f32.mrf.mxu0
      %v3372 = vadd.f32 0.0, %v3371
      %v3373 = vpop.f32.mrf.mxu0
      %v3374 = vpop.f32.mrf.mxu0
      %v3375 = vadd.f32 0.0, %v3374
      %v3376 = vpop.f32.mrf.mxu0
      %3377 = vmatprep.mubr.bf16.mxu0 0
      %3378 = vmatmul.mubr.bf16.gmra.mxu0 %v3283
      %v3379 = vpop.f32.mrf.mxu0
      %v3380 = vadd.f32 0.0, %v3379
      %v3381 = vpop.f32.mrf.mxu0
      %v3382 = vpop.f32.mrf.mxu0
      %v3383 = vadd.f32 0.0, %v3382
      %v3384 = vpop.f32.mrf.mxu0
      %3385 = vmatprep.mubr.bf16.mxu0 0
      %3386 = vmatmul.mubr.bf16.gmra.mxu0 %v3286
      %v3387 = vpop.f32.mrf.mxu0
      %v3388 = vadd.f32 0.0, %v3387
      %v3389 = vpop.f32.mrf.mxu0
      %v3390 = vpop.f32.mrf.mxu0
      %v3391 = vadd.f32 0.0, %v3390
      %v3392 = vpop.f32.mrf.mxu0
      %3393 = vmatprep.mubr.bf16.mxu0 0
      %3394 = vmatmul.mubr.bf16.gmra.mxu0 %v3289
      %v3395 = vpop.f32.mrf.mxu0
      %v3396 = vadd.f32 0.0, %v3395
      %v3397 = vpop.f32.mrf.mxu0
      %v3398 = vpop.f32.mrf.mxu0
      %v3399 = vadd.f32 0.0, %v3398
      %v3400 = vpop.f32.mrf.mxu0
      %3401 = vmatprep.mubr.bf16.mxu0 0
      %3402 = vmatmul.mubr.bf16.gmra.mxu0 %v3292
      %v3403 = vpop.f32.mrf.mxu0
      %v3404 = vadd.f32 0.0, %v3403
      %v3405 = vpop.f32.mrf.mxu0
      %v3406 = vpop.f32.mrf.mxu0
      %v3407 = vadd.f32 0.0, %v3406
      %v3408 = vpop.f32.mrf.mxu0
      %3409 = vmatprep.mubr.bf16.mxu0 0
      %3410 = vmatmul.mubr.bf16.gmra.mxu0 %v3295
      %v3411 = vpop.f32.mrf.mxu0
      %v3412 = vadd.f32 0.0, %v3411
      %v3413 = vpop.f32.mrf.mxu0
      %v3414 = vpop.f32.mrf.mxu0
      %v3415 = vadd.f32 0.0, %v3414
      %v3416 = vpop.f32.mrf.mxu0
      %3417 = vmatprep.mubr.bf16.mxu0 0
      %3418 = vmatmul.mubr.bf16.gmra.mxu0 %v3298
      %v3419 = vpop.f32.mrf.mxu0
      %v3420 = vadd.f32 0.0, %v3419
      %v3421 = vpop.f32.mrf.mxu0
      %v3422 = vpop.f32.mrf.mxu0
      %v3423 = vadd.f32 0.0, %v3422
      %v3424 = vpop.f32.mrf.mxu0
      %3425 = vmatprep.mubr.bf16.mxu0 0
      %3426 = vmatmul.mubr.bf16.gmra.mxu0 %v3301
      %v3427 = vpop.f32.mrf.mxu0
      %v3428 = vadd.f32 0.0, %v3427
      %v3429 = vpop.f32.mrf.mxu0
      %v3430 = vpop.f32.mrf.mxu0
      %v3431 = vadd.f32 0.0, %v3430
      %v3432 = vpop.f32.mrf.mxu0
      %3433 = vmatprep.mubr.bf16.mxu0 0
      %3434 = vmatmul.mubr.bf16.gmra.mxu0 %v3304
      %v3435 = vpop.f32.mrf.mxu0
      %v3436 = vadd.f32 0.0, %v3435
      %v3437 = vpop.f32.mrf.mxu0
      %v3438 = vpop.f32.mrf.mxu0
      %v3439 = vadd.f32 0.0, %v3438
      %v3440 = vpop.f32.mrf.mxu0
      %3441 = vmatprep.mubr.bf16.mxu0 0
      %3442 = vmatmul.mubr.bf16.gmra.mxu0 %v3307
      %v3443 = vpop.f32.mrf.mxu0
      %v3444 = vadd.f32 0.0, %v3443
      %v3445 = vpop.f32.mrf.mxu0
      %v3446 = vpop.f32.mrf.mxu0
      %v3447 = vadd.f32 0.0, %v3446
      %v3448 = vpop.f32.mrf.mxu0
      %3449 = vmatprep.mubr.bf16.mxu0 0
      %3450 = vmatmul.mubr.bf16.gmra.mxu0 %v3310
      %v3451 = vpop.f32.mrf.mxu0
      %v3452 = vadd.f32 0.0, %v3451
      %v3453 = vpop.f32.mrf.mxu0
      %v3454 = vpop.f32.mrf.mxu0
      %v3455 = vadd.f32 0.0, %v3454
      %v3456 = vpop.f32.mrf.mxu0
      %3457 = vmatprep.mubr.bf16.mxu0 0
      %3458 = vmatmul.mubr.bf16.gmra.mxu0 %v3313
      %v3459 = vpop.f32.mrf.mxu0
      %v3460 = vadd.f32 0.0, %v3459
      %v3461 = vpop.f32.mrf.mxu0
      %v3462 = vpop.f32.mrf.mxu0
      %v3463 = vadd.f32 0.0, %v3462
      %v3464 = vpop.f32.mrf.mxu0
      %3465 = vmatprep.mubr.bf16.mxu0 0
      %3466 = vmatmul.mubr.bf16.gmra.mxu0 %v3316
      %v3467 = vpop.f32.mrf.mxu0
      %v3468 = vadd.f32 0.0, %v3467
      %v3469 = vpop.f32.mrf.mxu0
      %v3470 = vpop.f32.mrf.mxu0
      %v3471 = vadd.f32 0.0, %v3470
      %v3472 = vpop.f32.mrf.mxu0
      %3473 = vmatprep.mubr.bf16.mxu0 0
      %3474 = vmatmul.mubr.bf16.gmra.mxu0 %v3319
      %v3475 = vpop.f32.mrf.mxu0
      %v3476 = vadd.f32 0.0, %v3475
      %v3477 = vpop.f32.mrf.mxu0
      %v3478 = vpop.f32.mrf.mxu0
      %v3479 = vadd.f32 0.0, %v3478
      %v3480 = vpop.f32.mrf.mxu0
      %3481 = vdwg.mxu0
      %v3482 = vld [vmem:[%s8] sm:$0x1]
      %v3484 = vlaneseq
      %v3485 = vshrl.u32 %v3484, 7
      %v3486 = vsub.s32 0, %v3485
      %v3487 = vrot.slane %v3482, %v3486
      %v3489 = vmul.f32 %v3356, %v3487
      %v3490 = vmul.f32 %v3359, %v3487
      %v3491 = vmul.f32 %v3364, %v3487
      %v3492 = vmul.f32 %v3367, %v3487
      %v3493 = vmul.f32 %v3372, %v3487
      %v3494 = vmul.f32 %v3375, %v3487
      %v3495 = vmul.f32 %v3380, %v3487
      %v3496 = vmul.f32 %v3383, %v3487
      %v3497 = vmul.f32 %v3388, %v3487
      %v3498 = vmul.f32 %v3391, %v3487
      %v3499 = vmul.f32 %v3396, %v3487
      %v3500 = vmul.f32 %v3399, %v3487
      %v3501 = vmul.f32 %v3404, %v3487
      %v3502 = vmul.f32 %v3407, %v3487
      %v3503 = vmul.f32 %v3412, %v3487
      %v3504 = vmul.f32 %v3415, %v3487
      %v3505 = vmul.f32 %v3420, %v3487
      %v3506 = vmul.f32 %v3423, %v3487
      %v3507 = vmul.f32 %v3428, %v3487
      %v3508 = vmul.f32 %v3431, %v3487
      %v3509 = vmul.f32 %v3436, %v3487
      %v3510 = vmul.f32 %v3439, %v3487
      %v3511 = vmul.f32 %v3444, %v3487
      %v3512 = vmul.f32 %v3447, %v3487
      %v3513 = vmul.f32 %v3452, %v3487
      %v3514 = vmul.f32 %v3455, %v3487
      %v3515 = vmul.f32 %v3460, %v3487
      %v3516 = vmul.f32 %v3463, %v3487
      %v3517 = vmul.f32 %v3468, %v3487
      %v3518 = vmul.f32 %v3471, %v3487
      %v3519 = vmul.f32 %v3476, %v3487
      %v3520 = vmul.f32 %v3479, %v3487
      %v3521 = vld [vmem:[%s9] sm:$0x1]
      %v3523 = vlaneseq
      %v3524 = vshrl.u32 %v3523, 7
      %v3525 = vsub.s32 0, %v3524
      %v3526 = vrot.slane %v3521, %v3525
      %v3528 = vadd.f32 %v3489, %v3526
      %v3529 = vadd.f32 %v3490, %v3526
      %v3530 = vadd.f32 %v3491, %v3526
      %v3531 = vadd.f32 %v3492, %v3526
      %v3532 = vadd.f32 %v3493, %v3526
      %v3533 = vadd.f32 %v3494, %v3526
      %v3534 = vadd.f32 %v3495, %v3526
      %v3535 = vadd.f32 %v3496, %v3526
      %v3536 = vadd.f32 %v3497, %v3526
      %v3537 = vadd.f32 %v3498, %v3526
      %v3538 = vadd.f32 %v3499, %v3526
      %v3539 = vadd.f32 %v3500, %v3526
      %v3540 = vadd.f32 %v3501, %v3526
      %v3541 = vadd.f32 %v3502, %v3526
      %v3542 = vadd.f32 %v3503, %v3526
      %v3543 = vadd.f32 %v3504, %v3526
      %v3544 = vadd.f32 %v3505, %v3526
      %v3545 = vadd.f32 %v3506, %v3526
      %v3546 = vadd.f32 %v3507, %v3526
      %v3547 = vadd.f32 %v3508, %v3526
      %v3548 = vadd.f32 %v3509, %v3526
      %v3549 = vadd.f32 %v3510, %v3526
      %v3550 = vadd.f32 %v3511, %v3526
      %v3551 = vadd.f32 %v3512, %v3526
      %v3552 = vadd.f32 %v3513, %v3526
      %v3553 = vadd.f32 %v3514, %v3526
      %v3554 = vadd.f32 %v3515, %v3526
      %v3555 = vadd.f32 %v3516, %v3526
      %v3556 = vadd.f32 %v3517, %v3526
      %v3557 = vadd.f32 %v3518, %v3526
      %v3558 = vadd.f32 %v3519, %v3526
      %v3559 = vadd.f32 %v3520, %v3526
      %v3560 = vadd.f32 %v3528, %v409
      %v3561 = vadd.f32 %v3529, %v410
      %v3562 = vadd.f32 %v3530, %v411
      %v3563 = vadd.f32 %v3531, %v412
      %v3564 = vadd.f32 %v3532, %v413
      %v3565 = vadd.f32 %v3533, %v414
      %v3566 = vadd.f32 %v3534, %v415
      %v3567 = vadd.f32 %v3535, %v416
      %v3568 = vadd.f32 %v3536, %v417
      %v3569 = vadd.f32 %v3537, %v418
      %v3570 = vadd.f32 %v3538, %v419
      %v3571 = vadd.f32 %v3539, %v420
      %v3572 = vadd.f32 %v3540, %v421
      %v3573 = vadd.f32 %v3541, %v422
      %v3574 = vadd.f32 %v3542, %v423
      %v3575 = vadd.f32 %v3543, %v424
      %v3576 = vadd.f32 %v3544, %v441
      %v3577 = vadd.f32 %v3545, %v442
      %v3578 = vadd.f32 %v3546, %v443
      %v3579 = vadd.f32 %v3547, %v444
      %v3580 = vadd.f32 %v3548, %v445
      %v3581 = vadd.f32 %v3549, %v446
      %v3582 = vadd.f32 %v3550, %v447
      %v3583 = vadd.f32 %v3551, %v448
      %v3584 = vadd.f32 %v3552, %v449
      %v3585 = vadd.f32 %v3553, %v450
      %v3586 = vadd.f32 %v3554, %v451
      %v3587 = vadd.f32 %v3555, %v452
      %v3588 = vadd.f32 %v3556, %v453
      %v3589 = vadd.f32 %v3557, %v454
      %v3590 = vadd.f32 %v3558, %v455
      %v3591 = vadd.f32 %v3559, %v456
      %v3592 = vmax.f32 %v3560, 0.0
      %v3593 = vmax.f32 %v3561, 0.0
      %v3594 = vmax.f32 %v3562, 0.0
      %v3595 = vmax.f32 %v3563, 0.0
      %v3596 = vmax.f32 %v3564, 0.0
      %v3597 = vmax.f32 %v3565, 0.0
      %v3598 = vmax.f32 %v3566, 0.0
      %v3599 = vmax.f32 %v3567, 0.0
      %v3600 = vmax.f32 %v3568, 0.0
      %v3601 = vmax.f32 %v3569, 0.0
      %v3602 = vmax.f32 %v3570, 0.0
      %v3603 = vmax.f32 %v3571, 0.0
      %v3604 = vmax.f32 %v3572, 0.0
      %v3605 = vmax.f32 %v3573, 0.0
      %v3606 = vmax.f32 %v3574, 0.0
      %v3607 = vmax.f32 %v3575, 0.0
      %v3608 = vmax.f32 %v3576, 0.0
      %v3609 = vmax.f32 %v3577, 0.0
      %v3610 = vmax.f32 %v3578, 0.0
      %v3611 = vmax.f32 %v3579, 0.0
      %v3612 = vmax.f32 %v3580, 0.0
      %v3613 = vmax.f32 %v3581, 0.0
      %v3614 = vmax.f32 %v3582, 0.0
      %v3615 = vmax.f32 %v3583, 0.0
      %v3616 = vmax.f32 %v3584, 0.0
      %v3617 = vmax.f32 %v3585, 0.0
      %v3618 = vmax.f32 %v3586, 0.0
      %v3619 = vmax.f32 %v3587, 0.0
      %v3620 = vmax.f32 %v3588, 0.0
      %v3621 = vmax.f32 %v3589, 0.0
      %v3622 = vmax.f32 %v3590, 0.0
      %v3623 = vmax.f32 %v3591, 0.0
      %3624 = vxpose.xlu0.b32.start [1/16] %v3592, 128
      %3625 = vxpose.xlu0.b32.cont [2/16] %v3593, 128
      %3626 = vxpose.xlu0.b32.cont [3/16] %v3594, 128
      %3627 = vxpose.xlu0.b32.cont [4/16] %v3595, 128
      %3628 = vxpose.xlu0.b32.cont [5/16] %v3596, 128
      %3629 = vxpose.xlu0.b32.cont [6/16] %v3597, 128
      %3630 = vxpose.xlu0.b32.cont [7/16] %v3598, 128
      %3631 = vxpose.xlu0.b32.cont [8/16] %v3599, 128
      %3632 = vxpose.xlu0.b32.cont [9/16] %v3600, 128
      %3633 = vxpose.xlu0.b32.cont [10/16] %v3601, 128
      %3634 = vxpose.xlu0.b32.cont [11/16] %v3602, 128
      %3635 = vxpose.xlu0.b32.cont [12/16] %v3603, 128
      %3636 = vxpose.xlu0.b32.cont [13/16] %v3604, 128
      %3637 = vxpose.xlu0.b32.cont [14/16] %v3605, 128
      %3638 = vxpose.xlu0.b32.cont [15/16] %v3606, 128
      %3639 = vxpose.xlu0.b32.end [16/16] %v3607, 128
      %v3640 = vpop.trf.xlu0
      %v3641 = vpop.trf.xlu0
      %v3642 = vpop.trf.xlu0
      %v3643 = vpop.trf.xlu0
      %v3644 = vpop.trf.xlu0
      %v3645 = vpop.trf.xlu0
      %v3646 = vpop.trf.xlu0
      %v3647 = vpop.trf.xlu0
      %v3648 = vpop.trf.xlu0
      %v3649 = vpop.trf.xlu0
      %v3650 = vpop.trf.xlu0
      %v3651 = vpop.trf.xlu0
      %v3652 = vpop.trf.xlu0
      %v3653 = vpop.trf.xlu0
      %v3654 = vpop.trf.xlu0
      %v3655 = vpop.trf.xlu0
      %3656 = vxpose.xlu0.b32.start [1/16] %v3608, 128
      %3657 = vxpose.xlu0.b32.cont [2/16] %v3609, 128
      %3658 = vxpose.xlu0.b32.cont [3/16] %v3610, 128
      %3659 = vxpose.xlu0.b32.cont [4/16] %v3611, 128
      %3660 = vxpose.xlu0.b32.cont [5/16] %v3612, 128
      %3661 = vxpose.xlu0.b32.cont [6/16] %v3613, 128
      %3662 = vxpose.xlu0.b32.cont [7/16] %v3614, 128
      %3663 = vxpose.xlu0.b32.cont [8/16] %v3615, 128
      %3664 = vxpose.xlu0.b32.cont [9/16] %v3616, 128
      %3665 = vxpose.xlu0.b32.cont [10/16] %v3617, 128
      %3666 = vxpose.xlu0.b32.cont [11/16] %v3618, 128
      %3667 = vxpose.xlu0.b32.cont [12/16] %v3619, 128
      %3668 = vxpose.xlu0.b32.cont [13/16] %v3620, 128
      %3669 = vxpose.xlu0.b32.cont [14/16] %v3621, 128
      %3670 = vxpose.xlu0.b32.cont [15/16] %v3622, 128
      %3671 = vxpose.xlu0.b32.end [16/16] %v3623, 128
      %v3672 = vpop.trf.xlu0
      %v3673 = vpop.trf.xlu0
      %v3674 = vpop.trf.xlu0
      %v3675 = vpop.trf.xlu0
      %v3676 = vpop.trf.xlu0
      %v3677 = vpop.trf.xlu0
      %v3678 = vpop.trf.xlu0
      %v3679 = vpop.trf.xlu0
      %v3680 = vpop.trf.xlu0
      %v3681 = vpop.trf.xlu0
      %v3682 = vpop.trf.xlu0
      %v3683 = vpop.trf.xlu0
      %v3684 = vpop.trf.xlu0
      %v3685 = vpop.trf.xlu0
      %v3686 = vpop.trf.xlu0
      %v3687 = vpop.trf.xlu0
      %3688 = vst [vmem:[%s359] sm:$0xff] %v3640
      %3689 = vst [vmem:[%s359 + $0x8] sm:$0xff] %v3672
      %3690 = vst [vmem:[%s359 + $0x10] sm:$0xff] %v3641
      %3691 = vst [vmem:[%s359 + $0x18] sm:$0xff] %v3673
      %3692 = vst [vmem:[%s359 + $0x20] sm:$0xff] %v3642
      %3693 = vst [vmem:[%s359 + $0x28] sm:$0xff] %v3674
      %3694 = vst [vmem:[%s359 + $0x30] sm:$0xff] %v3643
      %3695 = vst [vmem:[%s359 + $0x38] sm:$0xff] %v3675
      %3696 = vst [vmem:[%s359 + $0x40] sm:$0xff] %v3644
      %3697 = vst [vmem:[%s359 + $0x48] sm:$0xff] %v3676
      %3698 = vst [vmem:[%s359 + $0x50] sm:$0xff] %v3645
      %3699 = vst [vmem:[%s359 + $0x58] sm:$0xff] %v3677
      %3700 = vst [vmem:[%s359 + $0x60] sm:$0xff] %v3646
      %3701 = vst [vmem:[%s359 + $0x68] sm:$0xff] %v3678
      %3702 = vst [vmem:[%s359 + $0x70] sm:$0xff] %v3647
      %3703 = vst [vmem:[%s359 + $0x78] sm:$0xff] %v3679
      %3704 = vst [vmem:[%s359 + $0x80] sm:$0xff] %v3648
      %3705 = vst [vmem:[%s359 + $0x88] sm:$0xff] %v3680
      %3706 = vst [vmem:[%s359 + $0x90] sm:$0xff] %v3649
      %3707 = vst [vmem:[%s359 + $0x98] sm:$0xff] %v3681
      %3708 = vst [vmem:[%s359 + $0xa0] sm:$0xff] %v3650
      %3709 = vst [vmem:[%s359 + $0xa8] sm:$0xff] %v3682
      %3710 = vst [vmem:[%s359 + $0xb0] sm:$0xff] %v3651
      %3711 = vst [vmem:[%s359 + $0xb8] sm:$0xff] %v3683
      %3712 = vst [vmem:[%s359 + $0xc0] sm:$0xff] %v3652
      %3713 = vst [vmem:[%s359 + $0xc8] sm:$0xff] %v3684
      %3714 = vst [vmem:[%s359 + $0xd0] sm:$0xff] %v3653
      %3715 = vst [vmem:[%s359 + $0xd8] sm:$0xff] %v3685
      %3716 = vst [vmem:[%s359 + $0xe0] sm:$0xff] %v3654
      %3717 = vst [vmem:[%s359 + $0xe8] sm:$0xff] %v3686
      %3718 = vst [vmem:[%s359 + $0xf0] sm:$0xff] %v3655
      %3719 = vst [vmem:[%s359 + $0xf8] sm:$0xff] %v3687
      %p3720 = scmp.lt.s32.totalorder %s21, 1
      %s3721 = scalar_select %p3720, %s21, 1
      %s3722 = smul.addr %s3721, 32
      %s3723 = smul.addr %s3722, 8
      %s3724 = scalar_lea.vmem %s10, %s3723
      // Predicated region
      $region61: #{bottleneck_forward.1} parent=59 // pred_check
        %p3725 = pneg %p254
      $region62: #{bottleneck_forward.1} parent=59 // pred_check_branch
        %3727 = sbr.rel (%p3725) target = $region64
      $region63: #{bottleneck_forward.1} parent=59 // pred_region
        _
      $region64: #{bottleneck_forward.1} parent=59 // pred_fallthru
        _
    $region60: #{bottleneck_forward.1} parent=5 // pred_fallthru
      _
    %p3728 = scmp.le.s32.totalorder 2, %s16
    // Predicated region
    $region65: #{bottleneck_forward.1} parent=5 // pred_check
      %p3729 = pneg %p3728
    $region66: #{bottleneck_forward.1} parent=5 // pred_check_branch
      %3731 = sbr.rel (%p3729) target = $region68
    $region67: #{bottleneck_forward.1} parent=5 // pred_region
      %s3732 = ssub.s32 %s16, 2
      // Predicated region
      $region69: #{bottleneck_forward.1} parent=67 // pred_check
        %p3733 = pneg %p260
      $region70: #{bottleneck_forward.1} parent=67 // pred_check_branch
        %3735 = sbr.rel (%p3733) target = $region72
      $region71: #{bottleneck_forward.1} parent=67 // pred_region
        %p3736 = scmp.lt.s32.totalorder %s22, 1
        %s3737 = scalar_select %p3736, %s22, 1
        %s3738 = smul.addr %s3737, 32
        %s3739 = smul.addr %s3738, 8
        %s3740 = scalar_lea.vmem %s10, %s3739
      $region72: #{bottleneck_forward.1} parent=67 // pred_fallthru
        _
    $region68: #{bottleneck_forward.1} parent=5 // pred_fallthru
      _
  $region6: #{bottleneck_forward.1} parent=0 // loop_footer
    %s20 = sadd.s32 1, %s16
  $region7: #{bottleneck_forward.1} parent=0 // loop_footer_branch
    %15 = sbr.rel target = $region3
  $region8: #{bottleneck_forward.1} parent=0 // loop_exit
    _

</llo_original>
